<compile_context>
chip_gen: v6e
topology: v6e:2x2x1
jax: 0.10.0
libtpu: 0.0.40
codegen_flags: <defaults>
</compile_context>

<pallas_src>
import jax
import jax.numpy as jnp
from jax import lax
from jax.experimental import pallas as pl
from jax.experimental.pallas import tpu as pltpu


# ----------------------------- Pallas kernels ------------------------------

def _deconv_lrelu_kernel(x_ref, w_ref, b_ref, o_ref):
    # x_ref: (TM, G*Cin), w_ref: (G*Cin, G*8*Cout) block-diagonal, b_ref: (1, G*8*Cout)
    y = jnp.dot(x_ref[...], w_ref[...], preferred_element_type=jnp.float32) + b_ref[...]
    o_ref[...] = jnp.maximum(y, 0.2 * y)            # LeakyReLU(0.2) fused


def _conv3x3_relu_kernel(x_ref, w_ref, b_ref, o_ref):
    # x_ref: (D+2, H+2, (W+2)*Cin) padded sample slab (VMEM resident)
    # w_ref: (9, (W+2)*Cin, W*Cout) banded tap weights; b_ref: (1, W*Cout)
    # o_ref: (D, H, W*Cout)
    dz, hz = o_ref.shape[0], o_ref.shape[1]
    b = b_ref[...]

    def body(d, carry):
        acc = jnp.zeros(o_ref.shape[1:], jnp.float32)
        for kd in range(3):
            slab = x_ref[d + kd]                    # (H+2, (W+2)*Cin)
            for kh in range(3):
                acc = acc + jnp.dot(slab[kh:kh + hz, :], w_ref[kd * 3 + kh],
                                    preferred_element_type=jnp.float32)
        o_ref[d] = jnp.maximum(acc + b, 0.0)        # bias + ReLU fused
        return carry

    lax.fori_loop(0, dz, body, 0)


def _conv3x3_relu_add_kernel(x_ref, res_ref, w_ref, b_ref, o_ref):
    # Same as above, plus fused residual add (res_ref: (D, H, W*Cout)).
    dz, hz = o_ref.shape[0], o_ref.shape[1]
    b = b_ref[...]

    def body(d, carry):
        acc = jnp.zeros(o_ref.shape[1:], jnp.float32)
        for kd in range(3):
            slab = x_ref[d + kd]
            for kh in range(3):
                acc = acc + jnp.dot(slab[kh:kh + hz, :], w_ref[kd * 3 + kh],
                                    preferred_element_type=jnp.float32)
        o_ref[d] = jnp.maximum(acc + b, 0.0) + res_ref[d]
        return carry

    lax.fori_loop(0, dz, body, 0)


# ------------------------------ helpers (glue) ------------------------------

def _pick_row_tile(rows, cap=512):
    """Largest divisor of `rows` <= cap that keeps sublane alignment."""
    for cand in range(min(cap, rows), 0, -1):
        if rows % cand == 0 and (cand % 8 == 0 or cand == rows):
            return cand
    return rows


def _banded_conv_weights(wgt, wy):
    """(Cout, Cin, 3,3,3) -> (9, (Wy+2)*Cin, Wy*Cout) banded matmul weights.

    band[kd*3+kh, w_in*Cin + ci, w*Cout + co] = wgt[co, ci, kd, kh, w_in - w]
    for w_in - w in {0,1,2}, else 0.  Built once at trace time (tiny).
    """
    cout, cin = wgt.shape[0], wgt.shape[1]
    w_t = jnp.transpose(wgt, (2, 3, 4, 1, 0))        # (kd, kh, kw, Cin, Cout)
    bands = []
    for kd in range(3):
        for kh in range(3):
            z = jnp.zeros((wy + 2, cin, wy, cout), wgt.dtype)
            for kw in range(3):
                eye = jnp.eye(wy + 2, wy, k=-kw, dtype=wgt.dtype)   # w_in == w + kw
                z = z + eye[:, None, :, None] * w_t[kd, kh, kw][None, :, None, :]
            bands.append(z.reshape((wy + 2) * cin, wy * cout))
    return jnp.stack(bands, axis=0)


def _conv3x3_pallas(x_pad_flat, w_band, b_row, residual_flat=None):
    """3x3x3 conv (stride 1, pad 1) + bias + ReLU [+ residual], per-sample grid.

    x_pad_flat: (N, D+2, H+2, (W+2)*Cin)  ->  (N, D, H, W*Cout)
    """
    n, dp, hp, wcp = x_pad_flat.shape
    dz, hz = dp - 2, hp - 2
    wcout = b_row.shape[1]

    if residual_flat is None:
        kernel = _conv3x3_relu_kernel
        arrays = (x_pad_flat, w_band, b_row)
        in_specs = [
            pl.BlockSpec((None, dp, hp, wcp), lambda i: (i, 0, 0, 0)),
            pl.BlockSpec(w_band.shape, lambda i: (0, 0, 0)),
            pl.BlockSpec(b_row.shape, lambda i: (0, 0)),
        ]
    else:
        kernel = _conv3x3_relu_add_kernel
        arrays = (x_pad_flat, residual_flat, w_band, b_row)
        in_specs = [
            pl.BlockSpec((None, dp, hp, wcp), lambda i: (i, 0, 0, 0)),
            pl.BlockSpec((None, dz, hz, wcout), lambda i: (i, 0, 0, 0)),
            pl.BlockSpec(w_band.shape, lambda i: (0, 0, 0)),
            pl.BlockSpec(b_row.shape, lambda i: (0, 0)),
        ]

    # TODO(synk): for volumes whose padded per-sample slab exceeds VMEM, tile
    # the depth axis with a haloed manual DMA (pl.ANY + make_async_copy).
    return pl.pallas_call(
        kernel,
        out_shape=jax.ShapeDtypeStruct((n, dz, hz, wcout), jnp.float32),
        grid_spec=pltpu.PrefetchScalarGridSpec(
            num_scalar_prefetch=0,
            grid=(n,),
            in_specs=in_specs,
            out_specs=pl.BlockSpec((None, dz, hz, wcout), lambda i: (i, 0, 0, 0)),
        ),
        compiler_params=pltpu.CompilerParams(dimension_semantics=("parallel",)),
    )(*arrays)


# ------------------------------ module wrapper ------------------------------

@jax.jit
def dh_up_res_forward(x, w_up, b_up, w_c1, b_c1, w_c2, b_c2):
    """DHUpRes forward.  x: (N, Cin, D, H, W) NCDHW; returns NCDHW."""
    n, cin, d, h, w = x.shape
    cout = w_up.shape[1]
    dy, hy, wy = 2 * d, 2 * h, 2 * w

    # ---- Stage 1: ConvTranspose3d(k=2, s=2) + bias + LeakyReLU(0.2) --------
    # Each input voxel maps to an 8*Cout block; fold G voxels per row so the
    # output row is (up to) 128 lanes wide -> unmasked, lane-dense stores.
    x_ndhwc = jnp.transpose(x, (0, 2, 3, 4, 1))          # (N, D, H, W, Cin)
    m1 = n * d * h * w
    kt = 8 * cout
    g = max(1, 128 // kt)
    while g > 1 and m1 % g != 0:
        g -= 1
    rows = m1 // g
    lhs = x_ndhwc.reshape(rows, g * cin)                 # contiguous reinterpret
    w_mat = jnp.transpose(w_up, (0, 2, 3, 4, 1)).reshape(cin, kt)   # (Cin, 8*Cout)
    w_blk = jnp.kron(jnp.eye(g, dtype=w_mat.dtype), w_mat)          # block-diag
    b_blk = jnp.tile(b_up, 8 * g).reshape(1, g * kt)
    tm = _pick_row_tile(rows, 512)

    up2d = pl.pallas_call(
        _deconv_lrelu_kernel,
        out_shape=jax.ShapeDtypeStruct((rows, g * kt), jnp.float32),
        grid_spec=pltpu.PrefetchScalarGridSpec(
            num_scalar_prefetch=0,
            grid=(rows // tm,),
            in_specs=[
                pl.BlockSpec((tm, g * cin), lambda i: (i, 0)),
                pl.BlockSpec((g * cin, g * kt), lambda i: (0, 0)),
                pl.BlockSpec((1, g * kt), lambda i: (0, 0)),
            ],
            out_specs=pl.BlockSpec((tm, g * kt), lambda i: (i, 0)),
        ),
        compiler_params=pltpu.CompilerParams(dimension_semantics=("parallel",)),
    )(lhs, w_blk, b_blk)

    # scatter the 2x2x2 blocks into the upsampled NDHWC volume (single XLA pass)
    x_up = up2d.reshape(n, d, h, w, 2, 2, 2, cout)
    x_up = jnp.transpose(x_up, (0, 1, 4, 2, 5, 3, 6, 7)).reshape(n, dy, hy, wy, cout)

    # ---- Stage 2: y1 = ReLU(Conv3d 3x3x3, s=1, p=1) ------------------------
    xp1 = jnp.pad(x_up, ((0, 0), (1, 1), (1, 1), (1, 1), (0, 0)))
    xp1f = xp1.reshape(n, dy + 2, hy + 2, (wy + 2) * cout)
    wb1 = _banded_conv_weights(w_c1, wy)
    br1 = jnp.tile(b_c1, wy).reshape(1, wy * cout)
    y1f = _conv3x3_pallas(xp1f, wb1, br1)                # (N, Dy, Hy, Wy*Cout)

    # ---- Stage 3: out = ReLU(Conv3d 3x3x3(y1)) + x_up (fused residual) -----
    y1 = y1f.reshape(n, dy, hy, wy, cout)
    yp2 = jnp.pad(y1, ((0, 0), (1, 1), (1, 1), (1, 1), (0, 0)))
    yp2f = yp2.reshape(n, dy + 2, hy + 2, (wy + 2) * cout)
    wb2 = _banded_conv_weights(w_c2, wy)
    br2 = jnp.tile(b_c2, wy).reshape(1, wy * cout)
    res_f = x_up.reshape(n, dy, hy, wy * cout)
    outf = _conv3x3_pallas(yp2f, wb2, br2, residual_flat=res_f)

    out = outf.reshape(n, dy, hy, wy, cout)
    return jnp.transpose(out, (0, 4, 1, 2, 3))           # back to NCDHW


# ------------------------------- reference ----------------------------------

def _reference(x, w_up, b_up, w_c1, b_c1, w_c2, b_c2):
    cout = w_up.shape[1]
    # ConvTranspose3d(k=2, s=2, p=0) == dilated conv with flipped/swapped kernel
    w_fwd = jnp.transpose(w_up[:, :, ::-1, ::-1, ::-1], (1, 0, 2, 3, 4))
    up = lax.conv_general_dilated(
        x, w_fwd, window_strides=(1, 1, 1), padding=((1, 1), (1, 1), (1, 1)),
        lhs_dilation=(2, 2, 2), dimension_numbers=("NCDHW", "OIDHW", "NCDHW"),
        precision=lax.Precision.HIGHEST,
    ) + b_up.reshape(1, cout, 1, 1, 1)
    up = jnp.where(up > 0, up, 0.2 * up)                 # LeakyReLU(0.2)

    def conv3(z, wgt, b):
        return lax.conv_general_dilated(
            z, wgt, window_strides=(1, 1, 1), padding=((1, 1), (1, 1), (1, 1)),
            dimension_numbers=("NCDHW", "OIDHW", "NCDHW"),
            precision=lax.Precision.HIGHEST,
        ) + b.reshape(1, -1, 1, 1, 1)

    y1 = jnp.maximum(conv3(up, w_c1, b_c1), 0.0)
    y2 = jnp.maximum(conv3(y1, w_c2, b_c2), 0.0)
    return y2 + up


# ----------------------------------- main ------------------------------------

if __name__ == "__main__":
    key = jax.random.PRNGKey(0)
    ks = jax.random.split(key, 7)

    # DHUpRes defaults: conv_in_channels=4, conv_out_channels=4.
    N, CIN, COUT, D, H, W = 2, 4, 4, 16, 16, 16

    def uni(k, shape, fan):
        lim = float(fan) ** -0.5
        return jax.random.uniform(k, shape, jnp.float32, -lim, lim)

    x = jax.random.normal(ks[0], (N, CIN, D, H, W), dtype=jnp.float32)
    w_up = uni(ks[1], (CIN, COUT, 2, 2, 2), CIN * 8)     # ConvTranspose3d weight
    b_up = uni(ks[2], (COUT,), CIN * 8)
    w_c1 = uni(ks[3], (COUT, COUT, 3, 3, 3), COUT * 27)  # Conv3d weights
    b_c1 = uni(ks[4], (COUT,), COUT * 27)
    w_c2 = uni(ks[5], (COUT, COUT, 3, 3, 3), COUT * 27)
    b_c2 = uni(ks[6], (COUT,), COUT * 27)

    out = dh_up_res_forward(x, w_up, b_up, w_c1, b_c1, w_c2, b_c2)
    out = jax.block_until_ready(out)

    ref = _reference(x, w_up, b_up, w_c1, b_c1, w_c2, b_c2)
    assert out.shape == (N, COUT, 2 * D, 2 * H, 2 * W)
    assert jnp.allclose(out, ref, atol=2e-4, rtol=2e-4), float(
        jnp.max(jnp.abs(out - ref)))

    print("KERNEL_OK")
</pallas_src>

<mosaic_0001>
module attributes {stable_mosaic.version = 11 : i64} {
  func.func @_deconv_lrelu_kernel(%arg0: i32, %arg1: memref<512x16xf32, #tpu.memory_space<vmem>>, %arg2: memref<16x128xf32, #tpu.memory_space<vmem>>, %arg3: memref<1x128xf32, #tpu.memory_space<vmem>>, %arg4: memref<512x128xf32, #tpu.memory_space<vmem>>) attributes {dimension_semantics = [#tpu.dimension_semantics<parallel>], iteration_bounds = array<i64: 4>, scalar_prefetch = 0 : i64, scratch_operands = 0 : i64, tpu.core_type = #tpu.core_type<tc>, window_params = [{transform_indices = @transform_0, window_bounds = array<i64: 512, 16>}, {pipeline_mode = #tpu.pipeline_mode<synchronous>, transform_indices = @transform_1, window_bounds = array<i64: 16, 128>}, {pipeline_mode = #tpu.pipeline_mode<synchronous>, transform_indices = @transform_2, window_bounds = array<i64: 1, 128>}, {transform_indices = @transform_3, window_bounds = array<i64: 512, 128>}]} {
    %c0 = arith.constant 0 : index
    %c0_0 = arith.constant 0 : index
    %0 = vector.load %arg1[%c0, %c0_0] : memref<512x16xf32, #tpu.memory_space<vmem>>, vector<512x16xf32>
    %c0_1 = arith.constant 0 : index
    %c0_2 = arith.constant 0 : index
    %1 = vector.load %arg2[%c0_1, %c0_2] : memref<16x128xf32, #tpu.memory_space<vmem>>, vector<16x128xf32>
    %cst = arith.constant dense<0.000000e+00> : vector<512x128xf32>
    %2 = tpu.matmul %0, %1, %cst {dimension_numbers = #tpu.dot_dimension_numbers<[1], [0], [0], [1], [0, 0, 1, 1], [], []>} : vector<512x16xf32>, vector<16x128xf32>, vector<512x128xf32> -> vector<512x128xf32>
    %c0_3 = arith.constant 0 : index
    %c0_4 = arith.constant 0 : index
    %3 = vector.load %arg3[%c0_3, %c0_4] : memref<1x128xf32, #tpu.memory_space<vmem>>, vector<1x128xf32>
    %4 = vector.broadcast %3 : vector<1x128xf32> to vector<512x128xf32>
    %5 = arith.addf %2, %4 : vector<512x128xf32>
    %cst_5 = arith.constant 2.000000e-01 : f32
    %6 = vector.broadcast %cst_5 : f32 to vector<512x128xf32>
    %7 = arith.mulf %6, %5 : vector<512x128xf32>
    %8 = arith.maximumf %5, %7 : vector<512x128xf32>
    %c0_6 = arith.constant 0 : index
    %c0_7 = arith.constant 0 : index
    %9 = vector.load %arg4[%c0_6, %c0_7] : memref<512x128xf32, #tpu.memory_space<vmem>>, vector<512x128xf32>
    tpu.vector_store %arg4[%c0_6, %c0_7], %8 {strides = array<i32>} : memref<512x128xf32, #tpu.memory_space<vmem>>, vector<512x128xf32>,
    return
  }
  func.func @transform_0(%arg0: i32) -> (i32, i32) {
    %c0_i32 = arith.constant 0 : i32
    %c0_i32_0 = arith.constant 0 : i32
    return %arg0, %c0_i32 : i32, i32
  }
  func.func @transform_1(%arg0: i32) -> (i32, i32) {
    %c0_i32 = arith.constant 0 : i32
    %c0_i32_0 = arith.constant 0 : i32
    %c0_i32_1 = arith.constant 0 : i32
    return %c0_i32, %c0_i32_0 : i32, i32
  }
  func.func @transform_2(%arg0: i32) -> (i32, i32) {
    %c0_i32 = arith.constant 0 : i32
    %c0_i32_0 = arith.constant 0 : i32
    %c0_i32_1 = arith.constant 0 : i32
    return %c0_i32, %c0_i32_0 : i32, i32
  }
  func.func @transform_3(%arg0: i32) -> (i32, i32) {
    %c0_i32 = arith.constant 0 : i32
    %c0_i32_0 = arith.constant 0 : i32
    return %arg0, %c0_i32 : i32, i32
  }
}

module attributes {stable_mosaic.version = 11 : i64} {
  func.func @_conv3x3_relu_kernel(%arg0: i32, %arg1: memref<1x34x34x136xf32, #tpu.memory_space<vmem>>, %arg2: memref<9x136x128xf32, #tpu.memory_space<vmem>>, %arg3: memref<1x128xf32, #tpu.memory_space<vmem>>, %arg4: memref<1x32x32x128xf32, #tpu.memory_space<vmem>>) attributes {dimension_semantics = [#tpu.dimension_semantics<parallel>], iteration_bounds = array<i64: 2>, scalar_prefetch = 0 : i64, scratch_operands = 0 : i64, tpu.core_type = #tpu.core_type<tc>, window_params = [{transform_indices = @transform_0, window_bounds = array<i64: 1, 34, 34, 136>}, {pipeline_mode = #tpu.pipeline_mode<synchronous>, transform_indices = @transform_1, window_bounds = array<i64: 9, 136, 128>}, {pipeline_mode = #tpu.pipeline_mode<synchronous>, transform_indices = @transform_2, window_bounds = array<i64: 1, 128>}, {transform_indices = @transform_3, window_bounds = array<i64: 1, 32, 32, 128>}]} {
    %c0 = arith.constant 0 : index
    %c0_0 = arith.constant 0 : index
    %0 = vector.load %arg3[%c0, %c0_0] : memref<1x128xf32, #tpu.memory_space<vmem>>, vector<1x128xf32>
    %c0_i32 = arith.constant 0 : i32
    %c32_i32 = arith.constant 32 : i32
    %1 = arith.addi %c0_i32, %c32_i32 : i32
    %c1_i32 = arith.constant 1 : i32
    scf.for %arg5 = %c0_i32 to %1 step %c1_i32  : i32 {
      %cst = arith.constant 0.000000e+00 : f32
      %2 = vector.broadcast %cst : f32 to vector<32x128xf32>
      %c0_i32_2 = arith.constant 0 : i32
      %3 = arith.addi %arg5, %c0_i32_2 : i32
      %c0_3 = arith.constant 0 : index
      %4 = arith.index_cast %3 : i32 to index
      %c0_4 = arith.constant 0 : index
      %c0_5 = arith.constant 0 : index
      %5 = vector.load %arg1[%c0_3, %4, %c0_4, %c0_5] : memref<1x34x34x136xf32, #tpu.memory_space<vmem>>, vector<1x1x34x136xf32>
      %6 = vector.shape_cast %5 : vector<1x1x34x136xf32> to vector<34x136xf32>
      %7 = vector.extract_strided_slice %6 {offsets = [0, 0], sizes = [32, 136], strides = [1, 1]} : vector<34x136xf32> to vector<32x136xf32>
      %c0_6 = arith.constant 0 : index
      %c0_7 = arith.constant 0 : index
      %c0_8 = arith.constant 0 : index
      %8 = vector.load %arg2[%c0_6, %c0_7, %c0_8] : memref<9x136x128xf32, #tpu.memory_space<vmem>>, vector<1x136x128xf32>
      %9 = vector.shape_cast %8 : vector<1x136x128xf32> to vector<136x128xf32>
      %cst_9 = arith.constant dense<0.000000e+00> : vector<32x128xf32>
      %10 = tpu.matmul %7, %9, %cst_9 {dimension_numbers = #tpu.dot_dimension_numbers<[1], [0], [0], [1], [0, 0, 1, 1], [], []>} : vector<32x136xf32>, vector<136x128xf32>, vector<32x128xf32> -> vector<32x128xf32>
      %11 = arith.addf %2, %10 : vector<32x128xf32>
      %12 = vector.extract_strided_slice %6 {offsets = [1, 0], sizes = [32, 136], strides = [1, 1]} : vector<34x136xf32> to vector<32x136xf32>
      %c1 = arith.constant 1 : index
      %c0_10 = arith.constant 0 : index
      %c0_11 = arith.constant 0 : index
      %13 = vector.load %arg2[%c1, %c0_10, %c0_11] : memref<9x136x128xf32, #tpu.memory_space<vmem>>, vector<1x136x128xf32>
      %14 = vector.shape_cast %13 : vector<1x136x128xf32> to vector<136x128xf32>
      %cst_12 = arith.constant dense<0.000000e+00> : vector<32x128xf32>
      %15 = tpu.matmul %12, %14, %cst_12 {dimension_numbers = #tpu.dot_dimension_numbers<[1], [0], [0], [1], [0, 0, 1, 1], [], []>} : vector<32x136xf32>, vector<136x128xf32>, vector<32x128xf32> -> vector<32x128xf32>
      %16 = arith.addf %11, %15 : vector<32x128xf32>
      %17 = vector.extract_strided_slice %6 {offsets = [2, 0], sizes = [32, 136], strides = [1, 1]} : vector<34x136xf32> to vector<32x136xf32>
      %c2 = arith.constant 2 : index
      %c0_13 = arith.constant 0 : index
      %c0_14 = arith.constant 0 : index
      %18 = vector.load %arg2[%c2, %c0_13, %c0_14] : memref<9x136x128xf32, #tpu.memory_space<vmem>>, vector<1x136x128xf32>
      %19 = vector.shape_cast %18 : vector<1x136x128xf32> to vector<136x128xf32>
      %cst_15 = arith.constant dense<0.000000e+00> : vector<32x128xf32>
      %20 = tpu.matmul %17, %19, %cst_15 {dimension_numbers = #tpu.dot_dimension_numbers<[1], [0], [0], [1], [0, 0, 1, 1], [], []>} : vector<32x136xf32>, vector<136x128xf32>, vector<32x128xf32> -> vector<32x128xf32>
      %21 = arith.addf %16, %20 : vector<32x128xf32>
      %c1_i32_16 = arith.constant 1 : i32
      %22 = arith.addi %arg5, %c1_i32_16 : i32
      %c0_17 = arith.constant 0 : index
      %23 = arith.index_cast %22 : i32 to index
      %c0_18 = arith.constant 0 : index
      %c0_19 = arith.constant 0 : index
      %24 = vector.load %arg1[%c0_17, %23, %c0_18, %c0_19] : memref<1x34x34x136xf32, #tpu.memory_space<vmem>>, vector<1x1x34x136xf32>
      %25 = vector.shape_cast %24 : vector<1x1x34x136xf32> to vector<34x136xf32>
      %26 = vector.extract_strided_slice %25 {offsets = [0, 0], sizes = [32, 136], strides = [1, 1]} : vector<34x136xf32> to vector<32x136xf32>
      %c3 = arith.constant 3 : index
      %c0_20 = arith.constant 0 : index
      %c0_21 = arith.constant 0 : index
      %27 = vector.load %arg2[%c3, %c0_20, %c0_21] : memref<9x136x128xf32, #tpu.memory_space<vmem>>, vector<1x136x128xf32>
      %28 = vector.shape_cast %27 : vector<1x136x128xf32> to vector<136x128xf32>
      %cst_22 = arith.constant dense<0.000000e+00> : vector<32x128xf32>
      %29 = tpu.matmul %26, %28, %cst_22 {dimension_numbers = #tpu.dot_dimension_numbers<[1], [0], [0], [1], [0, 0, 1, 1], [], []>} : vector<32x136xf32>, vector<136x128xf32>, vector<32x128xf32> -> vector<32x128xf32>
      %30 = arith.addf %21, %29 : vector<32x128xf32>
      %31 = vector.extract_strided_slice %25 {offsets = [1, 0], sizes = [32, 136], strides = [1, 1]} : vector<34x136xf32> to vector<32x136xf32>
      %c4 = arith.constant 4 : index
      %c0_23 = arith.constant 0 : index
      %c0_24 = arith.constant 0 : index
      %32 = vector.load %arg2[%c4, %c0_23, %c0_24] : memref<9x136x128xf32, #tpu.memory_space<vmem>>, vector<1x136x128xf32>
      %33 = vector.shape_cast %32 : vector<1x136x128xf32> to vector<136x128xf32>
      %cst_25 = arith.constant dense<0.000000e+00> : vector<32x128xf32>
      %34 = tpu.matmul %31, %33, %cst_25 {dimension_numbers = #tpu.dot_dimension_numbers<[1], [0], [0], [1], [0, 0, 1, 1], [], []>} : vector<32x136xf32>, vector<136x128xf32>, vector<32x128xf32> -> vector<32x128xf32>
      %35 = arith.addf %30, %34 : vector<32x128xf32>
      %36 = vector.extract_strided_slice %25 {offsets = [2, 0], sizes = [32, 136], strides = [1, 1]} : vector<34x136xf32> to vector<32x136xf32>
      %c5 = arith.constant 5 : index
      %c0_26 = arith.constant 0 : index
      %c0_27 = arith.constant 0 : index
      %37 = vector.load %arg2[%c5, %c0_26, %c0_27] : memref<9x136x128xf32, #tpu.memory_space<vmem>>, vector<1x136x128xf32>
      %38 = vector.shape_cast %37 : vector<1x136x128xf32> to vector<136x128xf32>
      %cst_28 = arith.constant dense<0.000000e+00> : vector<32x128xf32>
      %39 = tpu.matmul %36, %38, %cst_28 {dimension_numbers = #tpu.dot_dimension_numbers<[1], [0], [0], [1], [0, 0, 1, 1], [], []>} : vector<32x136xf32>, vector<136x128xf32>, vector<32x128xf32> -> vector<32x128xf32>
      %40 = arith.addf %35, %39 : vector<32x128xf32>
      %c2_i32 = arith.constant 2 : i32
      %41 = arith.addi %arg5, %c2_i32 : i32
      %c0_29 = arith.constant 0 : index
      %42 = arith.index_cast %41 : i32 to index
      %c0_30 = arith.constant 0 : index
      %c0_31 = arith.constant 0 : index
      %43 = vector.load %arg1[%c0_29, %42, %c0_30, %c0_31] : memref<1x34x34x136xf32, #tpu.memory_space<vmem>>, vector<1x1x34x136xf32>
      %44 = vector.shape_cast %43 : vector<1x1x34x136xf32> to vector<34x136xf32>
      %45 = vector.extract_strided_slice %44 {offsets = [0, 0], sizes = [32, 136], strides = [1, 1]} : vector<34x136xf32> to vector<32x136xf32>
      %c6 = arith.constant 6 : index
      %c0_32 = arith.constant 0 : index
      %c0_33 = arith.constant 0 : index
      %46 = vector.load %arg2[%c6, %c0_32, %c0_33] : memref<9x136x128xf32, #tpu.memory_space<vmem>>, vector<1x136x128xf32>
      %47 = vector.shape_cast %46 : vector<1x136x128xf32> to vector<136x128xf32>
      %cst_34 = arith.constant dense<0.000000e+00> : vector<32x128xf32>
      %48 = tpu.matmul %45, %47, %cst_34 {dimension_numbers = #tpu.dot_dimension_numbers<[1], [0], [0], [1], [0, 0, 1, 1], [], []>} : vector<32x136xf32>, vector<136x128xf32>, vector<32x128xf32> -> vector<32x128xf32>
      %49 = arith.addf %40, %48 : vector<32x128xf32>
      %50 = vector.extract_strided_slice %44 {offsets = [1, 0], sizes = [32, 136], strides = [1, 1]} : vector<34x136xf32> to vector<32x136xf32>
      %c7 = arith.constant 7 : index
      %c0_35 = arith.constant 0 : index
      %c0_36 = arith.constant 0 : index
      %51 = vector.load %arg2[%c7, %c0_35, %c0_36] : memref<9x136x128xf32, #tpu.memory_space<vmem>>, vector<1x136x128xf32>
      %52 = vector.shape_cast %51 : vector<1x136x128xf32> to vector<136x128xf32>
      %cst_37 = arith.constant dense<0.000000e+00> : vector<32x128xf32>
      %53 = tpu.matmul %50, %52, %cst_37 {dimension_numbers = #tpu.dot_dimension_numbers<[1], [0], [0], [1], [0, 0, 1, 1], [], []>} : vector<32x136xf32>, vector<136x128xf32>, vector<32x128xf32> -> vector<32x128xf32>
      %54 = arith.addf %49, %53 : vector<32x128xf32>
      %55 = vector.extract_strided_slice %44 {offsets = [2, 0], sizes = [32, 136], strides = [1, 1]} : vector<34x136xf32> to vector<32x136xf32>
      %c8 = arith.constant 8 : index
      %c0_38 = arith.constant 0 : index
      %c0_39 = arith.constant 0 : index
      %56 = vector.load %arg2[%c8, %c0_38, %c0_39] : memref<9x136x128xf32, #tpu.memory_space<vmem>>, vector<1x136x128xf32>
      %57 = vector.shape_cast %56 : vector<1x136x128xf32> to vector<136x128xf32>
      %cst_40 = arith.constant dense<0.000000e+00> : vector<32x128xf32>
      %58 = tpu.matmul %55, %57, %cst_40 {dimension_numbers = #tpu.dot_dimension_numbers<[1], [0], [0], [1], [0, 0, 1, 1], [], []>} : vector<32x136xf32>, vector<136x128xf32>, vector<32x128xf32> -> vector<32x128xf32>
      %59 = arith.addf %54, %58 : vector<32x128xf32>
      %60 = vector.broadcast %0 : vector<1x128xf32> to vector<32x128xf32>
      %61 = arith.addf %59, %60 : vector<32x128xf32>
      %cst_41 = arith.constant 0.000000e+00 : f32
      %62 = vector.broadcast %cst_41 : f32 to vector<32x128xf32>
      %63 = arith.maximumf %61, %62 : vector<32x128xf32>
      %c0_42 = arith.constant 0 : index
      %64 = arith.index_cast %arg5 : i32 to index
      %c0_43 = arith.constant 0 : index
      %c0_44 = arith.constant 0 : index
      %65 = vector.load %arg4[%c0_42, %64, %c0_43, %c0_44] : memref<1x32x32x128xf32, #tpu.memory_space<vmem>>, vector<1x1x32x128xf32>
      %66 = vector.shape_cast %65 : vector<1x1x32x128xf32> to vector<32x128xf32>
      %67 = vector.shape_cast %63 : vector<32x128xf32> to vector<1x1x32x128xf32>
      tpu.vector_store %arg4[%c0_42, %64, %c0_43, %c0_44], %67 {strides = array<i32>} : memref<1x32x32x128xf32, #tpu.memory_space<vmem>>, vector<1x1x32x128xf32>,
    }
    %c32_i32_1 = arith.constant 32 : i32
    return
  }
  func.func @transform_0(%arg0: i32) -> (i32, i32, i32, i32) {
    %c0_i32 = arith.constant 0 : i32
    %c0_i32_0 = arith.constant 0 : i32
    %c0_i32_1 = arith.constant 0 : i32
    %c0_i32_2 = arith.constant 0 : i32
    return %arg0, %c0_i32, %c0_i32_0, %c0_i32_1 : i32, i32, i32, i32
  }
  func.func @transform_1(%arg0: i32) -> (i32, i32, i32) {
    %c0_i32 = arith.constant 0 : i32
    %c0_i32_0 = arith.constant 0 : i32
    %c0_i32_1 = arith.constant 0 : i32
    %c0_i32_2 = arith.constant 0 : i32
    return %c0_i32, %c0_i32_0, %c0_i32_1 : i32, i32, i32
  }
  func.func @transform_2(%arg0: i32) -> (i32, i32) {
    %c0_i32 = arith.constant 0 : i32
    %c0_i32_0 = arith.constant 0 : i32
    %c0_i32_1 = arith.constant 0 : i32
    return %c0_i32, %c0_i32_0 : i32, i32
  }
  func.func @transform_3(%arg0: i32) -> (i32, i32, i32, i32) {
    %c0_i32 = arith.constant 0 : i32
    %c0_i32_0 = arith.constant 0 : i32
    %c0_i32_1 = arith.constant 0 : i32
    %c0_i32_2 = arith.constant 0 : i32
    return %arg0, %c0_i32, %c0_i32_0, %c0_i32_1 : i32, i32, i32, i32
  }
}

module attributes {stable_mosaic.version = 11 : i64} {
  func.func @_conv3x3_relu_add_kernel(%arg0: i32, %arg1: memref<1x34x34x136xf32, #tpu.memory_space<vmem>>, %arg2: memref<1x32x32x128xf32, #tpu.memory_space<vmem>>, %arg3: memref<9x136x128xf32, #tpu.memory_space<vmem>>, %arg4: memref<1x128xf32, #tpu.memory_space<vmem>>, %arg5: memref<1x32x32x128xf32, #tpu.memory_space<vmem>>) attributes {dimension_semantics = [#tpu.dimension_semantics<parallel>], iteration_bounds = array<i64: 2>, scalar_prefetch = 0 : i64, scratch_operands = 0 : i64, tpu.core_type = #tpu.core_type<tc>, window_params = [{transform_indices = @transform_0, window_bounds = array<i64: 1, 34, 34, 136>}, {transform_indices = @transform_1, window_bounds = array<i64: 1, 32, 32, 128>}, {pipeline_mode = #tpu.pipeline_mode<synchronous>, transform_indices = @transform_2, window_bounds = array<i64: 9, 136, 128>}, {pipeline_mode = #tpu.pipeline_mode<synchronous>, transform_indices = @transform_3, window_bounds = array<i64: 1, 128>}, {transform_indices = @transform_4, window_bounds = array<i64: 1, 32, 32, 128>}]} {
    %c0 = arith.constant 0 : index
    %c0_0 = arith.constant 0 : index
    %0 = vector.load %arg4[%c0, %c0_0] : memref<1x128xf32, #tpu.memory_space<vmem>>, vector<1x128xf32>
    %c0_i32 = arith.constant 0 : i32
    %c32_i32 = arith.constant 32 : i32
    %1 = arith.addi %c0_i32, %c32_i32 : i32
    %c1_i32 = arith.constant 1 : i32
    scf.for %arg6 = %c0_i32 to %1 step %c1_i32  : i32 {
      %cst = arith.constant 0.000000e+00 : f32
      %2 = vector.broadcast %cst : f32 to vector<32x128xf32>
      %c0_i32_2 = arith.constant 0 : i32
      %3 = arith.addi %arg6, %c0_i32_2 : i32
      %c0_3 = arith.constant 0 : index
      %4 = arith.index_cast %3 : i32 to index
      %c0_4 = arith.constant 0 : index
      %c0_5 = arith.constant 0 : index
      %5 = vector.load %arg1[%c0_3, %4, %c0_4, %c0_5] : memref<1x34x34x136xf32, #tpu.memory_space<vmem>>, vector<1x1x34x136xf32>
      %6 = vector.shape_cast %5 : vector<1x1x34x136xf32> to vector<34x136xf32>
      %7 = vector.extract_strided_slice %6 {offsets = [0, 0], sizes = [32, 136], strides = [1, 1]} : vector<34x136xf32> to vector<32x136xf32>
      %c0_6 = arith.constant 0 : index
      %c0_7 = arith.constant 0 : index
      %c0_8 = arith.constant 0 : index
      %8 = vector.load %arg3[%c0_6, %c0_7, %c0_8] : memref<9x136x128xf32, #tpu.memory_space<vmem>>, vector<1x136x128xf32>
      %9 = vector.shape_cast %8 : vector<1x136x128xf32> to vector<136x128xf32>
      %cst_9 = arith.constant dense<0.000000e+00> : vector<32x128xf32>
      %10 = tpu.matmul %7, %9, %cst_9 {dimension_numbers = #tpu.dot_dimension_numbers<[1], [0], [0], [1], [0, 0, 1, 1], [], []>} : vector<32x136xf32>, vector<136x128xf32>, vector<32x128xf32> -> vector<32x128xf32>
      %11 = arith.addf %2, %10 : vector<32x128xf32>
      %12 = vector.extract_strided_slice %6 {offsets = [1, 0], sizes = [32, 136], strides = [1, 1]} : vector<34x136xf32> to vector<32x136xf32>
      %c1 = arith.constant 1 : index
      %c0_10 = arith.constant 0 : index
      %c0_11 = arith.constant 0 : index
      %13 = vector.load %arg3[%c1, %c0_10, %c0_11] : memref<9x136x128xf32, #tpu.memory_space<vmem>>, vector<1x136x128xf32>
      %14 = vector.shape_cast %13 : vector<1x136x128xf32> to vector<136x128xf32>
      %cst_12 = arith.constant dense<0.000000e+00> : vector<32x128xf32>
      %15 = tpu.matmul %12, %14, %cst_12 {dimension_numbers = #tpu.dot_dimension_numbers<[1], [0], [0], [1], [0, 0, 1, 1], [], []>} : vector<32x136xf32>, vector<136x128xf32>, vector<32x128xf32> -> vector<32x128xf32>
      %16 = arith.addf %11, %15 : vector<32x128xf32>
      %17 = vector.extract_strided_slice %6 {offsets = [2, 0], sizes = [32, 136], strides = [1, 1]} : vector<34x136xf32> to vector<32x136xf32>
      %c2 = arith.constant 2 : index
      %c0_13 = arith.constant 0 : index
      %c0_14 = arith.constant 0 : index
      %18 = vector.load %arg3[%c2, %c0_13, %c0_14] : memref<9x136x128xf32, #tpu.memory_space<vmem>>, vector<1x136x128xf32>
      %19 = vector.shape_cast %18 : vector<1x136x128xf32> to vector<136x128xf32>
      %cst_15 = arith.constant dense<0.000000e+00> : vector<32x128xf32>
      %20 = tpu.matmul %17, %19, %cst_15 {dimension_numbers = #tpu.dot_dimension_numbers<[1], [0], [0], [1], [0, 0, 1, 1], [], []>} : vector<32x136xf32>, vector<136x128xf32>, vector<32x128xf32> -> vector<32x128xf32>
      %21 = arith.addf %16, %20 : vector<32x128xf32>
      %c1_i32_16 = arith.constant 1 : i32
      %22 = arith.addi %arg6, %c1_i32_16 : i32
      %c0_17 = arith.constant 0 : index
      %23 = arith.index_cast %22 : i32 to index
      %c0_18 = arith.constant 0 : index
      %c0_19 = arith.constant 0 : index
      %24 = vector.load %arg1[%c0_17, %23, %c0_18, %c0_19] : memref<1x34x34x136xf32, #tpu.memory_space<vmem>>, vector<1x1x34x136xf32>
      %25 = vector.shape_cast %24 : vector<1x1x34x136xf32> to vector<34x136xf32>
      %26 = vector.extract_strided_slice %25 {offsets = [0, 0], sizes = [32, 136], strides = [1, 1]} : vector<34x136xf32> to vector<32x136xf32>
      %c3 = arith.constant 3 : index
      %c0_20 = arith.constant 0 : index
      %c0_21 = arith.constant 0 : index
      %27 = vector.load %arg3[%c3, %c0_20, %c0_21] : memref<9x136x128xf32, #tpu.memory_space<vmem>>, vector<1x136x128xf32>
      %28 = vector.shape_cast %27 : vector<1x136x128xf32> to vector<136x128xf32>
      %cst_22 = arith.constant dense<0.000000e+00> : vector<32x128xf32>
      %29 = tpu.matmul %26, %28, %cst_22 {dimension_numbers = #tpu.dot_dimension_numbers<[1], [0], [0], [1], [0, 0, 1, 1], [], []>} : vector<32x136xf32>, vector<136x128xf32>, vector<32x128xf32> -> vector<32x128xf32>
      %30 = arith.addf %21, %29 : vector<32x128xf32>
      %31 = vector.extract_strided_slice %25 {offsets = [1, 0], sizes = [32, 136], strides = [1, 1]} : vector<34x136xf32> to vector<32x136xf32>
      %c4 = arith.constant 4 : index
      %c0_23 = arith.constant 0 : index
      %c0_24 = arith.constant 0 : index
      %32 = vector.load %arg3[%c4, %c0_23, %c0_24] : memref<9x136x128xf32, #tpu.memory_space<vmem>>, vector<1x136x128xf32>
      %33 = vector.shape_cast %32 : vector<1x136x128xf32> to vector<136x128xf32>
      %cst_25 = arith.constant dense<0.000000e+00> : vector<32x128xf32>
      %34 = tpu.matmul %31, %33, %cst_25 {dimension_numbers = #tpu.dot_dimension_numbers<[1], [0], [0], [1], [0, 0, 1, 1], [], []>} : vector<32x136xf32>, vector<136x128xf32>, vector<32x128xf32> -> vector<32x128xf32>
      %35 = arith.addf %30, %34 : vector<32x128xf32>
      %36 = vector.extract_strided_slice %25 {offsets = [2, 0], sizes = [32, 136], strides = [1, 1]} : vector<34x136xf32> to vector<32x136xf32>
      %c5 = arith.constant 5 : index
      %c0_26 = arith.constant 0 : index
      %c0_27 = arith.constant 0 : index
      %37 = vector.load %arg3[%c5, %c0_26, %c0_27] : memref<9x136x128xf32, #tpu.memory_space<vmem>>, vector<1x136x128xf32>
      %38 = vector.shape_cast %37 : vector<1x136x128xf32> to vector<136x128xf32>
      %cst_28 = arith.constant dense<0.000000e+00> : vector<32x128xf32>
      %39 = tpu.matmul %36, %38, %cst_28 {dimension_numbers = #tpu.dot_dimension_numbers<[1], [0], [0], [1], [0, 0, 1, 1], [], []>} : vector<32x136xf32>, vector<136x128xf32>, vector<32x128xf32> -> vector<32x128xf32>
      %40 = arith.addf %35, %39 : vector<32x128xf32>
      %c2_i32 = arith.constant 2 : i32
      %41 = arith.addi %arg6, %c2_i32 : i32
      %c0_29 = arith.constant 0 : index
      %42 = arith.index_cast %41 : i32 to index
      %c0_30 = arith.constant 0 : index
      %c0_31 = arith.constant 0 : index
      %43 = vector.load %arg1[%c0_29, %42, %c0_30, %c0_31] : memref<1x34x34x136xf32, #tpu.memory_space<vmem>>, vector<1x1x34x136xf32>
      %44 = vector.shape_cast %43 : vector<1x1x34x136xf32> to vector<34x136xf32>
      %45 = vector.extract_strided_slice %44 {offsets = [0, 0], sizes = [32, 136], strides = [1, 1]} : vector<34x136xf32> to vector<32x136xf32>
      %c6 = arith.constant 6 : index
      %c0_32 = arith.constant 0 : index
      %c0_33 = arith.constant 0 : index
      %46 = vector.load %arg3[%c6, %c0_32, %c0_33] : memref<9x136x128xf32, #tpu.memory_space<vmem>>, vector<1x136x128xf32>
      %47 = vector.shape_cast %46 : vector<1x136x128xf32> to vector<136x128xf32>
      %cst_34 = arith.constant dense<0.000000e+00> : vector<32x128xf32>
      %48 = tpu.matmul %45, %47, %cst_34 {dimension_numbers = #tpu.dot_dimension_numbers<[1], [0], [0], [1], [0, 0, 1, 1], [], []>} : vector<32x136xf32>, vector<136x128xf32>, vector<32x128xf32> -> vector<32x128xf32>
      %49 = arith.addf %40, %48 : vector<32x128xf32>
      %50 = vector.extract_strided_slice %44 {offsets = [1, 0], sizes = [32, 136], strides = [1, 1]} : vector<34x136xf32> to vector<32x136xf32>
      %c7 = arith.constant 7 : index
      %c0_35 = arith.constant 0 : index
      %c0_36 = arith.constant 0 : index
      %51 = vector.load %arg3[%c7, %c0_35, %c0_36] : memref<9x136x128xf32, #tpu.memory_space<vmem>>, vector<1x136x128xf32>
      %52 = vector.shape_cast %51 : vector<1x136x128xf32> to vector<136x128xf32>
      %cst_37 = arith.constant dense<0.000000e+00> : vector<32x128xf32>
      %53 = tpu.matmul %50, %52, %cst_37 {dimension_numbers = #tpu.dot_dimension_numbers<[1], [0], [0], [1], [0, 0, 1, 1], [], []>} : vector<32x136xf32>, vector<136x128xf32>, vector<32x128xf32> -> vector<32x128xf32>
      %54 = arith.addf %49, %53 : vector<32x128xf32>
      %55 = vector.extract_strided_slice %44 {offsets = [2, 0], sizes = [32, 136], strides = [1, 1]} : vector<34x136xf32> to vector<32x136xf32>
      %c8 = arith.constant 8 : index
      %c0_38 = arith.constant 0 : index
      %c0_39 = arith.constant 0 : index
      %56 = vector.load %arg3[%c8, %c0_38, %c0_39] : memref<9x136x128xf32, #tpu.memory_space<vmem>>, vector<1x136x128xf32>
      %57 = vector.shape_cast %56 : vector<1x136x128xf32> to vector<136x128xf32>
      %cst_40 = arith.constant dense<0.000000e+00> : vector<32x128xf32>
      %58 = tpu.matmul %55, %57, %cst_40 {dimension_numbers = #tpu.dot_dimension_numbers<[1], [0], [0], [1], [0, 0, 1, 1], [], []>} : vector<32x136xf32>, vector<136x128xf32>, vector<32x128xf32> -> vector<32x128xf32>
      %59 = arith.addf %54, %58 : vector<32x128xf32>
      %60 = vector.broadcast %0 : vector<1x128xf32> to vector<32x128xf32>
      %61 = arith.addf %59, %60 : vector<32x128xf32>
      %cst_41 = arith.constant 0.000000e+00 : f32
      %62 = vector.broadcast %cst_41 : f32 to vector<32x128xf32>
      %63 = arith.maximumf %61, %62 : vector<32x128xf32>
      %c0_42 = arith.constant 0 : index
      %64 = arith.index_cast %arg6 : i32 to index
      %c0_43 = arith.constant 0 : index
      %c0_44 = arith.constant 0 : index
      %65 = vector.load %arg2[%c0_42, %64, %c0_43, %c0_44] : memref<1x32x32x128xf32, #tpu.memory_space<vmem>>, vector<1x1x32x128xf32>
      %66 = vector.shape_cast %65 : vector<1x1x32x128xf32> to vector<32x128xf32>
      %67 = arith.addf %63, %66 : vector<32x128xf32>
      %c0_45 = arith.constant 0 : index
      %68 = arith.index_cast %arg6 : i32 to index
      %c0_46 = arith.constant 0 : index
      %c0_47 = arith.constant 0 : index
      %69 = vector.load %arg5[%c0_45, %68, %c0_46, %c0_47] : memref<1x32x32x128xf32, #tpu.memory_space<vmem>>, vector<1x1x32x128xf32>
      %70 = vector.shape_cast %69 : vector<1x1x32x128xf32> to vector<32x128xf32>
      %71 = vector.shape_cast %67 : vector<32x128xf32> to vector<1x1x32x128xf32>
      tpu.vector_store %arg5[%c0_45, %68, %c0_46, %c0_47], %71 {strides = array<i32>} : memref<1x32x32x128xf32, #tpu.memory_space<vmem>>, vector<1x1x32x128xf32>,
    }
    %c32_i32_1 = arith.constant 32 : i32
    return
  }
  func.func @transform_0(%arg0: i32) -> (i32, i32, i32, i32) {
    %c0_i32 = arith.constant 0 : i32
    %c0_i32_0 = arith.constant 0 : i32
    %c0_i32_1 = arith.constant 0 : i32
    %c0_i32_2 = arith.constant 0 : i32
    return %arg0, %c0_i32, %c0_i32_0, %c0_i32_1 : i32, i32, i32, i32
  }
  func.func @transform_1(%arg0: i32) -> (i32, i32, i32, i32) {
    %c0_i32 = arith.constant 0 : i32
    %c0_i32_0 = arith.constant 0 : i32
    %c0_i32_1 = arith.constant 0 : i32
    %c0_i32_2 = arith.constant 0 : i32
    return %arg0, %c0_i32, %c0_i32_0, %c0_i32_1 : i32, i32, i32, i32
  }
  func.func @transform_2(%arg0: i32) -> (i32, i32, i32) {
    %c0_i32 = arith.constant 0 : i32
    %c0_i32_0 = arith.constant 0 : i32
    %c0_i32_1 = arith.constant 0 : i32
    %c0_i32_2 = arith.constant 0 : i32
    return %c0_i32, %c0_i32_0, %c0_i32_1 : i32, i32, i32
  }
  func.func @transform_3(%arg0: i32) -> (i32, i32) {
    %c0_i32 = arith.constant 0 : i32
    %c0_i32_0 = arith.constant 0 : i32
    %c0_i32_1 = arith.constant 0 : i32
    return %c0_i32, %c0_i32_0 : i32, i32
  }
  func.func @transform_4(%arg0: i32) -> (i32, i32, i32, i32) {
    %c0_i32 = arith.constant 0 : i32
    %c0_i32_0 = arith.constant 0 : i32
    %c0_i32_1 = arith.constant 0 : i32
    %c0_i32_2 = arith.constant 0 : i32
    return %arg0, %c0_i32, %c0_i32_0, %c0_i32_1 : i32, i32, i32, i32
  }
}

</mosaic_0001>

<llo_original>
// kernel: mul.4
$region0: #{mul.4}
  %s0 = inlined_call_operand.vmem [shape: f32[4,2,2,2,4], index: 0, kind: input, shape index: {}]
  %s1 = inlined_call_operand.vmem [shape: f32[4,32], index: 1, kind: output, shape index: {}]
  $region1: #{mul.4} parent=0
    #allocation0 [shape = 'u8[4096]{0}', space=vmem, size = 0x1000, scoped, tag = 'scoped mem for output reshape']
    #allocation1 [shape = 'u8[65536]{0}', space=vmem, size = 0x10000, scoped, tag = 'scoped mem for input reshape']
    %s3 = sshll.u32 1, 2
    %s4 = ssub.s32 %s3, 1
    %s5 = smul.addr 2, 15
    %s6 = scalar_lea.vmem %s0, %s5
    %v7 = vld [vmem:[%s6] sm:%s4]
    %s8 = scalar_lea.vmem [#allocation1], 120
    %9 = vst [vmem:[%s8] sm:%s4] %v7
    %s10 = smul.addr 2, 14
    %s11 = scalar_lea.vmem %s0, %s10
    %v12 = vld [vmem:[%s11] sm:%s4]
    %s13 = scalar_lea.vmem [#allocation1], 112
    %14 = vst [vmem:[%s13] sm:%s4] %v12
    %s15 = smul.addr 2, 13
    %s16 = scalar_lea.vmem %s0, %s15
    %v17 = vld [vmem:[%s16] sm:%s4]
    %s18 = scalar_lea.vmem [#allocation1], 104
    %19 = vst [vmem:[%s18] sm:%s4] %v17
    %s20 = smul.addr 2, 12
    %s21 = scalar_lea.vmem %s0, %s20
    %v22 = vld [vmem:[%s21] sm:%s4]
    %s23 = scalar_lea.vmem [#allocation1], 96
    %24 = vst [vmem:[%s23] sm:%s4] %v22
    %s25 = smul.addr 2, 11
    %s26 = scalar_lea.vmem %s0, %s25
    %v27 = vld [vmem:[%s26] sm:%s4]
    %s28 = scalar_lea.vmem [#allocation1], 88
    %29 = vst [vmem:[%s28] sm:%s4] %v27
    %s30 = smul.addr 2, 10
    %s31 = scalar_lea.vmem %s0, %s30
    %v32 = vld [vmem:[%s31] sm:%s4]
    %s33 = scalar_lea.vmem [#allocation1], 80
    %34 = vst [vmem:[%s33] sm:%s4] %v32
    %s35 = smul.addr 2, 9
    %s36 = scalar_lea.vmem %s0, %s35
    %v37 = vld [vmem:[%s36] sm:%s4]
    %s38 = scalar_lea.vmem [#allocation1], 72
    %39 = vst [vmem:[%s38] sm:%s4] %v37
    %s40 = smul.addr 2, 8
    %s41 = scalar_lea.vmem %s0, %s40
    %v42 = vld [vmem:[%s41] sm:%s4]
    %s43 = scalar_lea.vmem [#allocation1], 64
    %44 = vst [vmem:[%s43] sm:%s4] %v42
    %s45 = smul.addr 2, 7
    %s46 = scalar_lea.vmem %s0, %s45
    %v47 = vld [vmem:[%s46] sm:%s4]
    %s48 = scalar_lea.vmem [#allocation1], 56
    %49 = vst [vmem:[%s48] sm:%s4] %v47
    %s50 = smul.addr 2, 6
    %s51 = scalar_lea.vmem %s0, %s50
    %v52 = vld [vmem:[%s51] sm:%s4]
    %s53 = scalar_lea.vmem [#allocation1], 48
    %54 = vst [vmem:[%s53] sm:%s4] %v52
    %s55 = smul.addr 2, 5
    %s56 = scalar_lea.vmem %s0, %s55
    %v57 = vld [vmem:[%s56] sm:%s4]
    %s58 = scalar_lea.vmem [#allocation1], 40
    %59 = vst [vmem:[%s58] sm:%s4] %v57
    %s60 = smul.addr 2, 4
    %s61 = scalar_lea.vmem %s0, %s60
    %v62 = vld [vmem:[%s61] sm:%s4]
    %s63 = scalar_lea.vmem [#allocation1], 32
    %64 = vst [vmem:[%s63] sm:%s4] %v62
    %s65 = smul.addr 2, 3
    %s66 = scalar_lea.vmem %s0, %s65
    %v67 = vld [vmem:[%s66] sm:%s4]
    %s68 = scalar_lea.vmem [#allocation1], 24
    %69 = vst [vmem:[%s68] sm:%s4] %v67
    %s70 = smul.addr 2, 2
    %s71 = scalar_lea.vmem %s0, %s70
    %v72 = vld [vmem:[%s71] sm:%s4]
    %s73 = scalar_lea.vmem [#allocation1], 16
    %74 = vst [vmem:[%s73] sm:%s4] %v72
    %s75 = scalar_lea.vmem %s0, 2
    %v76 = vld [vmem:[%s75] sm:%s4]
    %s77 = scalar_lea.vmem [#allocation1], 8
    %78 = vst [vmem:[%s77] sm:%s4] %v76
    %v79 = vld [vmem:[%s0] sm:%s4]
    %80 = vst [vmem:[#allocation1] sm:%s4] %v79
    %v81 = vld [vmem:[#allocation1] sm:$0x1]
    %s82 = scalar_lea.vmem [#allocation1], 31
    %v83 = vld [vmem:[%s82] sm:$0x2]
    %vm84 = vcmask 1041409
    %v85 = vsel %vm84, %v83, %v81
    %s86 = scalar_lea.vmem [#allocation1], 62
    %v87 = vld [vmem:[%s86] sm:$0x4]
    %vm88 = vcmask 1042434
    %v89 = vsel %vm88, %v87, %v85
    %s90 = scalar_lea.vmem [#allocation1], 93
    %v91 = vld [vmem:[%s90] sm:$0x8]
    %vm92 = vcmask 1043459
    %v93 = vsel %vm92, %v91, %v89
    %vm94 = vcmask 31744
    %95 = vst.msk [vmem:[#allocation0] sm:$0xf] %vm94, %v93
    %s96 = scalar_lea.vmem [#allocation1], 25
    %v97 = vld [vmem:[%s96] sm:$0x1]
    %s98 = scalar_lea.vmem [#allocation1], 56
    %v99 = vld [vmem:[%s98] sm:$0x2]
    %vm100 = vcmask 1041409
    %v101 = vsel %vm100, %v99, %v97
    %s102 = scalar_lea.vmem [#allocation1], 87
    %v103 = vld [vmem:[%s102] sm:$0x4]
    %vm104 = vcmask 1042434
    %v105 = vsel %vm104, %v103, %v101
    %s106 = scalar_lea.vmem [#allocation1], 118
    %v107 = vld [vmem:[%s106] sm:$0x8]
    %vm108 = vcmask 1043459
    %v109 = vsel %vm108, %v107, %v105
    %110 = vrot.lane.b32.xlu0 %v109, 28
    %v111 = vpop.permute.xlu0 %110
    %vm112 = vcmask 261344
    %113 = vst.msk [vmem:[#allocation0] sm:$0xf] %vm112, %v111
    %s114 = scalar_lea.vmem [#allocation1], 24
    %v115 = vld [vmem:[%s114] sm:$0x1]
    %s116 = scalar_lea.vmem [#allocation1], 55
    %v117 = vld [vmem:[%s116] sm:$0x2]
    %vm118 = vcmask 1041409
    %v119 = vsel %vm118, %v117, %v115
    %s120 = scalar_lea.vmem [#allocation1], 86
    %v121 = vld [vmem:[%s120] sm:$0x4]
    %vm122 = vcmask 1042434
    %v123 = vsel %vm122, %v121, %v119
    %s124 = scalar_lea.vmem [#allocation1], 117
    %v125 = vld [vmem:[%s124] sm:$0x8]
    %vm126 = vcmask 1043459
    %v127 = vsel %vm126, %v125, %v123
    %128 = vrot.lane.b32.xlu0 %v127, 24
    %v129 = vpop.permute.xlu0 %128
    %vm130 = vcmask 228544
    %131 = vst.msk [vmem:[#allocation0] sm:$0xf] %vm130, %v129
    %s132 = scalar_lea.vmem [#allocation1], 17
    %v133 = vld [vmem:[%s132] sm:$0x1]
    %s134 = scalar_lea.vmem [#allocation1], 48
    %v135 = vld [vmem:[%s134] sm:$0x2]
    %vm136 = vcmask 1041409
    %v137 = vsel %vm136, %v135, %v133
    %s138 = scalar_lea.vmem [#allocation1], 79
    %v139 = vld [vmem:[%s138] sm:$0x4]
    %vm140 = vcmask 1042434
    %v141 = vsel %vm140, %v139, %v137
    %s142 = scalar_lea.vmem [#allocation1], 110
    %v143 = vld [vmem:[%s142] sm:$0x8]
    %vm144 = vcmask 1043459
    %v145 = vsel %vm144, %v143, %v141
    %146 = vrot.lane.b32.xlu0 %v145, 20
    %v147 = vpop.permute.xlu0 %146
    %vm148 = vcmask 195744
    %149 = vst.msk [vmem:[#allocation0] sm:$0xf] %vm148, %v147
    %s150 = scalar_lea.vmem [#allocation1], 16
    %v151 = vld [vmem:[%s150] sm:$0x1]
    %s152 = scalar_lea.vmem [#allocation1], 47
    %v153 = vld [vmem:[%s152] sm:$0x2]
    %vm154 = vcmask 1041409
    %v155 = vsel %vm154, %v153, %v151
    %s156 = scalar_lea.vmem [#allocation1], 78
    %v157 = vld [vmem:[%s156] sm:$0x4]
    %vm158 = vcmask 1042434
    %v159 = vsel %vm158, %v157, %v155
    %s160 = scalar_lea.vmem [#allocation1], 109
    %v161 = vld [vmem:[%s160] sm:$0x8]
    %vm162 = vcmask 1043459
    %v163 = vsel %vm162, %v161, %v159
    %164 = vrot.lane.b32.xlu0 %v163, 16
    %v165 = vpop.permute.xlu0 %164
    %vm166 = vcmask 162944
    %167 = vst.msk [vmem:[#allocation0] sm:$0xf] %vm166, %v165
    %s168 = scalar_lea.vmem [#allocation1], 9
    %v169 = vld [vmem:[%s168] sm:$0x1]
    %s170 = scalar_lea.vmem [#allocation1], 40
    %v171 = vld [vmem:[%s170] sm:$0x2]
    %vm172 = vcmask 1041409
    %v173 = vsel %vm172, %v171, %v169
    %s174 = scalar_lea.vmem [#allocation1], 71
    %v175 = vld [vmem:[%s174] sm:$0x4]
    %vm176 = vcmask 1042434
    %v177 = vsel %vm176, %v175, %v173
    %s178 = scalar_lea.vmem [#allocation1], 102
    %v179 = vld [vmem:[%s178] sm:$0x8]
    %vm180 = vcmask 1043459
    %v181 = vsel %vm180, %v179, %v177
    %182 = vrot.lane.b32.xlu0 %v181, 12
    %v183 = vpop.permute.xlu0 %182
    %vm184 = vcmask 130144
    %185 = vst.msk [vmem:[#allocation0] sm:$0xf] %vm184, %v183
    %s186 = scalar_lea.vmem [#allocation1], 8
    %v187 = vld [vmem:[%s186] sm:$0x1]
    %s188 = scalar_lea.vmem [#allocation1], 39
    %v189 = vld [vmem:[%s188] sm:$0x2]
    %vm190 = vcmask 1041409
    %v191 = vsel %vm190, %v189, %v187
    %s192 = scalar_lea.vmem [#allocation1], 70
    %v193 = vld [vmem:[%s192] sm:$0x4]
    %vm194 = vcmask 1042434
    %v195 = vsel %vm194, %v193, %v191
    %s196 = scalar_lea.vmem [#allocation1], 101
    %v197 = vld [vmem:[%s196] sm:$0x8]
    %vm198 = vcmask 1043459
    %v199 = vsel %vm198, %v197, %v195
    %200 = vrot.lane.b32.xlu0 %v199, 8
    %v201 = vpop.permute.xlu0 %200
    %vm202 = vcmask 97344
    %203 = vst.msk [vmem:[#allocation0] sm:$0xf] %vm202, %v201
    %s204 = scalar_lea.vmem [#allocation1], 1
    %v205 = vld [vmem:[%s204] sm:$0x1]
    %s206 = scalar_lea.vmem [#allocation1], 32
    %v207 = vld [vmem:[%s206] sm:$0x2]
    %vm208 = vcmask 1041409
    %v209 = vsel %vm208, %v207, %v205
    %s210 = scalar_lea.vmem [#allocation1], 63
    %v211 = vld [vmem:[%s210] sm:$0x4]
    %vm212 = vcmask 1042434
    %v213 = vsel %vm212, %v211, %v209
    %s214 = scalar_lea.vmem [#allocation1], 94
    %v215 = vld [vmem:[%s214] sm:$0x8]
    %vm216 = vcmask 1043459
    %v217 = vsel %vm216, %v215, %v213
    %218 = vrot.lane.b32.xlu0 %v217, 4
    %v219 = vpop.permute.xlu0 %218
    %vm220 = vcmask 64544
    %221 = vst.msk [vmem:[#allocation0] sm:$0xf] %vm220, %v219
    %s223 = sshll.u32 1, 4
    %s224 = ssub.s32 %s223, 1
    %v226 = vld [vmem:[#allocation0] sm:%s224]
    %s227 = sshll.u32 1, 4
    %s228 = ssub.s32 %s227, 1
    %229 = vst [vmem:[%s1] sm:%s228] %v226

// kernel: tile.18
$region0: #{tile.18}
  #allocation0 [shape = 's32[1]{0}', space=sflag, size = 0x4, scoped, tag = 'scoped memory for tile.18']
  %s0 = inlined_call_operand.vmem [shape: f32[4], index: 0, kind: input, shape index: {}]
  %s1 = inlined_call_operand.vmem [shape: f32[32,4], index: 1, kind: output, shape index: {}]
  // Predicated region
  $region2: #{tile.18} parent=0 // pred_check
    _
  $region3: #{tile.18} parent=0 // pred_check_branch
    %3 = sbr.rel (0) target = $region5
  $region4: #{tile.18} parent=0 // pred_region
    _
  $region5: #{tile.18} parent=0 // pred_fallthru
    _
  %v4 = vld [vmem:[%s0] ss:$0 sm:$0xff]
  %5 = vst [vmem:[%s1] sm:$0xff] %v4
  %s6 = scalar_lea.vmem %s1, 8
  %7 = vst [vmem:[%s6] sm:$0xff] %v4
  %s8 = scalar_lea.vmem %s1, 16
  %9 = vst [vmem:[%s8] sm:$0xff] %v4
  %s10 = scalar_lea.vmem %s1, 24
  %11 = vst [vmem:[%s10] sm:$0xff] %v4

// kernel: tile.19
$region0: #{tile.19}
  %s0 = inlined_call_operand.vmem [shape: f32[32,4], index: 0, kind: input, shape index: {}]
  %s1 = inlined_call_operand.vmem [shape: f32[1,128], index: 1, kind: output, shape index: {}]
  $region1: #{tile.19} parent=0
    #allocation0 [shape = 'u8[4096]{0}', space=vmem, size = 0x1000, scoped, tag = 'scoped mem for output reshape']
    %v2 = vld [vmem:[%s0] sm:$0x1]
    %vm3 = vcmask 31744
    %4 = vst.msk [vmem:[#allocation0] sm:$0x1] %vm3, %v2
    %s5 = scalar_lea.vmem %s0, 31
    %v6 = vld [vmem:[%s5] sm:$0x1]
    %7 = vrot.lane.b32.xlu0 %v6, 124
    %v8 = vpop.permute.xlu0 %7
    %vm9 = vcmask 1048544
    %10 = vst.msk [vmem:[#allocation0] sm:$0x1] %vm9, %v8
    %s11 = scalar_lea.vmem %s0, 30
    %v12 = vld [vmem:[%s11] sm:$0x1]
    %13 = vrot.lane.b32.xlu0 %v12, 120
    %v14 = vpop.permute.xlu0 %13
    %vm15 = vcmask 1015744
    %16 = vst.msk [vmem:[#allocation0] sm:$0x1] %vm15, %v14
    %s17 = scalar_lea.vmem %s0, 29
    %v18 = vld [vmem:[%s17] sm:$0x1]
    %19 = vrot.lane.b32.xlu0 %v18, 116
    %v20 = vpop.permute.xlu0 %19
    %vm21 = vcmask 982944
    %22 = vst.msk [vmem:[#allocation0] sm:$0x1] %vm21, %v20
    %s23 = scalar_lea.vmem %s0, 28
    %v24 = vld [vmem:[%s23] sm:$0x1]
    %25 = vrot.lane.b32.xlu0 %v24, 112
    %v26 = vpop.permute.xlu0 %25
    %vm27 = vcmask 950144
    %28 = vst.msk [vmem:[#allocation0] sm:$0x1] %vm27, %v26
    %s29 = scalar_lea.vmem %s0, 27
    %v30 = vld [vmem:[%s29] sm:$0x1]
    %31 = vrot.lane.b32.xlu0 %v30, 108
    %v32 = vpop.permute.xlu0 %31
    %vm33 = vcmask 917344
    %34 = vst.msk [vmem:[#allocation0] sm:$0x1] %vm33, %v32
    %s35 = scalar_lea.vmem %s0, 26
    %v36 = vld [vmem:[%s35] sm:$0x1]
    %37 = vrot.lane.b32.xlu0 %v36, 104
    %v38 = vpop.permute.xlu0 %37
    %vm39 = vcmask 884544
    %40 = vst.msk [vmem:[#allocation0] sm:$0x1] %vm39, %v38
    %s41 = scalar_lea.vmem %s0, 25
    %v42 = vld [vmem:[%s41] sm:$0x1]
    %43 = vrot.lane.b32.xlu0 %v42, 100
    %v44 = vpop.permute.xlu0 %43
    %vm45 = vcmask 851744
    %46 = vst.msk [vmem:[#allocation0] sm:$0x1] %vm45, %v44
    %s47 = scalar_lea.vmem %s0, 24
    %v48 = vld [vmem:[%s47] sm:$0x1]
    %49 = vrot.lane.b32.xlu0 %v48, 96
    %v50 = vpop.permute.xlu0 %49
    %vm51 = vcmask 818944
    %52 = vst.msk [vmem:[#allocation0] sm:$0x1] %vm51, %v50
    %s53 = scalar_lea.vmem %s0, 23
    %v54 = vld [vmem:[%s53] sm:$0x1]
    %55 = vrot.lane.b32.xlu0 %v54, 92
    %v56 = vpop.permute.xlu0 %55
    %vm57 = vcmask 786144
    %58 = vst.msk [vmem:[#allocation0] sm:$0x1] %vm57, %v56
    %s59 = scalar_lea.vmem %s0, 22
    %v60 = vld [vmem:[%s59] sm:$0x1]
    %61 = vrot.lane.b32.xlu0 %v60, 88
    %v62 = vpop.permute.xlu0 %61
    %vm63 = vcmask 753344
    %64 = vst.msk [vmem:[#allocation0] sm:$0x1] %vm63, %v62
    %s65 = scalar_lea.vmem %s0, 21
    %v66 = vld [vmem:[%s65] sm:$0x1]
    %67 = vrot.lane.b32.xlu0 %v66, 84
    %v68 = vpop.permute.xlu0 %67
    %vm69 = vcmask 720544
    %70 = vst.msk [vmem:[#allocation0] sm:$0x1] %vm69, %v68
    %s71 = scalar_lea.vmem %s0, 20
    %v72 = vld [vmem:[%s71] sm:$0x1]
    %73 = vrot.lane.b32.xlu0 %v72, 80
    %v74 = vpop.permute.xlu0 %73
    %vm75 = vcmask 687744
    %76 = vst.msk [vmem:[#allocation0] sm:$0x1] %vm75, %v74
    %s77 = scalar_lea.vmem %s0, 19
    %v78 = vld [vmem:[%s77] sm:$0x1]
    %79 = vrot.lane.b32.xlu0 %v78, 76
    %v80 = vpop.permute.xlu0 %79
    %vm81 = vcmask 654944
    %82 = vst.msk [vmem:[#allocation0] sm:$0x1] %vm81, %v80
    %s83 = scalar_lea.vmem %s0, 18
    %v84 = vld [vmem:[%s83] sm:$0x1]
    %85 = vrot.lane.b32.xlu0 %v84, 72
    %v86 = vpop.permute.xlu0 %85
    %vm87 = vcmask 622144
    %88 = vst.msk [vmem:[#allocation0] sm:$0x1] %vm87, %v86
    %s89 = scalar_lea.vmem %s0, 17
    %v90 = vld [vmem:[%s89] sm:$0x1]
    %91 = vrot.lane.b32.xlu0 %v90, 68
    %v92 = vpop.permute.xlu0 %91
    %vm93 = vcmask 589344
    %94 = vst.msk [vmem:[#allocation0] sm:$0x1] %vm93, %v92
    %s95 = scalar_lea.vmem %s0, 16
    %v96 = vld [vmem:[%s95] sm:$0x1]
    %97 = vrot.lane.b32.xlu0 %v96, 64
    %v98 = vpop.permute.xlu0 %97
    %vm99 = vcmask 556544
    %100 = vst.msk [vmem:[#allocation0] sm:$0x1] %vm99, %v98
    %s101 = scalar_lea.vmem %s0, 15
    %v102 = vld [vmem:[%s101] sm:$0x1]
    %103 = vrot.lane.b32.xlu0 %v102, 60
    %v104 = vpop.permute.xlu0 %103
    %vm105 = vcmask 523744
    %106 = vst.msk [vmem:[#allocation0] sm:$0x1] %vm105, %v104
    %s107 = scalar_lea.vmem %s0, 14
    %v108 = vld [vmem:[%s107] sm:$0x1]
    %109 = vrot.lane.b32.xlu0 %v108, 56
    %v110 = vpop.permute.xlu0 %109
    %vm111 = vcmask 490944
    %112 = vst.msk [vmem:[#allocation0] sm:$0x1] %vm111, %v110
    %s113 = scalar_lea.vmem %s0, 13
    %v114 = vld [vmem:[%s113] sm:$0x1]
    %115 = vrot.lane.b32.xlu0 %v114, 52
    %v116 = vpop.permute.xlu0 %115
    %vm117 = vcmask 458144
    %118 = vst.msk [vmem:[#allocation0] sm:$0x1] %vm117, %v116
    %s119 = scalar_lea.vmem %s0, 12
    %v120 = vld [vmem:[%s119] sm:$0x1]
    %121 = vrot.lane.b32.xlu0 %v120, 48
    %v122 = vpop.permute.xlu0 %121
    %vm123 = vcmask 425344
    %124 = vst.msk [vmem:[#allocation0] sm:$0x1] %vm123, %v122
    %s125 = scalar_lea.vmem %s0, 11
    %v126 = vld [vmem:[%s125] sm:$0x1]
    %127 = vrot.lane.b32.xlu0 %v126, 44
    %v128 = vpop.permute.xlu0 %127
    %vm129 = vcmask 392544
    %130 = vst.msk [vmem:[#allocation0] sm:$0x1] %vm129, %v128
    %s131 = scalar_lea.vmem %s0, 10
    %v132 = vld [vmem:[%s131] sm:$0x1]
    %133 = vrot.lane.b32.xlu0 %v132, 40
    %v134 = vpop.permute.xlu0 %133
    %vm135 = vcmask 359744
    %136 = vst.msk [vmem:[#allocation0] sm:$0x1] %vm135, %v134
    %s137 = scalar_lea.vmem %s0, 9
    %v138 = vld [vmem:[%s137] sm:$0x1]
    %139 = vrot.lane.b32.xlu0 %v138, 36
    %v140 = vpop.permute.xlu0 %139
    %vm141 = vcmask 326944
    %142 = vst.msk [vmem:[#allocation0] sm:$0x1] %vm141, %v140
    %s143 = scalar_lea.vmem %s0, 8
    %v144 = vld [vmem:[%s143] sm:$0x1]
    %145 = vrot.lane.b32.xlu0 %v144, 32
    %v146 = vpop.permute.xlu0 %145
    %vm147 = vcmask 294144
    %148 = vst.msk [vmem:[#allocation0] sm:$0x1] %vm147, %v146
    %s149 = scalar_lea.vmem %s0, 7
    %v150 = vld [vmem:[%s149] sm:$0x1]
    %151 = vrot.lane.b32.xlu0 %v150, 28
    %v152 = vpop.permute.xlu0 %151
    %vm153 = vcmask 261344
    %154 = vst.msk [vmem:[#allocation0] sm:$0x1] %vm153, %v152
    %s155 = scalar_lea.vmem %s0, 6
    %v156 = vld [vmem:[%s155] sm:$0x1]
    %157 = vrot.lane.b32.xlu0 %v156, 24
    %v158 = vpop.permute.xlu0 %157
    %vm159 = vcmask 228544
    %160 = vst.msk [vmem:[#allocation0] sm:$0x1] %vm159, %v158
    %s161 = scalar_lea.vmem %s0, 5
    %v162 = vld [vmem:[%s161] sm:$0x1]
    %163 = vrot.lane.b32.xlu0 %v162, 20
    %v164 = vpop.permute.xlu0 %163
    %vm165 = vcmask 195744
    %166 = vst.msk [vmem:[#allocation0] sm:$0x1] %vm165, %v164
    %s167 = scalar_lea.vmem %s0, 4
    %v168 = vld [vmem:[%s167] sm:$0x1]
    %169 = vrot.lane.b32.xlu0 %v168, 16
    %v170 = vpop.permute.xlu0 %169
    %vm171 = vcmask 162944
    %172 = vst.msk [vmem:[#allocation0] sm:$0x1] %vm171, %v170
    %s173 = scalar_lea.vmem %s0, 3
    %v174 = vld [vmem:[%s173] sm:$0x1]
    %175 = vrot.lane.b32.xlu0 %v174, 12
    %v176 = vpop.permute.xlu0 %175
    %vm177 = vcmask 130144
    %178 = vst.msk [vmem:[#allocation0] sm:$0x1] %vm177, %v176
    %s179 = scalar_lea.vmem %s0, 2
    %v180 = vld [vmem:[%s179] sm:$0x1]
    %181 = vrot.lane.b32.xlu0 %v180, 8
    %v182 = vpop.permute.xlu0 %181
    %vm183 = vcmask 97344
    %184 = vst.msk [vmem:[#allocation0] sm:$0x1] %vm183, %v182
    %s185 = scalar_lea.vmem %s0, 1
    %v186 = vld [vmem:[%s185] sm:$0x1]
    %187 = vrot.lane.b32.xlu0 %v186, 4
    %v188 = vpop.permute.xlu0 %187
    %vm189 = vcmask 64544
    %190 = vst.msk [vmem:[#allocation0] sm:$0x1] %vm189, %v188
    %s192 = sshll.u32 1, 1
    %s193 = ssub.s32 %s192, 1
    %v195 = vld [vmem:[#allocation0] sm:%s193]
    %s196 = sshll.u32 1, 1
    %s197 = ssub.s32 %s196, 1
    %198 = vst [vmem:[%s1] sm:%s197] %v195

// kernel: dh_up_res_forward.3
$region0: #{dh_up_res_forward.3}
  #allocation0 [shape = 'u32[]', space=smem, size = 0x4, offset = 0x4, fixed_abs, tag = 'smem constant byte address 0x4 - core index']
  #allocation1 [shape = 'u32[144,128]{1,0:T(1,128)}', space=vmem, size = 0x12000, scoped, tag = 'internal scratch']
  %s0 = inlined_call_operand.vmem [shape: f32[2048,16], index: 0, kind: input, shape index: {}]
  %s1 = inlined_call_operand.vmem [shape: f32[16,128], index: 1, kind: input, shape index: {}]
  %s2 = inlined_call_operand.vmem [shape: f32[1,128], index: 2, kind: input, shape index: {}]
  %s3 = inlined_call_operand.vmem [shape: f32[2048,128], index: 3, kind: output, shape index: {}]
  %s4 = sld [smem:[#allocation0]]
  $region45: #{dh_up_res_forward.3} parent=0
    _
  %s6 = ssub.s32 1, %s4
  %s7 = scalar_select 0, %s6, %s4
  loop: start=0, step=1, limit=6
  $region2: #{dh_up_res_forward.3} parent=0 // loop_pre_header
    _
  $region3: #{dh_up_res_forward.3} parent=0 // loop_header
    %s9 = sphi 0, %s13
    %p10 = scmp.ge.s32.totalorder %s9, 6
    %s19 = sphi 0, %s21
    %s22 = sphi 0, %s19
    %s23 = sphi 0, %s22
    %s39 = sphi 0, %s23
    %s43 = sphi 0, %s43
    %s45 = sphi 0, %s43
    %s46 = sphi 0, %s45
    %s60 = sphi 0, %s46
    %s64 = sphi 0, %s64
    %s66 = sphi 0, %s64
    %s67 = sphi 0, %s66
    %s81 = sphi 0, %s67
    %s87 = sphi 0, %s89
    %s90 = sphi 0, %s87
    %s91 = sphi 0, %s90
    %s107 = sphi 0, %s91
  $region4: #{dh_up_res_forward.3} parent=0 // loop_header_branch
    %12 = sbr.rel (%p10) target = $region8
  $region5: #{dh_up_res_forward.3} parent=0 // loop_body
    %s14 = ssub.s32 %s9, 1
    %s15 = ssub.s32 %s9, 2
    %s16 = sadd.s32 %s9, 1
    %s17 = ssub.s32 %s9, %s16
    %p18 = scmp.eq.s32.totalorder %s17, 0
    %s20 = sadd.s32 %s19, 1
    %s21 = scalar_select %p18, %s19, %s20
    %p24 = pneg %p18
    %p25 = scmp.eq.s32.totalorder %s9, 3
    %p26 = por %p24, %p25
    %p27 = scmp.ne.s32.totalorder %s19, %s22
    %p28 = scmp.eq.s32.totalorder %s9, 0
    %p29 = por %p27, %p28
    %p30 = scmp.ne.s32.totalorder %s19, %s22
    %p31 = scmp.eq.s32.totalorder %s14, 3
    %p32 = por %p30, %p31
    %p33 = scmp.ne.s32.totalorder %s22, %s23
    %p34 = scmp.eq.s32.totalorder %s14, 0
    %p35 = por %p33, %p34
    %p36 = scmp.ne.s32.totalorder %s22, %s23
    %p37 = scmp.eq.s32.totalorder %s15, 3
    %p38 = por %p36, %p37
    %p40 = scmp.ne.s32.totalorder %s23, %s39
    %p41 = scmp.eq.s32.totalorder %s15, 0
    %p42 = por %p40, %p41
    %s44 = sadd.s32 %s43, 1
    %p47 = scmp.eq.s32.totalorder %s9, 3
    %p48 = scmp.ne.s32.totalorder %s43, %s45
    %p49 = scmp.eq.s32.totalorder %s9, 0
    %p50 = por %p48, %p49
    %p51 = scmp.ne.s32.totalorder %s43, %s45
    %p52 = scmp.eq.s32.totalorder %s14, 3
    %p53 = por %p51, %p52
    %p54 = scmp.ne.s32.totalorder %s45, %s46
    %p55 = scmp.eq.s32.totalorder %s14, 0
    %p56 = por %p54, %p55
    %p57 = scmp.ne.s32.totalorder %s45, %s46
    %p58 = scmp.eq.s32.totalorder %s15, 3
    %p59 = por %p57, %p58
    %p61 = scmp.ne.s32.totalorder %s46, %s60
    %p62 = scmp.eq.s32.totalorder %s15, 0
    %p63 = por %p61, %p62
    %s65 = sadd.s32 %s64, 1
    %p68 = scmp.eq.s32.totalorder %s9, 3
    %p69 = scmp.ne.s32.totalorder %s64, %s66
    %p70 = scmp.eq.s32.totalorder %s9, 0
    %p71 = por %p69, %p70
    %p72 = scmp.ne.s32.totalorder %s64, %s66
    %p73 = scmp.eq.s32.totalorder %s14, 3
    %p74 = por %p72, %p73
    %p75 = scmp.ne.s32.totalorder %s66, %s67
    %p76 = scmp.eq.s32.totalorder %s14, 0
    %p77 = por %p75, %p76
    %p78 = scmp.ne.s32.totalorder %s66, %s67
    %p79 = scmp.eq.s32.totalorder %s15, 3
    %p80 = por %p78, %p79
    %p82 = scmp.ne.s32.totalorder %s67, %s81
    %p83 = scmp.eq.s32.totalorder %s15, 0
    %p84 = por %p82, %p83
    %s85 = ssub.s32 %s9, %s16
    %p86 = scmp.eq.s32.totalorder %s85, 0
    %s88 = sadd.s32 %s87, 1
    %s89 = scalar_select %p86, %s87, %s88
    %p92 = pneg %p86
    %p93 = scmp.eq.s32.totalorder %s9, 3
    %p94 = por %p92, %p93
    %p95 = scmp.ne.s32.totalorder %s87, %s90
    %p96 = scmp.eq.s32.totalorder %s9, 0
    %p97 = por %p95, %p96
    %p98 = scmp.ne.s32.totalorder %s87, %s90
    %p99 = scmp.eq.s32.totalorder %s14, 3
    %p100 = por %p98, %p99
    %p101 = scmp.ne.s32.totalorder %s90, %s91
    %p102 = scmp.eq.s32.totalorder %s14, 0
    %p103 = por %p101, %p102
    %p104 = scmp.ne.s32.totalorder %s90, %s91
    %p105 = scmp.eq.s32.totalorder %s15, 3
    %p106 = por %p104, %p105
    %p108 = scmp.ne.s32.totalorder %s91, %s107
    %p109 = scmp.eq.s32.totalorder %s15, 0
    %p110 = por %p108, %p109
    %p111 = scmp.le.s32.totalorder 1, %s9
    %p112 = scmp.lt.s32.totalorder %s9, 5
    %p113 = pnand %p111, %p112
    %p114 = pneg %p113
    // Predicated region
    $region9: #{dh_up_res_forward.3} parent=5 // pred_check
      _
    $region10: #{dh_up_res_forward.3} parent=5 // pred_check_branch
      %116 = sbr.rel (%p113) target = $region12
    $region11: #{dh_up_res_forward.3} parent=5 // pred_region
      %s117 = ssub.s32 %s9, 1
      // Predicated region
      $region13: #{dh_up_res_forward.3} parent=11 // pred_check
        %p118 = pneg %p56
      $region14: #{dh_up_res_forward.3} parent=11 // pred_check_branch
        %120 = sbr.rel (%p118) target = $region16
      $region15: #{dh_up_res_forward.3} parent=11 // pred_region
        _
      $region16: #{dh_up_res_forward.3} parent=11 // pred_fallthru
        _
      // Predicated region
      $region17: #{dh_up_res_forward.3} parent=11 // pred_check
        %p121 = pneg %p77
      $region18: #{dh_up_res_forward.3} parent=11 // pred_check_branch
        %123 = sbr.rel (%p121) target = $region20
      $region19: #{dh_up_res_forward.3} parent=11 // pred_region
        _
      $region20: #{dh_up_res_forward.3} parent=11 // pred_fallthru
        _
    $region12: #{dh_up_res_forward.3} parent=5 // pred_fallthru
      _
    %p124 = scmp.lt.s32.totalorder %s9, 4
    // Predicated region
    $region21: #{dh_up_res_forward.3} parent=5 // pred_check
      %p125 = pneg %p124
    $region22: #{dh_up_res_forward.3} parent=5 // pred_check_branch
      %127 = sbr.rel (%p125) target = $region24
    $region23: #{dh_up_res_forward.3} parent=5 // pred_region
      // Predicated region
      $region25: #{dh_up_res_forward.3} parent=23 // pred_check
        %p128 = pneg %p29
      $region26: #{dh_up_res_forward.3} parent=23 // pred_check_branch
        %130 = sbr.rel (%p128) target = $region28
      $region27: #{dh_up_res_forward.3} parent=23 // pred_region
        %s131 = smul.u32 64, %s9
        %p132 = scmp.lt.s32.totalorder %s131, 255
        %s133 = scalar_select %p132, %s131, 255
        %s134 = smul.addr %s133, 8
        %s135 = scalar_lea.vmem %s0, %s134
        %s136 = smul.u32 64, %s9
      $region28: #{dh_up_res_forward.3} parent=23 // pred_fallthru
        _
    $region24: #{dh_up_res_forward.3} parent=5 // pred_fallthru
      _
    %p137 = scmp.le.s32.totalorder 1, %s9
    %p138 = scmp.lt.s32.totalorder %s9, 5
    %p139 = pnand %p137, %p138
    %p140 = pneg %p139
    // Predicated region
    $region29: #{dh_up_res_forward.3} parent=5 // pred_check
      _
    $region30: #{dh_up_res_forward.3} parent=5 // pred_check_branch
      %142 = sbr.rel (%p139) target = $region32
    $region31: #{dh_up_res_forward.3} parent=5 // pred_region
      %s143 = ssub.s32 %s9, 1
      %s144 = smul.u32 64, %s14
      %p145 = scmp.lt.s32.totalorder %s144, 255
      %s146 = scalar_select %p145, %s144, 255
      %s147 = smul.addr %s146, 8
      %s148 = scalar_lea.vmem %s0, %s147
      %p149 = pneg %p35
      %p150 = pneg %p32
      %p151 = pneg %p56
      %p152 = pneg %p53
      %p153 = pneg %p77
      %p154 = pneg %p74
      %p155 = pneg %p103
      %p156 = pneg %p100
      %s157 = smul.u32 64, %s14
      %p158 = scmp.lt.s32.totalorder %s157, 255
      %s159 = scalar_select %p158, %s157, 255
      %s160 = smul.addr %s159, 8
      %s161 = scalar_lea.vmem %s3, %s160
      %s162 = smul.u32 64, %s14
      %p163 = scmp.lt.s32.totalorder %s162, 255
      %s164 = scalar_select %p163, %s162, 255
      %s165 = smul.addr %s164, 8
      %s166 = scalar_lea.vmem %s0, %s165
      %s167 = smul.u32 64, %s14
      %s168 = smul.u32 64, %s14
      %p169 = scmp.lt.s32.totalorder %s168, 255
      %s170 = scalar_select %p169, %s168, 255
      %s171 = smul.addr %s170, 8
      %s172 = scalar_lea.vmem %s3, %s171
      %s173 = smul.u32 64, %s14
      %v174 = vld [vmem:[%s166] sm:$0xff]
      %v175 = vld [vmem:[%s166 + $0x8] sm:$0xff]
      %v176 = vld [vmem:[%s166 + $0x10] sm:$0xff]
      %v177 = vld [vmem:[%s166 + $0x18] sm:$0xff]
      %v178 = vld [vmem:[%s166 + $0x20] sm:$0xff]
      %v179 = vld [vmem:[%s166 + $0x28] sm:$0xff]
      %v180 = vld [vmem:[%s166 + $0x30] sm:$0xff]
      %v181 = vld [vmem:[%s166 + $0x38] sm:$0xff]
      %v182 = vld [vmem:[%s166 + $0x40] sm:$0xff]
      %v183 = vld [vmem:[%s166 + $0x48] sm:$0xff]
      %v184 = vld [vmem:[%s166 + $0x50] sm:$0xff]
      %v185 = vld [vmem:[%s166 + $0x58] sm:$0xff]
      %v186 = vld [vmem:[%s166 + $0x60] sm:$0xff]
      %v187 = vld [vmem:[%s166 + $0x68] sm:$0xff]
      %v188 = vld [vmem:[%s166 + $0x70] sm:$0xff]
      %v189 = vld [vmem:[%s166 + $0x78] sm:$0xff]
      %v190 = vld [vmem:[%s166 + $0x80] sm:$0xff]
      %v191 = vld [vmem:[%s166 + $0x88] sm:$0xff]
      %v192 = vld [vmem:[%s166 + $0x90] sm:$0xff]
      %v193 = vld [vmem:[%s166 + $0x98] sm:$0xff]
      %v194 = vld [vmem:[%s166 + $0xa0] sm:$0xff]
      %v195 = vld [vmem:[%s166 + $0xa8] sm:$0xff]
      %v196 = vld [vmem:[%s166 + $0xb0] sm:$0xff]
      %v197 = vld [vmem:[%s166 + $0xb8] sm:$0xff]
      %v198 = vld [vmem:[%s166 + $0xc0] sm:$0xff]
      %v199 = vld [vmem:[%s166 + $0xc8] sm:$0xff]
      %v200 = vld [vmem:[%s166 + $0xd0] sm:$0xff]
      %v201 = vld [vmem:[%s166 + $0xd8] sm:$0xff]
      %v202 = vld [vmem:[%s166 + $0xe0] sm:$0xff]
      %v203 = vld [vmem:[%s166 + $0xe8] sm:$0xff]
      %v204 = vld [vmem:[%s166 + $0xf0] sm:$0xff]
      %v205 = vld [vmem:[%s166 + $0xf8] sm:$0xff]
      %v206 = vld [vmem:[%s166 + $0x100] sm:$0xff]
      %v207 = vld [vmem:[%s166 + $0x108] sm:$0xff]
      %v208 = vld [vmem:[%s166 + $0x110] sm:$0xff]
      %v209 = vld [vmem:[%s166 + $0x118] sm:$0xff]
      %v210 = vld [vmem:[%s166 + $0x120] sm:$0xff]
      %v211 = vld [vmem:[%s166 + $0x128] sm:$0xff]
      %v212 = vld [vmem:[%s166 + $0x130] sm:$0xff]
      %v213 = vld [vmem:[%s166 + $0x138] sm:$0xff]
      %v214 = vld [vmem:[%s166 + $0x140] sm:$0xff]
      %v215 = vld [vmem:[%s166 + $0x148] sm:$0xff]
      %v216 = vld [vmem:[%s166 + $0x150] sm:$0xff]
      %v217 = vld [vmem:[%s166 + $0x158] sm:$0xff]
      %v218 = vld [vmem:[%s166 + $0x160] sm:$0xff]
      %v219 = vld [vmem:[%s166 + $0x168] sm:$0xff]
      %v220 = vld [vmem:[%s166 + $0x170] sm:$0xff]
      %v221 = vld [vmem:[%s166 + $0x178] sm:$0xff]
      %v222 = vld [vmem:[%s166 + $0x180] sm:$0xff]
      %v223 = vld [vmem:[%s166 + $0x188] sm:$0xff]
      %v224 = vld [vmem:[%s166 + $0x190] sm:$0xff]
      %v225 = vld [vmem:[%s166 + $0x198] sm:$0xff]
      %v226 = vld [vmem:[%s166 + $0x1a0] sm:$0xff]
      %v227 = vld [vmem:[%s166 + $0x1a8] sm:$0xff]
      %v228 = vld [vmem:[%s166 + $0x1b0] sm:$0xff]
      %v229 = vld [vmem:[%s166 + $0x1b8] sm:$0xff]
      %v230 = vld [vmem:[%s166 + $0x1c0] sm:$0xff]
      %v231 = vld [vmem:[%s166 + $0x1c8] sm:$0xff]
      %v232 = vld [vmem:[%s166 + $0x1d0] sm:$0xff]
      %v233 = vld [vmem:[%s166 + $0x1d8] sm:$0xff]
      %v234 = vld [vmem:[%s166 + $0x1e0] sm:$0xff]
      %v235 = vld [vmem:[%s166 + $0x1e8] sm:$0xff]
      %v236 = vld [vmem:[%s166 + $0x1f0] sm:$0xff]
      %v237 = vld [vmem:[%s166 + $0x1f8] sm:$0xff]
      %v238 = vld [vmem:[%s1] sm:$0xff]
      %v239 = vld [vmem:[%s1 + $0x8] sm:$0xff]
      %v240 = vld [vmem:[%s2] sm:$0x1]
      %v242 = vlaneseq
      %v243 = vshrl.u32 %v242, 7
      %v244 = vsub.s32 0, %v243
      %v245 = vrot.slane %v240, %v244
      %vm247 = vcmask 130048
      %v249 = vsel %vm247, %v174, 0
      %v252 = vsel %vm247, %v175, 0
      %v255 = vsel %vm247, %v176, 0
      %v258 = vsel %vm247, %v177, 0
      %v261 = vsel %vm247, %v178, 0
      %v264 = vsel %vm247, %v179, 0
      %v267 = vsel %vm247, %v180, 0
      %v270 = vsel %vm247, %v181, 0
      %v273 = vsel %vm247, %v182, 0
      %v276 = vsel %vm247, %v183, 0
      %v279 = vsel %vm247, %v184, 0
      %v282 = vsel %vm247, %v185, 0
      %v285 = vsel %vm247, %v186, 0
      %v288 = vsel %vm247, %v187, 0
      %v291 = vsel %vm247, %v188, 0
      %v294 = vsel %vm247, %v189, 0
      %v297 = vsel %vm247, %v190, 0
      %v300 = vsel %vm247, %v191, 0
      %v303 = vsel %vm247, %v192, 0
      %v306 = vsel %vm247, %v193, 0
      %v309 = vsel %vm247, %v194, 0
      %v312 = vsel %vm247, %v195, 0
      %v315 = vsel %vm247, %v196, 0
      %v318 = vsel %vm247, %v197, 0
      %v321 = vsel %vm247, %v198, 0
      %v324 = vsel %vm247, %v199, 0
      %v327 = vsel %vm247, %v200, 0
      %v330 = vsel %vm247, %v201, 0
      %v333 = vsel %vm247, %v202, 0
      %v336 = vsel %vm247, %v203, 0
      %v339 = vsel %vm247, %v204, 0
      %v342 = vsel %vm247, %v205, 0
      %v345 = vsel %vm247, %v206, 0
      %v348 = vsel %vm247, %v207, 0
      %v351 = vsel %vm247, %v208, 0
      %v354 = vsel %vm247, %v209, 0
      %v357 = vsel %vm247, %v210, 0
      %v360 = vsel %vm247, %v211, 0
      %v363 = vsel %vm247, %v212, 0
      %v366 = vsel %vm247, %v213, 0
      %v369 = vsel %vm247, %v214, 0
      %v372 = vsel %vm247, %v215, 0
      %v375 = vsel %vm247, %v216, 0
      %v378 = vsel %vm247, %v217, 0
      %v381 = vsel %vm247, %v218, 0
      %v384 = vsel %vm247, %v219, 0
      %v387 = vsel %vm247, %v220, 0
      %v390 = vsel %vm247, %v221, 0
      %v393 = vsel %vm247, %v222, 0
      %v396 = vsel %vm247, %v223, 0
      %v399 = vsel %vm247, %v224, 0
      %v402 = vsel %vm247, %v225, 0
      %v405 = vsel %vm247, %v226, 0
      %v408 = vsel %vm247, %v227, 0
      %v411 = vsel %vm247, %v228, 0
      %v414 = vsel %vm247, %v229, 0
      %v417 = vsel %vm247, %v230, 0
      %v420 = vsel %vm247, %v231, 0
      %v423 = vsel %vm247, %v232, 0
      %v426 = vsel %vm247, %v233, 0
      %v429 = vsel %vm247, %v234, 0
      %v432 = vsel %vm247, %v235, 0
      %v435 = vsel %vm247, %v236, 0
      %v438 = vsel %vm247, %v237, 0
      %440 = vmatprep.subr.mxu0 0.0
      %441 = vmatpush1.msra.mxu0 0.0
      %442 = vmatprep.subr.mxu0 0.0
      %443 = vmatpush1.msra.mxu0 0.0
      %444 = vmatprep.subr.mxu0 0.0
      %445 = vmatpush1.msra.mxu0 0.0
      %446 = vmatprep.subr.mxu0 0.0
      %447 = vmatpush1.msra.mxu0 0.0
      %448 = vmatprep.subr.mxu0 0.0
      %449 = vmatpush1.msra.mxu0 0.0
      %450 = vmatprep.subr.mxu0 0.0
      %451 = vmatpush1.msra.mxu0 0.0
      %452 = vmatprep.subr.mxu0 0.0
      %453 = vmatpush1.msra.mxu0 0.0
      %454 = vmatprep.subr.mxu0 0.0
      %455 = vmatpush1.msra.mxu0 0.0
      %456 = vmatprep.subr.mxu0 0.0
      %457 = vmatpush1.msra.mxu0 0.0
      %458 = vmatprep.subr.mxu0 0.0
      %459 = vmatpush1.msra.mxu0 0.0
      %460 = vmatprep.subr.mxu0 0.0
      %461 = vmatpush1.msra.mxu0 0.0
      %462 = vmatprep.subr.mxu0 0.0
      %463 = vmatpush1.msra.mxu0 0.0
      %464 = vmatprep.subr.mxu0 0.0
      %465 = vmatpush1.msra.mxu0 0.0
      %466 = vmatprep.subr.mxu0 0.0
      %467 = vmatpush1.msra.mxu0 0.0
      %468 = vmatprep.subr.mxu0 0.0
      %469 = vmatpush1.msra.mxu0 %v239
      %470 = vmatprep.subr.mxu0 0.0
      %471 = vmatpush1.msra.mxu0 %v238
      %472 = vmatprep.subr.mxu0 0.0
      %473 = vmatpush2.msra.mxu0 0.0
      %474 = vmatprep.subr.mxu0 0.0
      %475 = vmatpush2.msra.mxu0 0.0
      %476 = vmatprep.subr.mxu0 0.0
      %477 = vmatpush2.msra.mxu0 0.0
      %478 = vmatprep.subr.mxu0 0.0
      %479 = vmatpush2.msra.mxu0 0.0
      %480 = vmatprep.subr.mxu0 0.0
      %481 = vmatpush2.msra.mxu0 0.0
      %482 = vmatprep.subr.mxu0 0.0
      %483 = vmatpush2.msra.mxu0 0.0
      %484 = vmatprep.subr.mxu0 0.0
      %485 = vmatpush2.msra.mxu0 0.0
      %486 = vmatprep.subr.mxu0 0.0
      %487 = vmatpush2.msra.mxu0 0.0
      %488 = vmatprep.subr.mxu0 0.0
      %489 = vmatpush2.msra.mxu0 0.0
      %490 = vmatprep.subr.mxu0 0.0
      %491 = vmatpush2.msra.mxu0 0.0
      %492 = vmatprep.subr.mxu0 0.0
      %493 = vmatpush2.msra.mxu0 0.0
      %494 = vmatprep.subr.mxu0 0.0
      %495 = vmatpush2.msra.mxu0 0.0
      %496 = vmatprep.subr.mxu0 0.0
      %497 = vmatpush2.msra.mxu0 0.0
      %498 = vmatprep.subr.mxu0 0.0
      %499 = vmatpush2.msra.mxu0 0.0
      %500 = vmatprep.subr.mxu0 0.0
      %501 = vmatpush2.msra.mxu0 0.0
      %502 = vmatprep.subr.mxu0 0.0
      %503 = vmatpush2.msra.mxu0 0.0
      %504 = vmatprep.mubr.f32.mxu0 0.0
      %505 = vmatmul.mubr.f32.gmra.mxu0 %v249
      %v506 = vpop.f32.mrf.mxu0
      %v507 = vadd.f32 %v245, %v506
      %v508 = vpop.f32.mrf.mxu0
      %509 = vmatprep.mubr.f32.mxu0 0.0
      %510 = vmatmul.mubr.f32.gmra.mxu0 %v252
      %v511 = vpop.f32.mrf.mxu0
      %v512 = vadd.f32 %v245, %v511
      %v513 = vpop.f32.mrf.mxu0
      %514 = vmatprep.mubr.f32.mxu0 0.0
      %515 = vmatmul.mubr.f32.gmra.mxu0 %v255
      %v516 = vpop.f32.mrf.mxu0
      %v517 = vadd.f32 %v245, %v516
      %v518 = vpop.f32.mrf.mxu0
      %519 = vmatprep.mubr.f32.mxu0 0.0
      %520 = vmatmul.mubr.f32.gmra.mxu0 %v258
      %v521 = vpop.f32.mrf.mxu0
      %v522 = vadd.f32 %v245, %v521
      %v523 = vpop.f32.mrf.mxu0
      %524 = vmatprep.mubr.f32.mxu0 0.0
      %525 = vmatmul.mubr.f32.gmra.mxu0 %v261
      %v526 = vpop.f32.mrf.mxu0
      %v527 = vadd.f32 %v245, %v526
      %v528 = vpop.f32.mrf.mxu0
      %529 = vmatprep.mubr.f32.mxu0 0.0
      %530 = vmatmul.mubr.f32.gmra.mxu0 %v264
      %v531 = vpop.f32.mrf.mxu0
      %v532 = vadd.f32 %v245, %v531
      %v533 = vpop.f32.mrf.mxu0
      %534 = vmatprep.mubr.f32.mxu0 0.0
      %535 = vmatmul.mubr.f32.gmra.mxu0 %v267
      %v536 = vpop.f32.mrf.mxu0
      %v537 = vadd.f32 %v245, %v536
      %v538 = vpop.f32.mrf.mxu0
      %539 = vmatprep.mubr.f32.mxu0 0.0
      %540 = vmatmul.mubr.f32.gmra.mxu0 %v270
      %v541 = vpop.f32.mrf.mxu0
      %v542 = vadd.f32 %v245, %v541
      %v543 = vpop.f32.mrf.mxu0
      %544 = vmatprep.mubr.f32.mxu0 0.0
      %545 = vmatmul.mubr.f32.gmra.mxu0 %v273
      %v546 = vpop.f32.mrf.mxu0
      %v547 = vadd.f32 %v245, %v546
      %v548 = vpop.f32.mrf.mxu0
      %549 = vmatprep.mubr.f32.mxu0 0.0
      %550 = vmatmul.mubr.f32.gmra.mxu0 %v276
      %v551 = vpop.f32.mrf.mxu0
      %v552 = vadd.f32 %v245, %v551
      %v553 = vpop.f32.mrf.mxu0
      %554 = vmatprep.mubr.f32.mxu0 0.0
      %555 = vmatmul.mubr.f32.gmra.mxu0 %v279
      %v556 = vpop.f32.mrf.mxu0
      %v557 = vadd.f32 %v245, %v556
      %v558 = vpop.f32.mrf.mxu0
      %559 = vmatprep.mubr.f32.mxu0 0.0
      %560 = vmatmul.mubr.f32.gmra.mxu0 %v282
      %v561 = vpop.f32.mrf.mxu0
      %v562 = vadd.f32 %v245, %v561
      %v563 = vpop.f32.mrf.mxu0
      %564 = vmatprep.mubr.f32.mxu0 0.0
      %565 = vmatmul.mubr.f32.gmra.mxu0 %v285
      %v566 = vpop.f32.mrf.mxu0
      %v567 = vadd.f32 %v245, %v566
      %v568 = vpop.f32.mrf.mxu0
      %569 = vmatprep.mubr.f32.mxu0 0.0
      %570 = vmatmul.mubr.f32.gmra.mxu0 %v288
      %v571 = vpop.f32.mrf.mxu0
      %v572 = vadd.f32 %v245, %v571
      %v573 = vpop.f32.mrf.mxu0
      %574 = vmatprep.mubr.f32.mxu0 0.0
      %575 = vmatmul.mubr.f32.gmra.mxu0 %v291
      %v576 = vpop.f32.mrf.mxu0
      %v577 = vadd.f32 %v245, %v576
      %v578 = vpop.f32.mrf.mxu0
      %579 = vmatprep.mubr.f32.mxu0 0.0
      %580 = vmatmul.mubr.f32.gmra.mxu0 %v294
      %v581 = vpop.f32.mrf.mxu0
      %v582 = vadd.f32 %v245, %v581
      %v583 = vpop.f32.mrf.mxu0
      %584 = vmatprep.mubr.f32.mxu0 0.0
      %585 = vmatmul.mubr.f32.gmra.mxu0 %v297
      %v586 = vpop.f32.mrf.mxu0
      %v587 = vadd.f32 %v245, %v586
      %v588 = vpop.f32.mrf.mxu0
      %589 = vmatprep.mubr.f32.mxu0 0.0
      %590 = vmatmul.mubr.f32.gmra.mxu0 %v300
      %v591 = vpop.f32.mrf.mxu0
      %v592 = vadd.f32 %v245, %v591
      %v593 = vpop.f32.mrf.mxu0
      %594 = vmatprep.mubr.f32.mxu0 0.0
      %595 = vmatmul.mubr.f32.gmra.mxu0 %v303
      %v596 = vpop.f32.mrf.mxu0
      %v597 = vadd.f32 %v245, %v596
      %v598 = vpop.f32.mrf.mxu0
      %599 = vmatprep.mubr.f32.mxu0 0.0
      %600 = vmatmul.mubr.f32.gmra.mxu0 %v306
      %v601 = vpop.f32.mrf.mxu0
      %v602 = vadd.f32 %v245, %v601
      %v603 = vpop.f32.mrf.mxu0
      %604 = vmatprep.mubr.f32.mxu0 0.0
      %605 = vmatmul.mubr.f32.gmra.mxu0 %v309
      %v606 = vpop.f32.mrf.mxu0
      %v607 = vadd.f32 %v245, %v606
      %v608 = vpop.f32.mrf.mxu0
      %609 = vmatprep.mubr.f32.mxu0 0.0
      %610 = vmatmul.mubr.f32.gmra.mxu0 %v312
      %v611 = vpop.f32.mrf.mxu0
      %v612 = vadd.f32 %v245, %v611
      %v613 = vpop.f32.mrf.mxu0
      %614 = vmatprep.mubr.f32.mxu0 0.0
      %615 = vmatmul.mubr.f32.gmra.mxu0 %v315
      %v616 = vpop.f32.mrf.mxu0
      %v617 = vadd.f32 %v245, %v616
      %v618 = vpop.f32.mrf.mxu0
      %619 = vmatprep.mubr.f32.mxu0 0.0
      %620 = vmatmul.mubr.f32.gmra.mxu0 %v318
      %v621 = vpop.f32.mrf.mxu0
      %v622 = vadd.f32 %v245, %v621
      %v623 = vpop.f32.mrf.mxu0
      %624 = vmatprep.mubr.f32.mxu0 0.0
      %625 = vmatmul.mubr.f32.gmra.mxu0 %v321
      %v626 = vpop.f32.mrf.mxu0
      %v627 = vadd.f32 %v245, %v626
      %v628 = vpop.f32.mrf.mxu0
      %629 = vmatprep.mubr.f32.mxu0 0.0
      %630 = vmatmul.mubr.f32.gmra.mxu0 %v324
      %v631 = vpop.f32.mrf.mxu0
      %v632 = vadd.f32 %v245, %v631
      %v633 = vpop.f32.mrf.mxu0
      %634 = vmatprep.mubr.f32.mxu0 0.0
      %635 = vmatmul.mubr.f32.gmra.mxu0 %v327
      %v636 = vpop.f32.mrf.mxu0
      %v637 = vadd.f32 %v245, %v636
      %v638 = vpop.f32.mrf.mxu0
      %639 = vmatprep.mubr.f32.mxu0 0.0
      %640 = vmatmul.mubr.f32.gmra.mxu0 %v330
      %v641 = vpop.f32.mrf.mxu0
      %v642 = vadd.f32 %v245, %v641
      %v643 = vpop.f32.mrf.mxu0
      %644 = vmatprep.mubr.f32.mxu0 0.0
      %645 = vmatmul.mubr.f32.gmra.mxu0 %v333
      %v646 = vpop.f32.mrf.mxu0
      %v647 = vadd.f32 %v245, %v646
      %v648 = vpop.f32.mrf.mxu0
      %649 = vmatprep.mubr.f32.mxu0 0.0
      %650 = vmatmul.mubr.f32.gmra.mxu0 %v336
      %v651 = vpop.f32.mrf.mxu0
      %v652 = vadd.f32 %v245, %v651
      %v653 = vpop.f32.mrf.mxu0
      %654 = vmatprep.mubr.f32.mxu0 0.0
      %655 = vmatmul.mubr.f32.gmra.mxu0 %v339
      %v656 = vpop.f32.mrf.mxu0
      %v657 = vadd.f32 %v245, %v656
      %v658 = vpop.f32.mrf.mxu0
      %659 = vmatprep.mubr.f32.mxu0 0.0
      %660 = vmatmul.mubr.f32.gmra.mxu0 %v342
      %v661 = vpop.f32.mrf.mxu0
      %v662 = vadd.f32 %v245, %v661
      %v663 = vpop.f32.mrf.mxu0
      %664 = vmatprep.mubr.f32.mxu0 0.0
      %665 = vmatmul.mubr.f32.gmra.mxu0 %v345
      %v666 = vpop.f32.mrf.mxu0
      %v667 = vadd.f32 %v245, %v666
      %v668 = vpop.f32.mrf.mxu0
      %669 = vmatprep.mubr.f32.mxu0 0.0
      %670 = vmatmul.mubr.f32.gmra.mxu0 %v348
      %v671 = vpop.f32.mrf.mxu0
      %v672 = vadd.f32 %v245, %v671
      %v673 = vpop.f32.mrf.mxu0
      %674 = vmatprep.mubr.f32.mxu0 0.0
      %675 = vmatmul.mubr.f32.gmra.mxu0 %v351
      %v676 = vpop.f32.mrf.mxu0
      %v677 = vadd.f32 %v245, %v676
      %v678 = vpop.f32.mrf.mxu0
      %679 = vmatprep.mubr.f32.mxu0 0.0
      %680 = vmatmul.mubr.f32.gmra.mxu0 %v354
      %v681 = vpop.f32.mrf.mxu0
      %v682 = vadd.f32 %v245, %v681
      %v683 = vpop.f32.mrf.mxu0
      %684 = vmatprep.mubr.f32.mxu0 0.0
      %685 = vmatmul.mubr.f32.gmra.mxu0 %v357
      %v686 = vpop.f32.mrf.mxu0
      %v687 = vadd.f32 %v245, %v686
      %v688 = vpop.f32.mrf.mxu0
      %689 = vmatprep.mubr.f32.mxu0 0.0
      %690 = vmatmul.mubr.f32.gmra.mxu0 %v360
      %v691 = vpop.f32.mrf.mxu0
      %v692 = vadd.f32 %v245, %v691
      %v693 = vpop.f32.mrf.mxu0
      %694 = vmatprep.mubr.f32.mxu0 0.0
      %695 = vmatmul.mubr.f32.gmra.mxu0 %v363
      %v696 = vpop.f32.mrf.mxu0
      %v697 = vadd.f32 %v245, %v696
      %v698 = vpop.f32.mrf.mxu0
      %699 = vmatprep.mubr.f32.mxu0 0.0
      %700 = vmatmul.mubr.f32.gmra.mxu0 %v366
      %v701 = vpop.f32.mrf.mxu0
      %v702 = vadd.f32 %v245, %v701
      %v703 = vpop.f32.mrf.mxu0
      %704 = vmatprep.mubr.f32.mxu0 0.0
      %705 = vmatmul.mubr.f32.gmra.mxu0 %v369
      %v706 = vpop.f32.mrf.mxu0
      %v707 = vadd.f32 %v245, %v706
      %v708 = vpop.f32.mrf.mxu0
      %709 = vmatprep.mubr.f32.mxu0 0.0
      %710 = vmatmul.mubr.f32.gmra.mxu0 %v372
      %v711 = vpop.f32.mrf.mxu0
      %v712 = vadd.f32 %v245, %v711
      %v713 = vpop.f32.mrf.mxu0
      %714 = vmatprep.mubr.f32.mxu0 0.0
      %715 = vmatmul.mubr.f32.gmra.mxu0 %v375
      %v716 = vpop.f32.mrf.mxu0
      %v717 = vadd.f32 %v245, %v716
      %v718 = vpop.f32.mrf.mxu0
      %719 = vmatprep.mubr.f32.mxu0 0.0
      %720 = vmatmul.mubr.f32.gmra.mxu0 %v378
      %v721 = vpop.f32.mrf.mxu0
      %v722 = vadd.f32 %v245, %v721
      %v723 = vpop.f32.mrf.mxu0
      %724 = vmatprep.mubr.f32.mxu0 0.0
      %725 = vmatmul.mubr.f32.gmra.mxu0 %v381
      %v726 = vpop.f32.mrf.mxu0
      %v727 = vadd.f32 %v245, %v726
      %v728 = vpop.f32.mrf.mxu0
      %729 = vmatprep.mubr.f32.mxu0 0.0
      %730 = vmatmul.mubr.f32.gmra.mxu0 %v384
      %v731 = vpop.f32.mrf.mxu0
      %v732 = vadd.f32 %v245, %v731
      %v733 = vpop.f32.mrf.mxu0
      %734 = vmatprep.mubr.f32.mxu0 0.0
      %735 = vmatmul.mubr.f32.gmra.mxu0 %v387
      %v736 = vpop.f32.mrf.mxu0
      %v737 = vadd.f32 %v245, %v736
      %v738 = vpop.f32.mrf.mxu0
      %739 = vmatprep.mubr.f32.mxu0 0.0
      %740 = vmatmul.mubr.f32.gmra.mxu0 %v390
      %v741 = vpop.f32.mrf.mxu0
      %v742 = vadd.f32 %v245, %v741
      %v743 = vpop.f32.mrf.mxu0
      %744 = vmatprep.mubr.f32.mxu0 0.0
      %745 = vmatmul.mubr.f32.gmra.mxu0 %v393
      %v746 = vpop.f32.mrf.mxu0
      %v747 = vadd.f32 %v245, %v746
      %v748 = vpop.f32.mrf.mxu0
      %749 = vmatprep.mubr.f32.mxu0 0.0
      %750 = vmatmul.mubr.f32.gmra.mxu0 %v396
      %v751 = vpop.f32.mrf.mxu0
      %v752 = vadd.f32 %v245, %v751
      %v753 = vpop.f32.mrf.mxu0
      %754 = vmatprep.mubr.f32.mxu0 0.0
      %755 = vmatmul.mubr.f32.gmra.mxu0 %v399
      %v756 = vpop.f32.mrf.mxu0
      %v757 = vadd.f32 %v245, %v756
      %v758 = vpop.f32.mrf.mxu0
      %759 = vmatprep.mubr.f32.mxu0 0.0
      %760 = vmatmul.mubr.f32.gmra.mxu0 %v402
      %v761 = vpop.f32.mrf.mxu0
      %v762 = vadd.f32 %v245, %v761
      %v763 = vpop.f32.mrf.mxu0
      %764 = vmatprep.mubr.f32.mxu0 0.0
      %765 = vmatmul.mubr.f32.gmra.mxu0 %v405
      %v766 = vpop.f32.mrf.mxu0
      %v767 = vadd.f32 %v245, %v766
      %v768 = vpop.f32.mrf.mxu0
      %769 = vmatprep.mubr.f32.mxu0 0.0
      %770 = vmatmul.mubr.f32.gmra.mxu0 %v408
      %v771 = vpop.f32.mrf.mxu0
      %v772 = vadd.f32 %v245, %v771
      %v773 = vpop.f32.mrf.mxu0
      %774 = vmatprep.mubr.f32.mxu0 0.0
      %775 = vmatmul.mubr.f32.gmra.mxu0 %v411
      %v776 = vpop.f32.mrf.mxu0
      %v777 = vadd.f32 %v245, %v776
      %v778 = vpop.f32.mrf.mxu0
      %779 = vmatprep.mubr.f32.mxu0 0.0
      %780 = vmatmul.mubr.f32.gmra.mxu0 %v414
      %v781 = vpop.f32.mrf.mxu0
      %v782 = vadd.f32 %v245, %v781
      %v783 = vpop.f32.mrf.mxu0
      %784 = vmatprep.mubr.f32.mxu0 0.0
      %785 = vmatmul.mubr.f32.gmra.mxu0 %v417
      %v786 = vpop.f32.mrf.mxu0
      %v787 = vadd.f32 %v245, %v786
      %v788 = vpop.f32.mrf.mxu0
      %789 = vmatprep.mubr.f32.mxu0 0.0
      %790 = vmatmul.mubr.f32.gmra.mxu0 %v420
      %v791 = vpop.f32.mrf.mxu0
      %v792 = vadd.f32 %v245, %v791
      %v793 = vpop.f32.mrf.mxu0
      %794 = vmatprep.mubr.f32.mxu0 0.0
      %795 = vmatmul.mubr.f32.gmra.mxu0 %v423
      %v796 = vpop.f32.mrf.mxu0
      %v797 = vadd.f32 %v245, %v796
      %v798 = vpop.f32.mrf.mxu0
      %799 = vmatprep.mubr.f32.mxu0 0.0
      %800 = vmatmul.mubr.f32.gmra.mxu0 %v426
      %v801 = vpop.f32.mrf.mxu0
      %v802 = vadd.f32 %v245, %v801
      %v803 = vpop.f32.mrf.mxu0
      %804 = vmatprep.mubr.f32.mxu0 0.0
      %805 = vmatmul.mubr.f32.gmra.mxu0 %v429
      %v806 = vpop.f32.mrf.mxu0
      %v807 = vadd.f32 %v245, %v806
      %v808 = vpop.f32.mrf.mxu0
      %809 = vmatprep.mubr.f32.mxu0 0.0
      %810 = vmatmul.mubr.f32.gmra.mxu0 %v432
      %v811 = vpop.f32.mrf.mxu0
      %v812 = vadd.f32 %v245, %v811
      %v813 = vpop.f32.mrf.mxu0
      %814 = vmatprep.mubr.f32.mxu0 0.0
      %815 = vmatmul.mubr.f32.gmra.mxu0 %v435
      %v816 = vpop.f32.mrf.mxu0
      %v817 = vadd.f32 %v245, %v816
      %v818 = vpop.f32.mrf.mxu0
      %819 = vmatprep.mubr.f32.mxu0 0.0
      %820 = vmatmul.mubr.f32.gmra.mxu0 %v438
      %v821 = vpop.f32.mrf.mxu0
      %v822 = vadd.f32 %v245, %v821
      %v823 = vpop.f32.mrf.mxu0
      %824 = vdwg.mxu0
      %v825 = vmul.f32 %v507, 0.2
      %v826 = vmul.f32 %v512, 0.2
      %v827 = vmul.f32 %v517, 0.2
      %v828 = vmul.f32 %v522, 0.2
      %v829 = vmul.f32 %v527, 0.2
      %v830 = vmul.f32 %v532, 0.2
      %v831 = vmul.f32 %v537, 0.2
      %v832 = vmul.f32 %v542, 0.2
      %v833 = vmul.f32 %v547, 0.2
      %v834 = vmul.f32 %v552, 0.2
      %v835 = vmul.f32 %v557, 0.2
      %v836 = vmul.f32 %v562, 0.2
      %v837 = vmul.f32 %v567, 0.2
      %v838 = vmul.f32 %v572, 0.2
      %v839 = vmul.f32 %v577, 0.2
      %v840 = vmul.f32 %v582, 0.2
      %v841 = vmul.f32 %v587, 0.2
      %v842 = vmul.f32 %v592, 0.2
      %v843 = vmul.f32 %v597, 0.2
      %v844 = vmul.f32 %v602, 0.2
      %v845 = vmul.f32 %v607, 0.2
      %v846 = vmul.f32 %v612, 0.2
      %v847 = vmul.f32 %v617, 0.2
      %v848 = vmul.f32 %v622, 0.2
      %v849 = vmul.f32 %v627, 0.2
      %v850 = vmul.f32 %v632, 0.2
      %v851 = vmul.f32 %v637, 0.2
      %v852 = vmul.f32 %v642, 0.2
      %v853 = vmul.f32 %v647, 0.2
      %v854 = vmul.f32 %v652, 0.2
      %v855 = vmul.f32 %v657, 0.2
      %v856 = vmul.f32 %v662, 0.2
      %v857 = vmul.f32 %v667, 0.2
      %v858 = vmul.f32 %v672, 0.2
      %v859 = vmul.f32 %v677, 0.2
      %v860 = vmul.f32 %v682, 0.2
      %v861 = vmul.f32 %v687, 0.2
      %v862 = vmul.f32 %v692, 0.2
      %v863 = vmul.f32 %v697, 0.2
      %v864 = vmul.f32 %v702, 0.2
      %v865 = vmul.f32 %v707, 0.2
      %v866 = vmul.f32 %v712, 0.2
      %v867 = vmul.f32 %v717, 0.2
      %v868 = vmul.f32 %v722, 0.2
      %v869 = vmul.f32 %v727, 0.2
      %v870 = vmul.f32 %v732, 0.2
      %v871 = vmul.f32 %v737, 0.2
      %v872 = vmul.f32 %v742, 0.2
      %v873 = vmul.f32 %v747, 0.2
      %v874 = vmul.f32 %v752, 0.2
      %v875 = vmul.f32 %v757, 0.2
      %v876 = vmul.f32 %v762, 0.2
      %v877 = vmul.f32 %v767, 0.2
      %v878 = vmul.f32 %v772, 0.2
      %v879 = vmul.f32 %v777, 0.2
      %v880 = vmul.f32 %v782, 0.2
      %v881 = vmul.f32 %v787, 0.2
      %v882 = vmul.f32 %v792, 0.2
      %v883 = vmul.f32 %v797, 0.2
      %v884 = vmul.f32 %v802, 0.2
      %v885 = vmul.f32 %v807, 0.2
      %v886 = vmul.f32 %v812, 0.2
      %v887 = vmul.f32 %v817, 0.2
      %v888 = vmul.f32 %v822, 0.2
      %v889 = vmax.f32 %v507, %v825
      %v890 = vmax.f32 %v512, %v826
      %v891 = vmax.f32 %v517, %v827
      %v892 = vmax.f32 %v522, %v828
      %v893 = vmax.f32 %v527, %v829
      %v894 = vmax.f32 %v532, %v830
      %v895 = vmax.f32 %v537, %v831
      %v896 = vmax.f32 %v542, %v832
      %v897 = vmax.f32 %v547, %v833
      %v898 = vmax.f32 %v552, %v834
      %v899 = vmax.f32 %v557, %v835
      %v900 = vmax.f32 %v562, %v836
      %v901 = vmax.f32 %v567, %v837
      %v902 = vmax.f32 %v572, %v838
      %v903 = vmax.f32 %v577, %v839
      %v904 = vmax.f32 %v582, %v840
      %v905 = vmax.f32 %v587, %v841
      %v906 = vmax.f32 %v592, %v842
      %v907 = vmax.f32 %v597, %v843
      %v908 = vmax.f32 %v602, %v844
      %v909 = vmax.f32 %v607, %v845
      %v910 = vmax.f32 %v612, %v846
      %v911 = vmax.f32 %v617, %v847
      %v912 = vmax.f32 %v622, %v848
      %v913 = vmax.f32 %v627, %v849
      %v914 = vmax.f32 %v632, %v850
      %v915 = vmax.f32 %v637, %v851
      %v916 = vmax.f32 %v642, %v852
      %v917 = vmax.f32 %v647, %v853
      %v918 = vmax.f32 %v652, %v854
      %v919 = vmax.f32 %v657, %v855
      %v920 = vmax.f32 %v662, %v856
      %v921 = vmax.f32 %v667, %v857
      %v922 = vmax.f32 %v672, %v858
      %v923 = vmax.f32 %v677, %v859
      %v924 = vmax.f32 %v682, %v860
      %v925 = vmax.f32 %v687, %v861
      %v926 = vmax.f32 %v692, %v862
      %v927 = vmax.f32 %v697, %v863
      %v928 = vmax.f32 %v702, %v864
      %v929 = vmax.f32 %v707, %v865
      %v930 = vmax.f32 %v712, %v866
      %v931 = vmax.f32 %v717, %v867
      %v932 = vmax.f32 %v722, %v868
      %v933 = vmax.f32 %v727, %v869
      %v934 = vmax.f32 %v732, %v870
      %v935 = vmax.f32 %v737, %v871
      %v936 = vmax.f32 %v742, %v872
      %v937 = vmax.f32 %v747, %v873
      %v938 = vmax.f32 %v752, %v874
      %v939 = vmax.f32 %v757, %v875
      %v940 = vmax.f32 %v762, %v876
      %v941 = vmax.f32 %v767, %v877
      %v942 = vmax.f32 %v772, %v878
      %v943 = vmax.f32 %v777, %v879
      %v944 = vmax.f32 %v782, %v880
      %v945 = vmax.f32 %v787, %v881
      %v946 = vmax.f32 %v792, %v882
      %v947 = vmax.f32 %v797, %v883
      %v948 = vmax.f32 %v802, %v884
      %v949 = vmax.f32 %v807, %v885
      %v950 = vmax.f32 %v812, %v886
      %v951 = vmax.f32 %v817, %v887
      %v952 = vmax.f32 %v822, %v888
      %953 = vst [vmem:[%s172] sm:$0xff] %v889
      %954 = vst [vmem:[%s172 + $0x8] sm:$0xff] %v890
      %955 = vst [vmem:[%s172 + $0x10] sm:$0xff] %v891
      %956 = vst [vmem:[%s172 + $0x18] sm:$0xff] %v892
      %957 = vst [vmem:[%s172 + $0x20] sm:$0xff] %v893
      %958 = vst [vmem:[%s172 + $0x28] sm:$0xff] %v894
      %959 = vst [vmem:[%s172 + $0x30] sm:$0xff] %v895
      %960 = vst [vmem:[%s172 + $0x38] sm:$0xff] %v896
      %961 = vst [vmem:[%s172 + $0x40] sm:$0xff] %v897
      %962 = vst [vmem:[%s172 + $0x48] sm:$0xff] %v898
      %963 = vst [vmem:[%s172 + $0x50] sm:$0xff] %v899
      %964 = vst [vmem:[%s172 + $0x58] sm:$0xff] %v900
      %965 = vst [vmem:[%s172 + $0x60] sm:$0xff] %v901
      %966 = vst [vmem:[%s172 + $0x68] sm:$0xff] %v902
      %967 = vst [vmem:[%s172 + $0x70] sm:$0xff] %v903
      %968 = vst [vmem:[%s172 + $0x78] sm:$0xff] %v904
      %969 = vst [vmem:[%s172 + $0x80] sm:$0xff] %v905
      %970 = vst [vmem:[%s172 + $0x88] sm:$0xff] %v906
      %971 = vst [vmem:[%s172 + $0x90] sm:$0xff] %v907
      %972 = vst [vmem:[%s172 + $0x98] sm:$0xff] %v908
      %973 = vst [vmem:[%s172 + $0xa0] sm:$0xff] %v909
      %974 = vst [vmem:[%s172 + $0xa8] sm:$0xff] %v910
      %975 = vst [vmem:[%s172 + $0xb0] sm:$0xff] %v911
      %976 = vst [vmem:[%s172 + $0xb8] sm:$0xff] %v912
      %977 = vst [vmem:[%s172 + $0xc0] sm:$0xff] %v913
      %978 = vst [vmem:[%s172 + $0xc8] sm:$0xff] %v914
      %979 = vst [vmem:[%s172 + $0xd0] sm:$0xff] %v915
      %980 = vst [vmem:[%s172 + $0xd8] sm:$0xff] %v916
      %981 = vst [vmem:[%s172 + $0xe0] sm:$0xff] %v917
      %982 = vst [vmem:[%s172 + $0xe8] sm:$0xff] %v918
      %983 = vst [vmem:[%s172 + $0xf0] sm:$0xff] %v919
      %984 = vst [vmem:[%s172 + $0xf8] sm:$0xff] %v920
      %985 = vst [vmem:[%s172 + $0x100] sm:$0xff] %v921
      %986 = vst [vmem:[%s172 + $0x108] sm:$0xff] %v922
      %987 = vst [vmem:[%s172 + $0x110] sm:$0xff] %v923
      %988 = vst [vmem:[%s172 + $0x118] sm:$0xff] %v924
      %989 = vst [vmem:[%s172 + $0x120] sm:$0xff] %v925
      %990 = vst [vmem:[%s172 + $0x128] sm:$0xff] %v926
      %991 = vst [vmem:[%s172 + $0x130] sm:$0xff] %v927
      %992 = vst [vmem:[%s172 + $0x138] sm:$0xff] %v928
      %993 = vst [vmem:[%s172 + $0x140] sm:$0xff] %v929
      %994 = vst [vmem:[%s172 + $0x148] sm:$0xff] %v930
      %995 = vst [vmem:[%s172 + $0x150] sm:$0xff] %v931
      %996 = vst [vmem:[%s172 + $0x158] sm:$0xff] %v932
      %997 = vst [vmem:[%s172 + $0x160] sm:$0xff] %v933
      %998 = vst [vmem:[%s172 + $0x168] sm:$0xff] %v934
      %999 = vst [vmem:[%s172 + $0x170] sm:$0xff] %v935
      %1000 = vst [vmem:[%s172 + $0x178] sm:$0xff] %v936
      %1001 = vst [vmem:[%s172 + $0x180] sm:$0xff] %v937
      %1002 = vst [vmem:[%s172 + $0x188] sm:$0xff] %v938
      %1003 = vst [vmem:[%s172 + $0x190] sm:$0xff] %v939
      %1004 = vst [vmem:[%s172 + $0x198] sm:$0xff] %v940
      %1005 = vst [vmem:[%s172 + $0x1a0] sm:$0xff] %v941
      %1006 = vst [vmem:[%s172 + $0x1a8] sm:$0xff] %v942
      %1007 = vst [vmem:[%s172 + $0x1b0] sm:$0xff] %v943
      %1008 = vst [vmem:[%s172 + $0x1b8] sm:$0xff] %v944
      %1009 = vst [vmem:[%s172 + $0x1c0] sm:$0xff] %v945
      %1010 = vst [vmem:[%s172 + $0x1c8] sm:$0xff] %v946
      %1011 = vst [vmem:[%s172 + $0x1d0] sm:$0xff] %v947
      %1012 = vst [vmem:[%s172 + $0x1d8] sm:$0xff] %v948
      %1013 = vst [vmem:[%s172 + $0x1e0] sm:$0xff] %v949
      %1014 = vst [vmem:[%s172 + $0x1e8] sm:$0xff] %v950
      %1015 = vst [vmem:[%s172 + $0x1f0] sm:$0xff] %v951
      %1016 = vst [vmem:[%s172 + $0x1f8] sm:$0xff] %v952
      %s1017 = smul.u32 64, %s14
      %p1018 = scmp.lt.s32.totalorder %s1017, 255
      %s1019 = scalar_select %p1018, %s1017, 255
      %s1020 = smul.addr %s1019, 8
      %s1021 = scalar_lea.vmem %s3, %s1020
      // Predicated region
      $region33: #{dh_up_res_forward.3} parent=31 // pred_check
        %p1022 = pneg %p100
      $region34: #{dh_up_res_forward.3} parent=31 // pred_check_branch
        %1024 = sbr.rel (%p1022) target = $region36
      $region35: #{dh_up_res_forward.3} parent=31 // pred_region
        %s1025 = smul.u32 64, %s14
      $region36: #{dh_up_res_forward.3} parent=31 // pred_fallthru
        _
    $region32: #{dh_up_res_forward.3} parent=5 // pred_fallthru
      _
    %p1026 = scmp.le.s32.totalorder 2, %s9
    // Predicated region
    $region37: #{dh_up_res_forward.3} parent=5 // pred_check
      %p1027 = pneg %p1026
    $region38: #{dh_up_res_forward.3} parent=5 // pred_check_branch
      %1029 = sbr.rel (%p1027) target = $region40
    $region39: #{dh_up_res_forward.3} parent=5 // pred_region
      %s1030 = ssub.s32 %s9, 2
      // Predicated region
      $region41: #{dh_up_res_forward.3} parent=39 // pred_check
        %p1031 = pneg %p106
      $region42: #{dh_up_res_forward.3} parent=39 // pred_check_branch
        %1033 = sbr.rel (%p1031) target = $region44
      $region43: #{dh_up_res_forward.3} parent=39 // pred_region
        %s1034 = smul.u32 64, %s15
        %p1035 = scmp.lt.s32.totalorder %s1034, 255
        %s1036 = scalar_select %p1035, %s1034, 255
        %s1037 = smul.addr %s1036, 8
        %s1038 = scalar_lea.vmem %s3, %s1037
      $region44: #{dh_up_res_forward.3} parent=39 // pred_fallthru
        _
    $region40: #{dh_up_res_forward.3} parent=5 // pred_fallthru
      _
  $region6: #{dh_up_res_forward.3} parent=0 // loop_footer
    %s13 = sadd.s32 1, %s9
  $region7: #{dh_up_res_forward.3} parent=0 // loop_footer_branch
    %8 = sbr.rel target = $region3
  $region8: #{dh_up_res_forward.3} parent=0 // loop_exit
    _

// kernel: dh_up_res_forward.4
$region0: #{dh_up_res_forward.4}
  #allocation0 [shape = 'u32[]', space=smem, size = 0x4, offset = 0x4, fixed_abs, tag = 'smem constant byte address 0x4 - core index']
  #allocation1 [shape = 'u32[144,128]{1,0:T(1,128)}', space=vmem, size = 0x12000, scoped, tag = 'internal scratch']
  %s0 = inlined_call_operand.vmem [shape: f32[2,34,34,136], index: 0, kind: input, shape index: {}]
  %s1 = inlined_call_operand.vmem [shape: f32[9,136,128], index: 1, kind: input, shape index: {}]
  %s2 = inlined_call_operand.vmem [shape: f32[1,128], index: 2, kind: input, shape index: {}]
  %s3 = inlined_call_operand.vmem [shape: f32[2,32,32,128], index: 3, kind: output, shape index: {}]
  %s4 = sld [smem:[#allocation0]]
  $region52: #{dh_up_res_forward.4} parent=0
    _
  %s6 = ssub.s32 1, %s4
  %s7 = scalar_select 0, %s6, %s4
  loop: start=0, step=1, limit=4
  $region2: #{dh_up_res_forward.4} parent=0 // loop_pre_header
    _
  $region3: #{dh_up_res_forward.4} parent=0 // loop_header
    %s9 = sphi 0, %s13
    %p10 = scmp.ge.s32.totalorder %s9, 4
    %s19 = sphi 0, %s21
    %s22 = sphi 0, %s19
    %s23 = sphi 0, %s22
    %s39 = sphi 0, %s23
    %s43 = sphi 0, %s43
    %s45 = sphi 0, %s43
    %s46 = sphi 0, %s45
    %s60 = sphi 0, %s46
    %s64 = sphi 0, %s64
    %s66 = sphi 0, %s64
    %s67 = sphi 0, %s66
    %s81 = sphi 0, %s67
    %s87 = sphi 0, %s89
    %s90 = sphi 0, %s87
    %s91 = sphi 0, %s90
    %s107 = sphi 0, %s91
  $region4: #{dh_up_res_forward.4} parent=0 // loop_header_branch
    %12 = sbr.rel (%p10) target = $region8
  $region5: #{dh_up_res_forward.4} parent=0 // loop_body
    %s14 = ssub.s32 %s9, 1
    %s15 = ssub.s32 %s9, 2
    %s16 = sadd.s32 %s9, 1
    %s17 = ssub.s32 %s9, %s16
    %p18 = scmp.eq.s32.totalorder %s17, 0
    %s20 = sadd.s32 %s19, 1
    %s21 = scalar_select %p18, %s19, %s20
    %p24 = pneg %p18
    %p25 = scmp.eq.s32.totalorder %s9, 1
    %p26 = por %p24, %p25
    %p27 = scmp.ne.s32.totalorder %s19, %s22
    %p28 = scmp.eq.s32.totalorder %s9, 0
    %p29 = por %p27, %p28
    %p30 = scmp.ne.s32.totalorder %s19, %s22
    %p31 = scmp.eq.s32.totalorder %s14, 1
    %p32 = por %p30, %p31
    %p33 = scmp.ne.s32.totalorder %s22, %s23
    %p34 = scmp.eq.s32.totalorder %s14, 0
    %p35 = por %p33, %p34
    %p36 = scmp.ne.s32.totalorder %s22, %s23
    %p37 = scmp.eq.s32.totalorder %s15, 1
    %p38 = por %p36, %p37
    %p40 = scmp.ne.s32.totalorder %s23, %s39
    %p41 = scmp.eq.s32.totalorder %s15, 0
    %p42 = por %p40, %p41
    %s44 = sadd.s32 %s43, 1
    %p47 = scmp.eq.s32.totalorder %s9, 1
    %p48 = scmp.ne.s32.totalorder %s43, %s45
    %p49 = scmp.eq.s32.totalorder %s9, 0
    %p50 = por %p48, %p49
    %p51 = scmp.ne.s32.totalorder %s43, %s45
    %p52 = scmp.eq.s32.totalorder %s14, 1
    %p53 = por %p51, %p52
    %p54 = scmp.ne.s32.totalorder %s45, %s46
    %p55 = scmp.eq.s32.totalorder %s14, 0
    %p56 = por %p54, %p55
    %p57 = scmp.ne.s32.totalorder %s45, %s46
    %p58 = scmp.eq.s32.totalorder %s15, 1
    %p59 = por %p57, %p58
    %p61 = scmp.ne.s32.totalorder %s46, %s60
    %p62 = scmp.eq.s32.totalorder %s15, 0
    %p63 = por %p61, %p62
    %s65 = sadd.s32 %s64, 1
    %p68 = scmp.eq.s32.totalorder %s9, 1
    %p69 = scmp.ne.s32.totalorder %s64, %s66
    %p70 = scmp.eq.s32.totalorder %s9, 0
    %p71 = por %p69, %p70
    %p72 = scmp.ne.s32.totalorder %s64, %s66
    %p73 = scmp.eq.s32.totalorder %s14, 1
    %p74 = por %p72, %p73
    %p75 = scmp.ne.s32.totalorder %s66, %s67
    %p76 = scmp.eq.s32.totalorder %s14, 0
    %p77 = por %p75, %p76
    %p78 = scmp.ne.s32.totalorder %s66, %s67
    %p79 = scmp.eq.s32.totalorder %s15, 1
    %p80 = por %p78, %p79
    %p82 = scmp.ne.s32.totalorder %s67, %s81
    %p83 = scmp.eq.s32.totalorder %s15, 0
    %p84 = por %p82, %p83
    %s85 = ssub.s32 %s9, %s16
    %p86 = scmp.eq.s32.totalorder %s85, 0
    %s88 = sadd.s32 %s87, 1
    %s89 = scalar_select %p86, %s87, %s88
    %p92 = pneg %p86
    %p93 = scmp.eq.s32.totalorder %s9, 1
    %p94 = por %p92, %p93
    %p95 = scmp.ne.s32.totalorder %s87, %s90
    %p96 = scmp.eq.s32.totalorder %s9, 0
    %p97 = por %p95, %p96
    %p98 = scmp.ne.s32.totalorder %s87, %s90
    %p99 = scmp.eq.s32.totalorder %s14, 1
    %p100 = por %p98, %p99
    %p101 = scmp.ne.s32.totalorder %s90, %s91
    %p102 = scmp.eq.s32.totalorder %s14, 0
    %p103 = por %p101, %p102
    %p104 = scmp.ne.s32.totalorder %s90, %s91
    %p105 = scmp.eq.s32.totalorder %s15, 1
    %p106 = por %p104, %p105
    %p108 = scmp.ne.s32.totalorder %s91, %s107
    %p109 = scmp.eq.s32.totalorder %s15, 0
    %p110 = por %p108, %p109
    %p111 = scmp.le.s32.totalorder 1, %s9
    %p112 = scmp.lt.s32.totalorder %s9, 3
    %p113 = pnand %p111, %p112
    %p114 = pneg %p113
    // Predicated region
    $region9: #{dh_up_res_forward.4} parent=5 // pred_check
      _
    $region10: #{dh_up_res_forward.4} parent=5 // pred_check_branch
      %116 = sbr.rel (%p113) target = $region12
    $region11: #{dh_up_res_forward.4} parent=5 // pred_region
      %s117 = ssub.s32 %s9, 1
      // Predicated region
      $region13: #{dh_up_res_forward.4} parent=11 // pred_check
        %p118 = pneg %p56
      $region14: #{dh_up_res_forward.4} parent=11 // pred_check_branch
        %120 = sbr.rel (%p118) target = $region16
      $region15: #{dh_up_res_forward.4} parent=11 // pred_region
        _
      $region16: #{dh_up_res_forward.4} parent=11 // pred_fallthru
        _
      // Predicated region
      $region17: #{dh_up_res_forward.4} parent=11 // pred_check
        %p121 = pneg %p77
      $region18: #{dh_up_res_forward.4} parent=11 // pred_check_branch
        %123 = sbr.rel (%p121) target = $region20
      $region19: #{dh_up_res_forward.4} parent=11 // pred_region
        _
      $region20: #{dh_up_res_forward.4} parent=11 // pred_fallthru
        _
    $region12: #{dh_up_res_forward.4} parent=5 // pred_fallthru
      _
    %p124 = scmp.lt.s32.totalorder %s9, 2
    // Predicated region
    $region21: #{dh_up_res_forward.4} parent=5 // pred_check
      %p125 = pneg %p124
    $region22: #{dh_up_res_forward.4} parent=5 // pred_check_branch
      %127 = sbr.rel (%p125) target = $region24
    $region23: #{dh_up_res_forward.4} parent=5 // pred_region
      // Predicated region
      $region25: #{dh_up_res_forward.4} parent=23 // pred_check
        %p128 = pneg %p29
      $region26: #{dh_up_res_forward.4} parent=23 // pred_check_branch
        %130 = sbr.rel (%p128) target = $region28
      $region27: #{dh_up_res_forward.4} parent=23 // pred_region
        %p131 = scmp.lt.s32.totalorder %s9, 1
        %s132 = scalar_select %p131, %s9, 1
        %s133 = smul.addr %s132, 340
        %s134 = smul.addr %s133, 8
        %s135 = scalar_lea.vmem %s0, %s134
      $region28: #{dh_up_res_forward.4} parent=23 // pred_fallthru
        _
    $region24: #{dh_up_res_forward.4} parent=5 // pred_fallthru
      _
    %p136 = scmp.le.s32.totalorder 1, %s9
    %p137 = scmp.lt.s32.totalorder %s9, 3
    %p138 = pnand %p136, %p137
    %p139 = pneg %p138
    // Predicated region
    $region29: #{dh_up_res_forward.4} parent=5 // pred_check
      _
    $region30: #{dh_up_res_forward.4} parent=5 // pred_check_branch
      %141 = sbr.rel (%p138) target = $region32
    $region31: #{dh_up_res_forward.4} parent=5 // pred_region
      %s142 = ssub.s32 %s9, 1
      %p143 = scmp.lt.s32.totalorder %s14, 1
      %s144 = scalar_select %p143, %s14, 1
      %s145 = smul.addr %s144, 340
      %s146 = smul.addr %s145, 8
      %s147 = scalar_lea.vmem %s0, %s146
      %p148 = pneg %p35
      %p149 = pneg %p32
      %p150 = pneg %p56
      %p151 = pneg %p53
      %p152 = pneg %p77
      %p153 = pneg %p74
      %p154 = pneg %p103
      %p155 = pneg %p100
      %p156 = scmp.lt.s32.totalorder %s14, 1
      %s157 = scalar_select %p156, %s14, 1
      %s158 = smul.addr %s157, 128
      %s159 = smul.addr %s158, 8
      %s160 = scalar_lea.vmem %s3, %s159
      %p161 = scmp.lt.s32.totalorder %s14, 1
      %s162 = scalar_select %p161, %s14, 1
      %s163 = smul.addr %s162, 340
      %s164 = smul.addr %s163, 8
      %s165 = scalar_lea.vmem %s0, %s164
      %p166 = scmp.lt.s32.totalorder %s14, 1
      %s167 = scalar_select %p166, %s14, 1
      %s168 = smul.addr %s167, 128
      %s169 = smul.addr %s168, 8
      %s170 = scalar_lea.vmem %s3, %s169
      %v171 = vld [vmem:[%s2] sm:$0x1]
      loop: start=0, step=1, limit=32
      $region33: #{dh_up_res_forward.4} parent=31 // loop_pre_header
        _
      $region34: #{dh_up_res_forward.4} parent=31 // loop_header
        %s173 = sphi 0, %s177
        %p174 = scmp.ge.s32.totalorder %s173, 32
      $region35: #{dh_up_res_forward.4} parent=31 // loop_header_branch
        %176 = sbr.rel (%p174) target = $region39
      $region36: #{dh_up_res_forward.4} parent=31 // loop_body
        %s178 = smul.u32 %s173, 10
        %s179 = smul.addr %s178, 8
        %s180 = scalar_lea.vmem %s165, %s179
        %v181 = vld [vmem:[%s180] sm:$0xff]
        %v182 = vld [vmem:[%s180 + $0x8] sm:$0xff]
        %v183 = vld [vmem:[%s180 + $0x10] sm:$0xff]
        %v184 = vld [vmem:[%s180 + $0x18] sm:$0xff]
        %v185 = vld [vmem:[%s180 + $0x20] sm:$0xff]
        %v186 = vld [vmem:[%s180 + $0x28] sm:$0xff]
        %v187 = vld [vmem:[%s180 + $0x30] sm:$0xff]
        %v188 = vld [vmem:[%s180 + $0x38] sm:$0xff]
        %v189 = vld [vmem:[%s180 + $0x40] sm:$0x3]
        %v190 = vld [vmem:[%s180 + $0x48] sm:$0x3]
        %v191 = vld [vmem:[%s1] sm:$0xff]
        %v192 = vld [vmem:[%s1 + $0x8] sm:$0xff]
        %v193 = vld [vmem:[%s1 + $0x10] sm:$0xff]
        %v194 = vld [vmem:[%s1 + $0x18] sm:$0xff]
        %v195 = vld [vmem:[%s1 + $0x20] sm:$0xff]
        %v196 = vld [vmem:[%s1 + $0x28] sm:$0xff]
        %v197 = vld [vmem:[%s1 + $0x30] sm:$0xff]
        %v198 = vld [vmem:[%s1 + $0x38] sm:$0xff]
        %v199 = vld [vmem:[%s1 + $0x40] sm:$0xff]
        %v200 = vld [vmem:[%s1 + $0x48] sm:$0xff]
        %v201 = vld [vmem:[%s1 + $0x50] sm:$0xff]
        %v202 = vld [vmem:[%s1 + $0x58] sm:$0xff]
        %v203 = vld [vmem:[%s1 + $0x60] sm:$0xff]
        %v204 = vld [vmem:[%s1 + $0x68] sm:$0xff]
        %v205 = vld [vmem:[%s1 + $0x70] sm:$0xff]
        %v206 = vld [vmem:[%s1 + $0x78] sm:$0xff]
        %v207 = vld [vmem:[%s1 + $0x80] sm:$0xff]
        %s208 = scalar_lea.vmem %s1, 136
        %v209 = vld [vmem:[%s208] sm:$0xff]
        %v210 = vld [vmem:[%s208 + $0x8] sm:$0xff]
        %v211 = vld [vmem:[%s208 + $0x10] sm:$0xff]
        %v212 = vld [vmem:[%s208 + $0x18] sm:$0xff]
        %v213 = vld [vmem:[%s208 + $0x20] sm:$0xff]
        %v214 = vld [vmem:[%s208 + $0x28] sm:$0xff]
        %v215 = vld [vmem:[%s208 + $0x30] sm:$0xff]
        %v216 = vld [vmem:[%s208 + $0x38] sm:$0xff]
        %v217 = vld [vmem:[%s208 + $0x40] sm:$0xff]
        %v218 = vld [vmem:[%s208 + $0x48] sm:$0xff]
        %v219 = vld [vmem:[%s208 + $0x50] sm:$0xff]
        %v220 = vld [vmem:[%s208 + $0x58] sm:$0xff]
        %v221 = vld [vmem:[%s208 + $0x60] sm:$0xff]
        %v222 = vld [vmem:[%s208 + $0x68] sm:$0xff]
        %v223 = vld [vmem:[%s208 + $0x70] sm:$0xff]
        %v224 = vld [vmem:[%s208 + $0x78] sm:$0xff]
        %v225 = vld [vmem:[%s208 + $0x80] sm:$0xff]
        %vm236 = vcmask 1046528
        %v237 = vrot.slane %v181, 1
        %v238 = vrot.slane %v183, 1
        %v239 = vsel %vm236, %v237, %v238
        %v240 = vrot.slane %v182, 1
        %v241 = vrot.slane %v184, 1
        %v242 = vsel %vm236, %v240, %v241
        %v243 = vrot.slane %v185, 1
        %v244 = vsel %vm236, %v238, %v243
        %v245 = vrot.slane %v186, 1
        %v246 = vsel %vm236, %v241, %v245
        %v247 = vrot.slane %v187, 1
        %v248 = vsel %vm236, %v243, %v247
        %v249 = vrot.slane %v188, 1
        %v250 = vsel %vm236, %v245, %v249
        %v251 = vrot.slane %v189, 1
        %v252 = vsel %vm236, %v247, %v251
        %v253 = vrot.slane %v190, 1
        %v254 = vsel %vm236, %v249, %v253
        %vm259 = vcmask 64512
        %v260 = vsel %vm259, %v242, 0
        %v262 = vsel %vm259, %v246, 0
        %v264 = vsel %vm259, %v250, 0
        %v266 = vsel %vm259, %v254, 0
        %268 = vmatprep.subr.mxu0 0.0
        %269 = vmatpush1.msra.mxu0 %v224
        %270 = vmatprep.subr.mxu0 0.0
        %271 = vmatpush1.msra.mxu0 %v223
        %272 = vmatprep.subr.mxu0 0.0
        %273 = vmatpush1.msra.mxu0 %v222
        %274 = vmatprep.subr.mxu0 0.0
        %275 = vmatpush1.msra.mxu0 %v221
        %276 = vmatprep.subr.mxu0 0.0
        %277 = vmatpush1.msra.mxu0 %v220
        %278 = vmatprep.subr.mxu0 0.0
        %279 = vmatpush1.msra.mxu0 %v219
        %280 = vmatprep.subr.mxu0 0.0
        %281 = vmatpush1.msra.mxu0 %v218
        %282 = vmatprep.subr.mxu0 0.0
        %283 = vmatpush1.msra.mxu0 %v217
        %284 = vmatprep.subr.mxu0 0.0
        %285 = vmatpush1.msra.mxu0 %v216
        %286 = vmatprep.subr.mxu0 0.0
        %287 = vmatpush1.msra.mxu0 %v215
        %288 = vmatprep.subr.mxu0 0.0
        %289 = vmatpush1.msra.mxu0 %v214
        %290 = vmatprep.subr.mxu0 0.0
        %291 = vmatpush1.msra.mxu0 %v213
        %292 = vmatprep.subr.mxu0 0.0
        %293 = vmatpush1.msra.mxu0 %v212
        %294 = vmatprep.subr.mxu0 0.0
        %295 = vmatpush1.msra.mxu0 %v211
        %296 = vmatprep.subr.mxu0 0.0
        %297 = vmatpush1.msra.mxu0 %v210
        %298 = vmatprep.subr.mxu0 0.0
        %299 = vmatpush1.msra.mxu0 %v209
        %300 = vmatprep.subr.mxu0 0.0
        %301 = vmatpush2.msra.mxu0 0.0
        %302 = vmatprep.subr.mxu0 0.0
        %303 = vmatpush2.msra.mxu0 0.0
        %304 = vmatprep.subr.mxu0 0.0
        %305 = vmatpush2.msra.mxu0 0.0
        %306 = vmatprep.subr.mxu0 0.0
        %307 = vmatpush2.msra.mxu0 0.0
        %308 = vmatprep.subr.mxu0 0.0
        %309 = vmatpush2.msra.mxu0 0.0
        %310 = vmatprep.subr.mxu0 0.0
        %311 = vmatpush2.msra.mxu0 0.0
        %312 = vmatprep.subr.mxu0 0.0
        %313 = vmatpush2.msra.mxu0 0.0
        %314 = vmatprep.subr.mxu0 0.0
        %315 = vmatpush2.msra.mxu0 0.0
        %316 = vmatprep.subr.mxu0 0.0
        %317 = vmatpush2.msra.mxu0 0.0
        %318 = vmatprep.subr.mxu0 0.0
        %319 = vmatpush2.msra.mxu0 0.0
        %320 = vmatprep.subr.mxu0 0.0
        %321 = vmatpush2.msra.mxu0 0.0
        %322 = vmatprep.subr.mxu0 0.0
        %323 = vmatpush2.msra.mxu0 0.0
        %324 = vmatprep.subr.mxu0 0.0
        %325 = vmatpush2.msra.mxu0 0.0
        %326 = vmatprep.subr.mxu0 0.0
        %327 = vmatpush2.msra.mxu0 0.0
        %328 = vmatprep.subr.mxu0 0.0
        %329 = vmatpush2.msra.mxu0 0.0
        %330 = vmatprep.subr.mxu0 0.0
        %331 = vmatpush2.msra.mxu0 %v225
        %332 = vmatprep.mubr.f32.mxu0 %v260
        %333 = vmatmul.mubr.f32.gmra.mxu0 %v239
        %v334 = vpop.f32.mrf.mxu0
        %v335 = vadd.f32 0.0, %v334
        %v336 = vpop.f32.mrf.mxu0
        %337 = vmatprep.mubr.f32.mxu0 %v262
        %338 = vmatmul.mubr.f32.gmra.mxu0 %v244
        %v339 = vpop.f32.mrf.mxu0
        %v340 = vadd.f32 0.0, %v339
        %v341 = vpop.f32.mrf.mxu0
        %342 = vmatprep.mubr.f32.mxu0 %v264
        %343 = vmatmul.mubr.f32.gmra.mxu0 %v248
        %v344 = vpop.f32.mrf.mxu0
        %v345 = vadd.f32 0.0, %v344
        %v346 = vpop.f32.mrf.mxu0
        %347 = vmatprep.mubr.f32.mxu0 %v266
        %348 = vmatmul.mubr.f32.gmra.mxu0 %v252
        %v349 = vpop.f32.mrf.mxu0
        %v350 = vadd.f32 0.0, %v349
        %v351 = vpop.f32.mrf.mxu0
        %352 = vdwg.mxu0
        %v353 = vsel %vm259, %v182, 0
        %v355 = vsel %vm259, %v184, 0
        %v357 = vsel %vm259, %v186, 0
        %v359 = vsel %vm259, %v188, 0
        %361 = vmatprep.subr.mxu0 0.0
        %362 = vmatpush1.msra.mxu0 %v206
        %363 = vmatprep.subr.mxu0 0.0
        %364 = vmatpush1.msra.mxu0 %v205
        %365 = vmatprep.subr.mxu0 0.0
        %366 = vmatpush1.msra.mxu0 %v204
        %367 = vmatprep.subr.mxu0 0.0
        %368 = vmatpush1.msra.mxu0 %v203
        %369 = vmatprep.subr.mxu0 0.0
        %370 = vmatpush1.msra.mxu0 %v202
        %371 = vmatprep.subr.mxu0 0.0
        %372 = vmatpush1.msra.mxu0 %v201
        %373 = vmatprep.subr.mxu0 0.0
        %374 = vmatpush1.msra.mxu0 %v200
        %375 = vmatprep.subr.mxu0 0.0
        %376 = vmatpush1.msra.mxu0 %v199
        %377 = vmatprep.subr.mxu0 0.0
        %378 = vmatpush1.msra.mxu0 %v198
        %379 = vmatprep.subr.mxu0 0.0
        %380 = vmatpush1.msra.mxu0 %v197
        %381 = vmatprep.subr.mxu0 0.0
        %382 = vmatpush1.msra.mxu0 %v196
        %383 = vmatprep.subr.mxu0 0.0
        %384 = vmatpush1.msra.mxu0 %v195
        %385 = vmatprep.subr.mxu0 0.0
        %386 = vmatpush1.msra.mxu0 %v194
        %387 = vmatprep.subr.mxu0 0.0
        %388 = vmatpush1.msra.mxu0 %v193
        %389 = vmatprep.subr.mxu0 0.0
        %390 = vmatpush1.msra.mxu0 %v192
        %391 = vmatprep.subr.mxu0 0.0
        %392 = vmatpush1.msra.mxu0 %v191
        %393 = vmatprep.subr.mxu0 0.0
        %394 = vmatpush2.msra.mxu0 0.0
        %395 = vmatprep.subr.mxu0 0.0
        %396 = vmatpush2.msra.mxu0 0.0
        %397 = vmatprep.subr.mxu0 0.0
        %398 = vmatpush2.msra.mxu0 0.0
        %399 = vmatprep.subr.mxu0 0.0
        %400 = vmatpush2.msra.mxu0 0.0
        %401 = vmatprep.subr.mxu0 0.0
        %402 = vmatpush2.msra.mxu0 0.0
        %403 = vmatprep.subr.mxu0 0.0
        %404 = vmatpush2.msra.mxu0 0.0
        %405 = vmatprep.subr.mxu0 0.0
        %406 = vmatpush2.msra.mxu0 0.0
        %407 = vmatprep.subr.mxu0 0.0
        %408 = vmatpush2.msra.mxu0 0.0
        %409 = vmatprep.subr.mxu0 0.0
        %410 = vmatpush2.msra.mxu0 0.0
        %411 = vmatprep.subr.mxu0 0.0
        %412 = vmatpush2.msra.mxu0 0.0
        %413 = vmatprep.subr.mxu0 0.0
        %414 = vmatpush2.msra.mxu0 0.0
        %415 = vmatprep.subr.mxu0 0.0
        %416 = vmatpush2.msra.mxu0 0.0
        %417 = vmatprep.subr.mxu0 0.0
        %418 = vmatpush2.msra.mxu0 0.0
        %419 = vmatprep.subr.mxu0 0.0
        %420 = vmatpush2.msra.mxu0 0.0
        %421 = vmatprep.subr.mxu0 0.0
        %422 = vmatpush2.msra.mxu0 0.0
        %423 = vmatprep.subr.mxu0 0.0
        %424 = vmatpush2.msra.mxu0 %v207
        %425 = vmatprep.mubr.f32.mxu0 %v353
        %426 = vmatmul.mubr.f32.gmra.mxu0 %v181
        %v427 = vpop.f32.mrf.mxu0
        %v428 = vadd.f32 %v335, %v427
        %v429 = vpop.f32.mrf.mxu0
        %430 = vmatprep.mubr.f32.mxu0 %v355
        %431 = vmatmul.mubr.f32.gmra.mxu0 %v183
        %v432 = vpop.f32.mrf.mxu0
        %v433 = vadd.f32 %v340, %v432
        %v434 = vpop.f32.mrf.mxu0
        %435 = vmatprep.mubr.f32.mxu0 %v357
        %436 = vmatmul.mubr.f32.gmra.mxu0 %v185
        %v437 = vpop.f32.mrf.mxu0
        %v438 = vadd.f32 %v345, %v437
        %v439 = vpop.f32.mrf.mxu0
        %440 = vmatprep.mubr.f32.mxu0 %v359
        %441 = vmatmul.mubr.f32.gmra.mxu0 %v187
        %v442 = vpop.f32.mrf.mxu0
        %v443 = vadd.f32 %v350, %v442
        %v444 = vpop.f32.mrf.mxu0
        %445 = vdwg.mxu0
        %s446 = scalar_lea.vmem %s1, 272
        %v447 = vld [vmem:[%s446] sm:$0xff]
        %v448 = vld [vmem:[%s446 + $0x8] sm:$0xff]
        %v449 = vld [vmem:[%s446 + $0x10] sm:$0xff]
        %v450 = vld [vmem:[%s446 + $0x18] sm:$0xff]
        %v451 = vld [vmem:[%s446 + $0x20] sm:$0xff]
        %v452 = vld [vmem:[%s446 + $0x28] sm:$0xff]
        %v453 = vld [vmem:[%s446 + $0x30] sm:$0xff]
        %v454 = vld [vmem:[%s446 + $0x38] sm:$0xff]
        %v455 = vld [vmem:[%s446 + $0x40] sm:$0xff]
        %v456 = vld [vmem:[%s446 + $0x48] sm:$0xff]
        %v457 = vld [vmem:[%s446 + $0x50] sm:$0xff]
        %v458 = vld [vmem:[%s446 + $0x58] sm:$0xff]
        %v459 = vld [vmem:[%s446 + $0x60] sm:$0xff]
        %v460 = vld [vmem:[%s446 + $0x68] sm:$0xff]
        %v461 = vld [vmem:[%s446 + $0x70] sm:$0xff]
        %v462 = vld [vmem:[%s446 + $0x78] sm:$0xff]
        %v463 = vld [vmem:[%s446 + $0x80] sm:$0xff]
        %vm464 = vcmask 1045504
        %v465 = vrot.slane %v181, 2
        %v466 = vrot.slane %v183, 2
        %v467 = vsel %vm464, %v465, %v466
        %v468 = vrot.slane %v182, 2
        %v469 = vrot.slane %v184, 2
        %v470 = vsel %vm464, %v468, %v469
        %v471 = vrot.slane %v185, 2
        %v472 = vsel %vm464, %v466, %v471
        %v473 = vrot.slane %v186, 2
        %v474 = vsel %vm464, %v469, %v473
        %v475 = vrot.slane %v187, 2
        %v476 = vsel %vm464, %v471, %v475
        %v477 = vrot.slane %v188, 2
        %v478 = vsel %vm464, %v473, %v477
        %v479 = vrot.slane %v189, 2
        %v480 = vsel %vm464, %v475, %v479
        %v481 = vrot.slane %v190, 2
        %v482 = vsel %vm464, %v477, %v481
        %v487 = vsel %vm259, %v470, 0
        %v489 = vsel %vm259, %v474, 0
        %v491 = vsel %vm259, %v478, 0
        %v493 = vsel %vm259, %v482, 0
        %495 = vmatprep.subr.mxu0 0.0
        %496 = vmatpush1.msra.mxu0 %v462
        %497 = vmatprep.subr.mxu0 0.0
        %498 = vmatpush1.msra.mxu0 %v461
        %499 = vmatprep.subr.mxu0 0.0
        %500 = vmatpush1.msra.mxu0 %v460
        %501 = vmatprep.subr.mxu0 0.0
        %502 = vmatpush1.msra.mxu0 %v459
        %503 = vmatprep.subr.mxu0 0.0
        %504 = vmatpush1.msra.mxu0 %v458
        %505 = vmatprep.subr.mxu0 0.0
        %506 = vmatpush1.msra.mxu0 %v457
        %507 = vmatprep.subr.mxu0 0.0
        %508 = vmatpush1.msra.mxu0 %v456
        %509 = vmatprep.subr.mxu0 0.0
        %510 = vmatpush1.msra.mxu0 %v455
        %511 = vmatprep.subr.mxu0 0.0
        %512 = vmatpush1.msra.mxu0 %v454
        %513 = vmatprep.subr.mxu0 0.0
        %514 = vmatpush1.msra.mxu0 %v453
        %515 = vmatprep.subr.mxu0 0.0
        %516 = vmatpush1.msra.mxu0 %v452
        %517 = vmatprep.subr.mxu0 0.0
        %518 = vmatpush1.msra.mxu0 %v451
        %519 = vmatprep.subr.mxu0 0.0
        %520 = vmatpush1.msra.mxu0 %v450
        %521 = vmatprep.subr.mxu0 0.0
        %522 = vmatpush1.msra.mxu0 %v449
        %523 = vmatprep.subr.mxu0 0.0
        %524 = vmatpush1.msra.mxu0 %v448
        %525 = vmatprep.subr.mxu0 0.0
        %526 = vmatpush1.msra.mxu0 %v447
        %527 = vmatprep.subr.mxu0 0.0
        %528 = vmatpush2.msra.mxu0 0.0
        %529 = vmatprep.subr.mxu0 0.0
        %530 = vmatpush2.msra.mxu0 0.0
        %531 = vmatprep.subr.mxu0 0.0
        %532 = vmatpush2.msra.mxu0 0.0
        %533 = vmatprep.subr.mxu0 0.0
        %534 = vmatpush2.msra.mxu0 0.0
        %535 = vmatprep.subr.mxu0 0.0
        %536 = vmatpush2.msra.mxu0 0.0
        %537 = vmatprep.subr.mxu0 0.0
        %538 = vmatpush2.msra.mxu0 0.0
        %539 = vmatprep.subr.mxu0 0.0
        %540 = vmatpush2.msra.mxu0 0.0
        %541 = vmatprep.subr.mxu0 0.0
        %542 = vmatpush2.msra.mxu0 0.0
        %543 = vmatprep.subr.mxu0 0.0
        %544 = vmatpush2.msra.mxu0 0.0
        %545 = vmatprep.subr.mxu0 0.0
        %546 = vmatpush2.msra.mxu0 0.0
        %547 = vmatprep.subr.mxu0 0.0
        %548 = vmatpush2.msra.mxu0 0.0
        %549 = vmatprep.subr.mxu0 0.0
        %550 = vmatpush2.msra.mxu0 0.0
        %551 = vmatprep.subr.mxu0 0.0
        %552 = vmatpush2.msra.mxu0 0.0
        %553 = vmatprep.subr.mxu0 0.0
        %554 = vmatpush2.msra.mxu0 0.0
        %555 = vmatprep.subr.mxu0 0.0
        %556 = vmatpush2.msra.mxu0 0.0
        %557 = vmatprep.subr.mxu0 0.0
        %558 = vmatpush2.msra.mxu0 %v463
        %559 = vmatprep.mubr.f32.mxu0 %v487
        %560 = vmatmul.mubr.f32.gmra.mxu0 %v467
        %v561 = vpop.f32.mrf.mxu0
        %v562 = vadd.f32 0.0, %v561
        %v563 = vpop.f32.mrf.mxu0
        %564 = vmatprep.mubr.f32.mxu0 %v489
        %565 = vmatmul.mubr.f32.gmra.mxu0 %v472
        %v566 = vpop.f32.mrf.mxu0
        %v567 = vadd.f32 0.0, %v566
        %v568 = vpop.f32.mrf.mxu0
        %569 = vmatprep.mubr.f32.mxu0 %v491
        %570 = vmatmul.mubr.f32.gmra.mxu0 %v476
        %v571 = vpop.f32.mrf.mxu0
        %v572 = vadd.f32 0.0, %v571
        %v573 = vpop.f32.mrf.mxu0
        %574 = vmatprep.mubr.f32.mxu0 %v493
        %575 = vmatmul.mubr.f32.gmra.mxu0 %v480
        %v576 = vpop.f32.mrf.mxu0
        %v577 = vadd.f32 0.0, %v576
        %v578 = vpop.f32.mrf.mxu0
        %579 = vdwg.mxu0
        %v580 = vadd.f32 %v428, %v562
        %v581 = vadd.f32 %v433, %v567
        %v582 = vadd.f32 %v438, %v572
        %v583 = vadd.f32 %v443, %v577
        %s584 = sadd.s32 %s173, 1
        %s585 = smul.u32 %s584, 10
        %s586 = smul.addr %s585, 8
        %s587 = scalar_lea.vmem %s165, %s586
        %v588 = vld [vmem:[%s587] sm:$0xff]
        %v589 = vld [vmem:[%s587 + $0x8] sm:$0xff]
        %v590 = vld [vmem:[%s587 + $0x10] sm:$0xff]
        %v591 = vld [vmem:[%s587 + $0x18] sm:$0xff]
        %v592 = vld [vmem:[%s587 + $0x20] sm:$0xff]
        %v593 = vld [vmem:[%s587 + $0x28] sm:$0xff]
        %v594 = vld [vmem:[%s587 + $0x30] sm:$0xff]
        %v595 = vld [vmem:[%s587 + $0x38] sm:$0xff]
        %v596 = vld [vmem:[%s587 + $0x40] sm:$0x3]
        %v597 = vld [vmem:[%s587 + $0x48] sm:$0x3]
        %s598 = scalar_lea.vmem %s1, 408
        %v599 = vld [vmem:[%s598] sm:$0xff]
        %v600 = vld [vmem:[%s598 + $0x8] sm:$0xff]
        %v601 = vld [vmem:[%s598 + $0x10] sm:$0xff]
        %v602 = vld [vmem:[%s598 + $0x18] sm:$0xff]
        %v603 = vld [vmem:[%s598 + $0x20] sm:$0xff]
        %v604 = vld [vmem:[%s598 + $0x28] sm:$0xff]
        %v605 = vld [vmem:[%s598 + $0x30] sm:$0xff]
        %v606 = vld [vmem:[%s598 + $0x38] sm:$0xff]
        %v607 = vld [vmem:[%s598 + $0x40] sm:$0xff]
        %v608 = vld [vmem:[%s598 + $0x48] sm:$0xff]
        %v609 = vld [vmem:[%s598 + $0x50] sm:$0xff]
        %v610 = vld [vmem:[%s598 + $0x58] sm:$0xff]
        %v611 = vld [vmem:[%s598 + $0x60] sm:$0xff]
        %v612 = vld [vmem:[%s598 + $0x68] sm:$0xff]
        %v613 = vld [vmem:[%s598 + $0x70] sm:$0xff]
        %v614 = vld [vmem:[%s598 + $0x78] sm:$0xff]
        %v615 = vld [vmem:[%s598 + $0x80] sm:$0xff]
        %v617 = vsel %vm259, %v589, 0
        %v620 = vsel %vm259, %v591, 0
        %v623 = vsel %vm259, %v593, 0
        %v626 = vsel %vm259, %v595, 0
        %628 = vmatprep.subr.mxu0 0.0
        %629 = vmatpush1.msra.mxu0 %v614
        %630 = vmatprep.subr.mxu0 0.0
        %631 = vmatpush1.msra.mxu0 %v613
        %632 = vmatprep.subr.mxu0 0.0
        %633 = vmatpush1.msra.mxu0 %v612
        %634 = vmatprep.subr.mxu0 0.0
        %635 = vmatpush1.msra.mxu0 %v611
        %636 = vmatprep.subr.mxu0 0.0
        %637 = vmatpush1.msra.mxu0 %v610
        %638 = vmatprep.subr.mxu0 0.0
        %639 = vmatpush1.msra.mxu0 %v609
        %640 = vmatprep.subr.mxu0 0.0
        %641 = vmatpush1.msra.mxu0 %v608
        %642 = vmatprep.subr.mxu0 0.0
        %643 = vmatpush1.msra.mxu0 %v607
        %644 = vmatprep.subr.mxu0 0.0
        %645 = vmatpush1.msra.mxu0 %v606
        %646 = vmatprep.subr.mxu0 0.0
        %647 = vmatpush1.msra.mxu0 %v605
        %648 = vmatprep.subr.mxu0 0.0
        %649 = vmatpush1.msra.mxu0 %v604
        %650 = vmatprep.subr.mxu0 0.0
        %651 = vmatpush1.msra.mxu0 %v603
        %652 = vmatprep.subr.mxu0 0.0
        %653 = vmatpush1.msra.mxu0 %v602
        %654 = vmatprep.subr.mxu0 0.0
        %655 = vmatpush1.msra.mxu0 %v601
        %656 = vmatprep.subr.mxu0 0.0
        %657 = vmatpush1.msra.mxu0 %v600
        %658 = vmatprep.subr.mxu0 0.0
        %659 = vmatpush1.msra.mxu0 %v599
        %660 = vmatprep.subr.mxu0 0.0
        %661 = vmatpush2.msra.mxu0 0.0
        %662 = vmatprep.subr.mxu0 0.0
        %663 = vmatpush2.msra.mxu0 0.0
        %664 = vmatprep.subr.mxu0 0.0
        %665 = vmatpush2.msra.mxu0 0.0
        %666 = vmatprep.subr.mxu0 0.0
        %667 = vmatpush2.msra.mxu0 0.0
        %668 = vmatprep.subr.mxu0 0.0
        %669 = vmatpush2.msra.mxu0 0.0
        %670 = vmatprep.subr.mxu0 0.0
        %671 = vmatpush2.msra.mxu0 0.0
        %672 = vmatprep.subr.mxu0 0.0
        %673 = vmatpush2.msra.mxu0 0.0
        %674 = vmatprep.subr.mxu0 0.0
        %675 = vmatpush2.msra.mxu0 0.0
        %676 = vmatprep.subr.mxu0 0.0
        %677 = vmatpush2.msra.mxu0 0.0
        %678 = vmatprep.subr.mxu0 0.0
        %679 = vmatpush2.msra.mxu0 0.0
        %680 = vmatprep.subr.mxu0 0.0
        %681 = vmatpush2.msra.mxu0 0.0
        %682 = vmatprep.subr.mxu0 0.0
        %683 = vmatpush2.msra.mxu0 0.0
        %684 = vmatprep.subr.mxu0 0.0
        %685 = vmatpush2.msra.mxu0 0.0
        %686 = vmatprep.subr.mxu0 0.0
        %687 = vmatpush2.msra.mxu0 0.0
        %688 = vmatprep.subr.mxu0 0.0
        %689 = vmatpush2.msra.mxu0 0.0
        %690 = vmatprep.subr.mxu0 0.0
        %691 = vmatpush2.msra.mxu0 %v615
        %692 = vmatprep.mubr.f32.mxu0 %v617
        %693 = vmatmul.mubr.f32.gmra.mxu0 %v588
        %v694 = vpop.f32.mrf.mxu0
        %v695 = vadd.f32 0.0, %v694
        %v696 = vpop.f32.mrf.mxu0
        %697 = vmatprep.mubr.f32.mxu0 %v620
        %698 = vmatmul.mubr.f32.gmra.mxu0 %v590
        %v699 = vpop.f32.mrf.mxu0
        %v700 = vadd.f32 0.0, %v699
        %v701 = vpop.f32.mrf.mxu0
        %702 = vmatprep.mubr.f32.mxu0 %v623
        %703 = vmatmul.mubr.f32.gmra.mxu0 %v592
        %v704 = vpop.f32.mrf.mxu0
        %v705 = vadd.f32 0.0, %v704
        %v706 = vpop.f32.mrf.mxu0
        %707 = vmatprep.mubr.f32.mxu0 %v626
        %708 = vmatmul.mubr.f32.gmra.mxu0 %v594
        %v709 = vpop.f32.mrf.mxu0
        %v710 = vadd.f32 0.0, %v709
        %v711 = vpop.f32.mrf.mxu0
        %712 = vdwg.mxu0
        %v713 = vadd.f32 %v580, %v695
        %v714 = vadd.f32 %v581, %v700
        %v715 = vadd.f32 %v582, %v705
        %v716 = vadd.f32 %v583, %v710
        %s717 = scalar_lea.vmem %s1, 544
        %v718 = vld [vmem:[%s717] sm:$0xff]
        %v719 = vld [vmem:[%s717 + $0x8] sm:$0xff]
        %v720 = vld [vmem:[%s717 + $0x10] sm:$0xff]
        %v721 = vld [vmem:[%s717 + $0x18] sm:$0xff]
        %v722 = vld [vmem:[%s717 + $0x20] sm:$0xff]
        %v723 = vld [vmem:[%s717 + $0x28] sm:$0xff]
        %v724 = vld [vmem:[%s717 + $0x30] sm:$0xff]
        %v725 = vld [vmem:[%s717 + $0x38] sm:$0xff]
        %v726 = vld [vmem:[%s717 + $0x40] sm:$0xff]
        %v727 = vld [vmem:[%s717 + $0x48] sm:$0xff]
        %v728 = vld [vmem:[%s717 + $0x50] sm:$0xff]
        %v729 = vld [vmem:[%s717 + $0x58] sm:$0xff]
        %v730 = vld [vmem:[%s717 + $0x60] sm:$0xff]
        %v731 = vld [vmem:[%s717 + $0x68] sm:$0xff]
        %v732 = vld [vmem:[%s717 + $0x70] sm:$0xff]
        %v733 = vld [vmem:[%s717 + $0x78] sm:$0xff]
        %v734 = vld [vmem:[%s717 + $0x80] sm:$0xff]
        %v741 = vrot.slane %v588, 1
        %v742 = vrot.slane %v590, 1
        %v743 = vsel %vm236, %v741, %v742
        %v744 = vrot.slane %v589, 1
        %v745 = vrot.slane %v591, 1
        %v746 = vsel %vm236, %v744, %v745
        %v747 = vrot.slane %v592, 1
        %v748 = vsel %vm236, %v742, %v747
        %v749 = vrot.slane %v593, 1
        %v750 = vsel %vm236, %v745, %v749
        %v751 = vrot.slane %v594, 1
        %v752 = vsel %vm236, %v747, %v751
        %v753 = vrot.slane %v595, 1
        %v754 = vsel %vm236, %v749, %v753
        %v755 = vrot.slane %v596, 1
        %v756 = vsel %vm236, %v751, %v755
        %v757 = vrot.slane %v597, 1
        %v758 = vsel %vm236, %v753, %v757
        %v763 = vsel %vm259, %v746, 0
        %v765 = vsel %vm259, %v750, 0
        %v767 = vsel %vm259, %v754, 0
        %v769 = vsel %vm259, %v758, 0
        %771 = vmatprep.subr.mxu0 0.0
        %772 = vmatpush1.msra.mxu0 %v733
        %773 = vmatprep.subr.mxu0 0.0
        %774 = vmatpush1.msra.mxu0 %v732
        %775 = vmatprep.subr.mxu0 0.0
        %776 = vmatpush1.msra.mxu0 %v731
        %777 = vmatprep.subr.mxu0 0.0
        %778 = vmatpush1.msra.mxu0 %v730
        %779 = vmatprep.subr.mxu0 0.0
        %780 = vmatpush1.msra.mxu0 %v729
        %781 = vmatprep.subr.mxu0 0.0
        %782 = vmatpush1.msra.mxu0 %v728
        %783 = vmatprep.subr.mxu0 0.0
        %784 = vmatpush1.msra.mxu0 %v727
        %785 = vmatprep.subr.mxu0 0.0
        %786 = vmatpush1.msra.mxu0 %v726
        %787 = vmatprep.subr.mxu0 0.0
        %788 = vmatpush1.msra.mxu0 %v725
        %789 = vmatprep.subr.mxu0 0.0
        %790 = vmatpush1.msra.mxu0 %v724
        %791 = vmatprep.subr.mxu0 0.0
        %792 = vmatpush1.msra.mxu0 %v723
        %793 = vmatprep.subr.mxu0 0.0
        %794 = vmatpush1.msra.mxu0 %v722
        %795 = vmatprep.subr.mxu0 0.0
        %796 = vmatpush1.msra.mxu0 %v721
        %797 = vmatprep.subr.mxu0 0.0
        %798 = vmatpush1.msra.mxu0 %v720
        %799 = vmatprep.subr.mxu0 0.0
        %800 = vmatpush1.msra.mxu0 %v719
        %801 = vmatprep.subr.mxu0 0.0
        %802 = vmatpush1.msra.mxu0 %v718
        %803 = vmatprep.subr.mxu0 0.0
        %804 = vmatpush2.msra.mxu0 0.0
        %805 = vmatprep.subr.mxu0 0.0
        %806 = vmatpush2.msra.mxu0 0.0
        %807 = vmatprep.subr.mxu0 0.0
        %808 = vmatpush2.msra.mxu0 0.0
        %809 = vmatprep.subr.mxu0 0.0
        %810 = vmatpush2.msra.mxu0 0.0
        %811 = vmatprep.subr.mxu0 0.0
        %812 = vmatpush2.msra.mxu0 0.0
        %813 = vmatprep.subr.mxu0 0.0
        %814 = vmatpush2.msra.mxu0 0.0
        %815 = vmatprep.subr.mxu0 0.0
        %816 = vmatpush2.msra.mxu0 0.0
        %817 = vmatprep.subr.mxu0 0.0
        %818 = vmatpush2.msra.mxu0 0.0
        %819 = vmatprep.subr.mxu0 0.0
        %820 = vmatpush2.msra.mxu0 0.0
        %821 = vmatprep.subr.mxu0 0.0
        %822 = vmatpush2.msra.mxu0 0.0
        %823 = vmatprep.subr.mxu0 0.0
        %824 = vmatpush2.msra.mxu0 0.0
        %825 = vmatprep.subr.mxu0 0.0
        %826 = vmatpush2.msra.mxu0 0.0
        %827 = vmatprep.subr.mxu0 0.0
        %828 = vmatpush2.msra.mxu0 0.0
        %829 = vmatprep.subr.mxu0 0.0
        %830 = vmatpush2.msra.mxu0 0.0
        %831 = vmatprep.subr.mxu0 0.0
        %832 = vmatpush2.msra.mxu0 0.0
        %833 = vmatprep.subr.mxu0 0.0
        %834 = vmatpush2.msra.mxu0 %v734
        %835 = vmatprep.mubr.f32.mxu0 %v763
        %836 = vmatmul.mubr.f32.gmra.mxu0 %v743
        %v837 = vpop.f32.mrf.mxu0
        %v838 = vadd.f32 0.0, %v837
        %v839 = vpop.f32.mrf.mxu0
        %840 = vmatprep.mubr.f32.mxu0 %v765
        %841 = vmatmul.mubr.f32.gmra.mxu0 %v748
        %v842 = vpop.f32.mrf.mxu0
        %v843 = vadd.f32 0.0, %v842
        %v844 = vpop.f32.mrf.mxu0
        %845 = vmatprep.mubr.f32.mxu0 %v767
        %846 = vmatmul.mubr.f32.gmra.mxu0 %v752
        %v847 = vpop.f32.mrf.mxu0
        %v848 = vadd.f32 0.0, %v847
        %v849 = vpop.f32.mrf.mxu0
        %850 = vmatprep.mubr.f32.mxu0 %v769
        %851 = vmatmul.mubr.f32.gmra.mxu0 %v756
        %v852 = vpop.f32.mrf.mxu0
        %v853 = vadd.f32 0.0, %v852
        %v854 = vpop.f32.mrf.mxu0
        %855 = vdwg.mxu0
        %v856 = vadd.f32 %v713, %v838
        %v857 = vadd.f32 %v714, %v843
        %v858 = vadd.f32 %v715, %v848
        %v859 = vadd.f32 %v716, %v853
        %s860 = scalar_lea.vmem %s1, 680
        %v861 = vld [vmem:[%s860] sm:$0xff]
        %v862 = vld [vmem:[%s860 + $0x8] sm:$0xff]
        %v863 = vld [vmem:[%s860 + $0x10] sm:$0xff]
        %v864 = vld [vmem:[%s860 + $0x18] sm:$0xff]
        %v865 = vld [vmem:[%s860 + $0x20] sm:$0xff]
        %v866 = vld [vmem:[%s860 + $0x28] sm:$0xff]
        %v867 = vld [vmem:[%s860 + $0x30] sm:$0xff]
        %v868 = vld [vmem:[%s860 + $0x38] sm:$0xff]
        %v869 = vld [vmem:[%s860 + $0x40] sm:$0xff]
        %v870 = vld [vmem:[%s860 + $0x48] sm:$0xff]
        %v871 = vld [vmem:[%s860 + $0x50] sm:$0xff]
        %v872 = vld [vmem:[%s860 + $0x58] sm:$0xff]
        %v873 = vld [vmem:[%s860 + $0x60] sm:$0xff]
        %v874 = vld [vmem:[%s860 + $0x68] sm:$0xff]
        %v875 = vld [vmem:[%s860 + $0x70] sm:$0xff]
        %v876 = vld [vmem:[%s860 + $0x78] sm:$0xff]
        %v877 = vld [vmem:[%s860 + $0x80] sm:$0xff]
        %v878 = vrot.slane %v588, 2
        %v879 = vrot.slane %v590, 2
        %v880 = vsel %vm464, %v878, %v879
        %v881 = vrot.slane %v589, 2
        %v882 = vrot.slane %v591, 2
        %v883 = vsel %vm464, %v881, %v882
        %v884 = vrot.slane %v592, 2
        %v885 = vsel %vm464, %v879, %v884
        %v886 = vrot.slane %v593, 2
        %v887 = vsel %vm464, %v882, %v886
        %v888 = vrot.slane %v594, 2
        %v889 = vsel %vm464, %v884, %v888
        %v890 = vrot.slane %v595, 2
        %v891 = vsel %vm464, %v886, %v890
        %v892 = vrot.slane %v596, 2
        %v893 = vsel %vm464, %v888, %v892
        %v894 = vrot.slane %v597, 2
        %v895 = vsel %vm464, %v890, %v894
        %v900 = vsel %vm259, %v883, 0
        %v902 = vsel %vm259, %v887, 0
        %v904 = vsel %vm259, %v891, 0
        %v906 = vsel %vm259, %v895, 0
        %908 = vmatprep.subr.mxu0 0.0
        %909 = vmatpush1.msra.mxu0 %v876
        %910 = vmatprep.subr.mxu0 0.0
        %911 = vmatpush1.msra.mxu0 %v875
        %912 = vmatprep.subr.mxu0 0.0
        %913 = vmatpush1.msra.mxu0 %v874
        %914 = vmatprep.subr.mxu0 0.0
        %915 = vmatpush1.msra.mxu0 %v873
        %916 = vmatprep.subr.mxu0 0.0
        %917 = vmatpush1.msra.mxu0 %v872
        %918 = vmatprep.subr.mxu0 0.0
        %919 = vmatpush1.msra.mxu0 %v871
        %920 = vmatprep.subr.mxu0 0.0
        %921 = vmatpush1.msra.mxu0 %v870
        %922 = vmatprep.subr.mxu0 0.0
        %923 = vmatpush1.msra.mxu0 %v869
        %924 = vmatprep.subr.mxu0 0.0
        %925 = vmatpush1.msra.mxu0 %v868
        %926 = vmatprep.subr.mxu0 0.0
        %927 = vmatpush1.msra.mxu0 %v867
        %928 = vmatprep.subr.mxu0 0.0
        %929 = vmatpush1.msra.mxu0 %v866
        %930 = vmatprep.subr.mxu0 0.0
        %931 = vmatpush1.msra.mxu0 %v865
        %932 = vmatprep.subr.mxu0 0.0
        %933 = vmatpush1.msra.mxu0 %v864
        %934 = vmatprep.subr.mxu0 0.0
        %935 = vmatpush1.msra.mxu0 %v863
        %936 = vmatprep.subr.mxu0 0.0
        %937 = vmatpush1.msra.mxu0 %v862
        %938 = vmatprep.subr.mxu0 0.0
        %939 = vmatpush1.msra.mxu0 %v861
        %940 = vmatprep.subr.mxu0 0.0
        %941 = vmatpush2.msra.mxu0 0.0
        %942 = vmatprep.subr.mxu0 0.0
        %943 = vmatpush2.msra.mxu0 0.0
        %944 = vmatprep.subr.mxu0 0.0
        %945 = vmatpush2.msra.mxu0 0.0
        %946 = vmatprep.subr.mxu0 0.0
        %947 = vmatpush2.msra.mxu0 0.0
        %948 = vmatprep.subr.mxu0 0.0
        %949 = vmatpush2.msra.mxu0 0.0
        %950 = vmatprep.subr.mxu0 0.0
        %951 = vmatpush2.msra.mxu0 0.0
        %952 = vmatprep.subr.mxu0 0.0
        %953 = vmatpush2.msra.mxu0 0.0
        %954 = vmatprep.subr.mxu0 0.0
        %955 = vmatpush2.msra.mxu0 0.0
        %956 = vmatprep.subr.mxu0 0.0
        %957 = vmatpush2.msra.mxu0 0.0
        %958 = vmatprep.subr.mxu0 0.0
        %959 = vmatpush2.msra.mxu0 0.0
        %960 = vmatprep.subr.mxu0 0.0
        %961 = vmatpush2.msra.mxu0 0.0
        %962 = vmatprep.subr.mxu0 0.0
        %963 = vmatpush2.msra.mxu0 0.0
        %964 = vmatprep.subr.mxu0 0.0
        %965 = vmatpush2.msra.mxu0 0.0
        %966 = vmatprep.subr.mxu0 0.0
        %967 = vmatpush2.msra.mxu0 0.0
        %968 = vmatprep.subr.mxu0 0.0
        %969 = vmatpush2.msra.mxu0 0.0
        %970 = vmatprep.subr.mxu0 0.0
        %971 = vmatpush2.msra.mxu0 %v877
        %972 = vmatprep.mubr.f32.mxu0 %v900
        %973 = vmatmul.mubr.f32.gmra.mxu0 %v880
        %v974 = vpop.f32.mrf.mxu0
        %v975 = vadd.f32 0.0, %v974
        %v976 = vpop.f32.mrf.mxu0
        %977 = vmatprep.mubr.f32.mxu0 %v902
        %978 = vmatmul.mubr.f32.gmra.mxu0 %v885
        %v979 = vpop.f32.mrf.mxu0
        %v980 = vadd.f32 0.0, %v979
        %v981 = vpop.f32.mrf.mxu0
        %982 = vmatprep.mubr.f32.mxu0 %v904
        %983 = vmatmul.mubr.f32.gmra.mxu0 %v889
        %v984 = vpop.f32.mrf.mxu0
        %v985 = vadd.f32 0.0, %v984
        %v986 = vpop.f32.mrf.mxu0
        %987 = vmatprep.mubr.f32.mxu0 %v906
        %988 = vmatmul.mubr.f32.gmra.mxu0 %v893
        %v989 = vpop.f32.mrf.mxu0
        %v990 = vadd.f32 0.0, %v989
        %v991 = vpop.f32.mrf.mxu0
        %992 = vdwg.mxu0
        %v993 = vadd.f32 %v856, %v975
        %v994 = vadd.f32 %v857, %v980
        %v995 = vadd.f32 %v858, %v985
        %v996 = vadd.f32 %v859, %v990
        %s997 = sadd.s32 %s173, 2
        %s998 = smul.u32 %s997, 10
        %s999 = smul.addr %s998, 8
        %s1000 = scalar_lea.vmem %s165, %s999
        %v1001 = vld [vmem:[%s1000] sm:$0xff]
        %v1002 = vld [vmem:[%s1000 + $0x8] sm:$0xff]
        %v1003 = vld [vmem:[%s1000 + $0x10] sm:$0xff]
        %v1004 = vld [vmem:[%s1000 + $0x18] sm:$0xff]
        %v1005 = vld [vmem:[%s1000 + $0x20] sm:$0xff]
        %v1006 = vld [vmem:[%s1000 + $0x28] sm:$0xff]
        %v1007 = vld [vmem:[%s1000 + $0x30] sm:$0xff]
        %v1008 = vld [vmem:[%s1000 + $0x38] sm:$0xff]
        %v1009 = vld [vmem:[%s1000 + $0x40] sm:$0x3]
        %v1010 = vld [vmem:[%s1000 + $0x48] sm:$0x3]
        %s1011 = scalar_lea.vmem %s1, 816
        %v1012 = vld [vmem:[%s1011] sm:$0xff]
        %v1013 = vld [vmem:[%s1011 + $0x8] sm:$0xff]
        %v1014 = vld [vmem:[%s1011 + $0x10] sm:$0xff]
        %v1015 = vld [vmem:[%s1011 + $0x18] sm:$0xff]
        %v1016 = vld [vmem:[%s1011 + $0x20] sm:$0xff]
        %v1017 = vld [vmem:[%s1011 + $0x28] sm:$0xff]
        %v1018 = vld [vmem:[%s1011 + $0x30] sm:$0xff]
        %v1019 = vld [vmem:[%s1011 + $0x38] sm:$0xff]
        %v1020 = vld [vmem:[%s1011 + $0x40] sm:$0xff]
        %v1021 = vld [vmem:[%s1011 + $0x48] sm:$0xff]
        %v1022 = vld [vmem:[%s1011 + $0x50] sm:$0xff]
        %v1023 = vld [vmem:[%s1011 + $0x58] sm:$0xff]
        %v1024 = vld [vmem:[%s1011 + $0x60] sm:$0xff]
        %v1025 = vld [vmem:[%s1011 + $0x68] sm:$0xff]
        %v1026 = vld [vmem:[%s1011 + $0x70] sm:$0xff]
        %v1027 = vld [vmem:[%s1011 + $0x78] sm:$0xff]
        %v1028 = vld [vmem:[%s1011 + $0x80] sm:$0xff]
        %v1030 = vsel %vm259, %v1002, 0
        %v1033 = vsel %vm259, %v1004, 0
        %v1036 = vsel %vm259, %v1006, 0
        %v1039 = vsel %vm259, %v1008, 0
        %1041 = vmatprep.subr.mxu0 0.0
        %1042 = vmatpush1.msra.mxu0 %v1027
        %1043 = vmatprep.subr.mxu0 0.0
        %1044 = vmatpush1.msra.mxu0 %v1026
        %1045 = vmatprep.subr.mxu0 0.0
        %1046 = vmatpush1.msra.mxu0 %v1025
        %1047 = vmatprep.subr.mxu0 0.0
        %1048 = vmatpush1.msra.mxu0 %v1024
        %1049 = vmatprep.subr.mxu0 0.0
        %1050 = vmatpush1.msra.mxu0 %v1023
        %1051 = vmatprep.subr.mxu0 0.0
        %1052 = vmatpush1.msra.mxu0 %v1022
        %1053 = vmatprep.subr.mxu0 0.0
        %1054 = vmatpush1.msra.mxu0 %v1021
        %1055 = vmatprep.subr.mxu0 0.0
        %1056 = vmatpush1.msra.mxu0 %v1020
        %1057 = vmatprep.subr.mxu0 0.0
        %1058 = vmatpush1.msra.mxu0 %v1019
        %1059 = vmatprep.subr.mxu0 0.0
        %1060 = vmatpush1.msra.mxu0 %v1018
        %1061 = vmatprep.subr.mxu0 0.0
        %1062 = vmatpush1.msra.mxu0 %v1017
        %1063 = vmatprep.subr.mxu0 0.0
        %1064 = vmatpush1.msra.mxu0 %v1016
        %1065 = vmatprep.subr.mxu0 0.0
        %1066 = vmatpush1.msra.mxu0 %v1015
        %1067 = vmatprep.subr.mxu0 0.0
        %1068 = vmatpush1.msra.mxu0 %v1014
        %1069 = vmatprep.subr.mxu0 0.0
        %1070 = vmatpush1.msra.mxu0 %v1013
        %1071 = vmatprep.subr.mxu0 0.0
        %1072 = vmatpush1.msra.mxu0 %v1012
        %1073 = vmatprep.subr.mxu0 0.0
        %1074 = vmatpush2.msra.mxu0 0.0
        %1075 = vmatprep.subr.mxu0 0.0
        %1076 = vmatpush2.msra.mxu0 0.0
        %1077 = vmatprep.subr.mxu0 0.0
        %1078 = vmatpush2.msra.mxu0 0.0
        %1079 = vmatprep.subr.mxu0 0.0
        %1080 = vmatpush2.msra.mxu0 0.0
        %1081 = vmatprep.subr.mxu0 0.0
        %1082 = vmatpush2.msra.mxu0 0.0
        %1083 = vmatprep.subr.mxu0 0.0
        %1084 = vmatpush2.msra.mxu0 0.0
        %1085 = vmatprep.subr.mxu0 0.0
        %1086 = vmatpush2.msra.mxu0 0.0
        %1087 = vmatprep.subr.mxu0 0.0
        %1088 = vmatpush2.msra.mxu0 0.0
        %1089 = vmatprep.subr.mxu0 0.0
        %1090 = vmatpush2.msra.mxu0 0.0
        %1091 = vmatprep.subr.mxu0 0.0
        %1092 = vmatpush2.msra.mxu0 0.0
        %1093 = vmatprep.subr.mxu0 0.0
        %1094 = vmatpush2.msra.mxu0 0.0
        %1095 = vmatprep.subr.mxu0 0.0
        %1096 = vmatpush2.msra.mxu0 0.0
        %1097 = vmatprep.subr.mxu0 0.0
        %1098 = vmatpush2.msra.mxu0 0.0
        %1099 = vmatprep.subr.mxu0 0.0
        %1100 = vmatpush2.msra.mxu0 0.0
        %1101 = vmatprep.subr.mxu0 0.0
        %1102 = vmatpush2.msra.mxu0 0.0
        %1103 = vmatprep.subr.mxu0 0.0
        %1104 = vmatpush2.msra.mxu0 %v1028
        %1105 = vmatprep.mubr.f32.mxu0 %v1030
        %1106 = vmatmul.mubr.f32.gmra.mxu0 %v1001
        %v1107 = vpop.f32.mrf.mxu0
        %v1108 = vadd.f32 0.0, %v1107
        %v1109 = vpop.f32.mrf.mxu0
        %1110 = vmatprep.mubr.f32.mxu0 %v1033
        %1111 = vmatmul.mubr.f32.gmra.mxu0 %v1003
        %v1112 = vpop.f32.mrf.mxu0
        %v1113 = vadd.f32 0.0, %v1112
        %v1114 = vpop.f32.mrf.mxu0
        %1115 = vmatprep.mubr.f32.mxu0 %v1036
        %1116 = vmatmul.mubr.f32.gmra.mxu0 %v1005
        %v1117 = vpop.f32.mrf.mxu0
        %v1118 = vadd.f32 0.0, %v1117
        %v1119 = vpop.f32.mrf.mxu0
        %1120 = vmatprep.mubr.f32.mxu0 %v1039
        %1121 = vmatmul.mubr.f32.gmra.mxu0 %v1007
        %v1122 = vpop.f32.mrf.mxu0
        %v1123 = vadd.f32 0.0, %v1122
        %v1124 = vpop.f32.mrf.mxu0
        %1125 = vdwg.mxu0
        %v1126 = vadd.f32 %v993, %v1108
        %v1127 = vadd.f32 %v994, %v1113
        %v1128 = vadd.f32 %v995, %v1118
        %v1129 = vadd.f32 %v996, %v1123
        %s1130 = scalar_lea.vmem %s1, 952
        %v1131 = vld [vmem:[%s1130] sm:$0xff]
        %v1132 = vld [vmem:[%s1130 + $0x8] sm:$0xff]
        %v1133 = vld [vmem:[%s1130 + $0x10] sm:$0xff]
        %v1134 = vld [vmem:[%s1130 + $0x18] sm:$0xff]
        %v1135 = vld [vmem:[%s1130 + $0x20] sm:$0xff]
        %v1136 = vld [vmem:[%s1130 + $0x28] sm:$0xff]
        %v1137 = vld [vmem:[%s1130 + $0x30] sm:$0xff]
        %v1138 = vld [vmem:[%s1130 + $0x38] sm:$0xff]
        %v1139 = vld [vmem:[%s1130 + $0x40] sm:$0xff]
        %v1140 = vld [vmem:[%s1130 + $0x48] sm:$0xff]
        %v1141 = vld [vmem:[%s1130 + $0x50] sm:$0xff]
        %v1142 = vld [vmem:[%s1130 + $0x58] sm:$0xff]
        %v1143 = vld [vmem:[%s1130 + $0x60] sm:$0xff]
        %v1144 = vld [vmem:[%s1130 + $0x68] sm:$0xff]
        %v1145 = vld [vmem:[%s1130 + $0x70] sm:$0xff]
        %v1146 = vld [vmem:[%s1130 + $0x78] sm:$0xff]
        %v1147 = vld [vmem:[%s1130 + $0x80] sm:$0xff]
        %v1154 = vrot.slane %v1001, 1
        %v1155 = vrot.slane %v1003, 1
        %v1156 = vsel %vm236, %v1154, %v1155
        %v1157 = vrot.slane %v1002, 1
        %v1158 = vrot.slane %v1004, 1
        %v1159 = vsel %vm236, %v1157, %v1158
        %v1160 = vrot.slane %v1005, 1
        %v1161 = vsel %vm236, %v1155, %v1160
        %v1162 = vrot.slane %v1006, 1
        %v1163 = vsel %vm236, %v1158, %v1162
        %v1164 = vrot.slane %v1007, 1
        %v1165 = vsel %vm236, %v1160, %v1164
        %v1166 = vrot.slane %v1008, 1
        %v1167 = vsel %vm236, %v1162, %v1166
        %v1168 = vrot.slane %v1009, 1
        %v1169 = vsel %vm236, %v1164, %v1168
        %v1170 = vrot.slane %v1010, 1
        %v1171 = vsel %vm236, %v1166, %v1170
        %v1176 = vsel %vm259, %v1159, 0
        %v1178 = vsel %vm259, %v1163, 0
        %v1180 = vsel %vm259, %v1167, 0
        %v1182 = vsel %vm259, %v1171, 0
        %1184 = vmatprep.subr.mxu0 0.0
        %1185 = vmatpush1.msra.mxu0 %v1146
        %1186 = vmatprep.subr.mxu0 0.0
        %1187 = vmatpush1.msra.mxu0 %v1145
        %1188 = vmatprep.subr.mxu0 0.0
        %1189 = vmatpush1.msra.mxu0 %v1144
        %1190 = vmatprep.subr.mxu0 0.0
        %1191 = vmatpush1.msra.mxu0 %v1143
        %1192 = vmatprep.subr.mxu0 0.0
        %1193 = vmatpush1.msra.mxu0 %v1142
        %1194 = vmatprep.subr.mxu0 0.0
        %1195 = vmatpush1.msra.mxu0 %v1141
        %1196 = vmatprep.subr.mxu0 0.0
        %1197 = vmatpush1.msra.mxu0 %v1140
        %1198 = vmatprep.subr.mxu0 0.0
        %1199 = vmatpush1.msra.mxu0 %v1139
        %1200 = vmatprep.subr.mxu0 0.0
        %1201 = vmatpush1.msra.mxu0 %v1138
        %1202 = vmatprep.subr.mxu0 0.0
        %1203 = vmatpush1.msra.mxu0 %v1137
        %1204 = vmatprep.subr.mxu0 0.0
        %1205 = vmatpush1.msra.mxu0 %v1136
        %1206 = vmatprep.subr.mxu0 0.0
        %1207 = vmatpush1.msra.mxu0 %v1135
        %1208 = vmatprep.subr.mxu0 0.0
        %1209 = vmatpush1.msra.mxu0 %v1134
        %1210 = vmatprep.subr.mxu0 0.0
        %1211 = vmatpush1.msra.mxu0 %v1133
        %1212 = vmatprep.subr.mxu0 0.0
        %1213 = vmatpush1.msra.mxu0 %v1132
        %1214 = vmatprep.subr.mxu0 0.0
        %1215 = vmatpush1.msra.mxu0 %v1131
        %1216 = vmatprep.subr.mxu0 0.0
        %1217 = vmatpush2.msra.mxu0 0.0
        %1218 = vmatprep.subr.mxu0 0.0
        %1219 = vmatpush2.msra.mxu0 0.0
        %1220 = vmatprep.subr.mxu0 0.0
        %1221 = vmatpush2.msra.mxu0 0.0
        %1222 = vmatprep.subr.mxu0 0.0
        %1223 = vmatpush2.msra.mxu0 0.0
        %1224 = vmatprep.subr.mxu0 0.0
        %1225 = vmatpush2.msra.mxu0 0.0
        %1226 = vmatprep.subr.mxu0 0.0
        %1227 = vmatpush2.msra.mxu0 0.0
        %1228 = vmatprep.subr.mxu0 0.0
        %1229 = vmatpush2.msra.mxu0 0.0
        %1230 = vmatprep.subr.mxu0 0.0
        %1231 = vmatpush2.msra.mxu0 0.0
        %1232 = vmatprep.subr.mxu0 0.0
        %1233 = vmatpush2.msra.mxu0 0.0
        %1234 = vmatprep.subr.mxu0 0.0
        %1235 = vmatpush2.msra.mxu0 0.0
        %1236 = vmatprep.subr.mxu0 0.0
        %1237 = vmatpush2.msra.mxu0 0.0
        %1238 = vmatprep.subr.mxu0 0.0
        %1239 = vmatpush2.msra.mxu0 0.0
        %1240 = vmatprep.subr.mxu0 0.0
        %1241 = vmatpush2.msra.mxu0 0.0
        %1242 = vmatprep.subr.mxu0 0.0
        %1243 = vmatpush2.msra.mxu0 0.0
        %1244 = vmatprep.subr.mxu0 0.0
        %1245 = vmatpush2.msra.mxu0 0.0
        %1246 = vmatprep.subr.mxu0 0.0
        %1247 = vmatpush2.msra.mxu0 %v1147
        %1248 = vmatprep.mubr.f32.mxu0 %v1176
        %1249 = vmatmul.mubr.f32.gmra.mxu0 %v1156
        %v1250 = vpop.f32.mrf.mxu0
        %v1251 = vadd.f32 0.0, %v1250
        %v1252 = vpop.f32.mrf.mxu0
        %1253 = vmatprep.mubr.f32.mxu0 %v1178
        %1254 = vmatmul.mubr.f32.gmra.mxu0 %v1161
        %v1255 = vpop.f32.mrf.mxu0
        %v1256 = vadd.f32 0.0, %v1255
        %v1257 = vpop.f32.mrf.mxu0
        %1258 = vmatprep.mubr.f32.mxu0 %v1180
        %1259 = vmatmul.mubr.f32.gmra.mxu0 %v1165
        %v1260 = vpop.f32.mrf.mxu0
        %v1261 = vadd.f32 0.0, %v1260
        %v1262 = vpop.f32.mrf.mxu0
        %1263 = vmatprep.mubr.f32.mxu0 %v1182
        %1264 = vmatmul.mubr.f32.gmra.mxu0 %v1169
        %v1265 = vpop.f32.mrf.mxu0
        %v1266 = vadd.f32 0.0, %v1265
        %v1267 = vpop.f32.mrf.mxu0
        %1268 = vdwg.mxu0
        %v1269 = vadd.f32 %v1126, %v1251
        %v1270 = vadd.f32 %v1127, %v1256
        %v1271 = vadd.f32 %v1128, %v1261
        %v1272 = vadd.f32 %v1129, %v1266
        %s1273 = scalar_lea.vmem %s1, 1088
        %v1274 = vld [vmem:[%s1273] sm:$0xff]
        %v1275 = vld [vmem:[%s1273 + $0x8] sm:$0xff]
        %v1276 = vld [vmem:[%s1273 + $0x10] sm:$0xff]
        %v1277 = vld [vmem:[%s1273 + $0x18] sm:$0xff]
        %v1278 = vld [vmem:[%s1273 + $0x20] sm:$0xff]
        %v1279 = vld [vmem:[%s1273 + $0x28] sm:$0xff]
        %v1280 = vld [vmem:[%s1273 + $0x30] sm:$0xff]
        %v1281 = vld [vmem:[%s1273 + $0x38] sm:$0xff]
        %v1282 = vld [vmem:[%s1273 + $0x40] sm:$0xff]
        %v1283 = vld [vmem:[%s1273 + $0x48] sm:$0xff]
        %v1284 = vld [vmem:[%s1273 + $0x50] sm:$0xff]
        %v1285 = vld [vmem:[%s1273 + $0x58] sm:$0xff]
        %v1286 = vld [vmem:[%s1273 + $0x60] sm:$0xff]
        %v1287 = vld [vmem:[%s1273 + $0x68] sm:$0xff]
        %v1288 = vld [vmem:[%s1273 + $0x70] sm:$0xff]
        %v1289 = vld [vmem:[%s1273 + $0x78] sm:$0xff]
        %v1290 = vld [vmem:[%s1273 + $0x80] sm:$0xff]
        %v1291 = vrot.slane %v1001, 2
        %v1292 = vrot.slane %v1003, 2
        %v1293 = vsel %vm464, %v1291, %v1292
        %v1294 = vrot.slane %v1002, 2
        %v1295 = vrot.slane %v1004, 2
        %v1296 = vsel %vm464, %v1294, %v1295
        %v1297 = vrot.slane %v1005, 2
        %v1298 = vsel %vm464, %v1292, %v1297
        %v1299 = vrot.slane %v1006, 2
        %v1300 = vsel %vm464, %v1295, %v1299
        %v1301 = vrot.slane %v1007, 2
        %v1302 = vsel %vm464, %v1297, %v1301
        %v1303 = vrot.slane %v1008, 2
        %v1304 = vsel %vm464, %v1299, %v1303
        %v1305 = vrot.slane %v1009, 2
        %v1306 = vsel %vm464, %v1301, %v1305
        %v1307 = vrot.slane %v1010, 2
        %v1308 = vsel %vm464, %v1303, %v1307
        %v1313 = vsel %vm259, %v1296, 0
        %v1315 = vsel %vm259, %v1300, 0
        %v1317 = vsel %vm259, %v1304, 0
        %v1319 = vsel %vm259, %v1308, 0
        %1321 = vmatprep.subr.mxu0 0.0
        %1322 = vmatpush1.msra.mxu0 %v1289
        %1323 = vmatprep.subr.mxu0 0.0
        %1324 = vmatpush1.msra.mxu0 %v1288
        %1325 = vmatprep.subr.mxu0 0.0
        %1326 = vmatpush1.msra.mxu0 %v1287
        %1327 = vmatprep.subr.mxu0 0.0
        %1328 = vmatpush1.msra.mxu0 %v1286
        %1329 = vmatprep.subr.mxu0 0.0
        %1330 = vmatpush1.msra.mxu0 %v1285
        %1331 = vmatprep.subr.mxu0 0.0
        %1332 = vmatpush1.msra.mxu0 %v1284
        %1333 = vmatprep.subr.mxu0 0.0
        %1334 = vmatpush1.msra.mxu0 %v1283
        %1335 = vmatprep.subr.mxu0 0.0
        %1336 = vmatpush1.msra.mxu0 %v1282
        %1337 = vmatprep.subr.mxu0 0.0
        %1338 = vmatpush1.msra.mxu0 %v1281
        %1339 = vmatprep.subr.mxu0 0.0
        %1340 = vmatpush1.msra.mxu0 %v1280
        %1341 = vmatprep.subr.mxu0 0.0
        %1342 = vmatpush1.msra.mxu0 %v1279
        %1343 = vmatprep.subr.mxu0 0.0
        %1344 = vmatpush1.msra.mxu0 %v1278
        %1345 = vmatprep.subr.mxu0 0.0
        %1346 = vmatpush1.msra.mxu0 %v1277
        %1347 = vmatprep.subr.mxu0 0.0
        %1348 = vmatpush1.msra.mxu0 %v1276
        %1349 = vmatprep.subr.mxu0 0.0
        %1350 = vmatpush1.msra.mxu0 %v1275
        %1351 = vmatprep.subr.mxu0 0.0
        %1352 = vmatpush1.msra.mxu0 %v1274
        %1353 = vmatprep.subr.mxu0 0.0
        %1354 = vmatpush2.msra.mxu0 0.0
        %1355 = vmatprep.subr.mxu0 0.0
        %1356 = vmatpush2.msra.mxu0 0.0
        %1357 = vmatprep.subr.mxu0 0.0
        %1358 = vmatpush2.msra.mxu0 0.0
        %1359 = vmatprep.subr.mxu0 0.0
        %1360 = vmatpush2.msra.mxu0 0.0
        %1361 = vmatprep.subr.mxu0 0.0
        %1362 = vmatpush2.msra.mxu0 0.0
        %1363 = vmatprep.subr.mxu0 0.0
        %1364 = vmatpush2.msra.mxu0 0.0
        %1365 = vmatprep.subr.mxu0 0.0
        %1366 = vmatpush2.msra.mxu0 0.0
        %1367 = vmatprep.subr.mxu0 0.0
        %1368 = vmatpush2.msra.mxu0 0.0
        %1369 = vmatprep.subr.mxu0 0.0
        %1370 = vmatpush2.msra.mxu0 0.0
        %1371 = vmatprep.subr.mxu0 0.0
        %1372 = vmatpush2.msra.mxu0 0.0
        %1373 = vmatprep.subr.mxu0 0.0
        %1374 = vmatpush2.msra.mxu0 0.0
        %1375 = vmatprep.subr.mxu0 0.0
        %1376 = vmatpush2.msra.mxu0 0.0
        %1377 = vmatprep.subr.mxu0 0.0
        %1378 = vmatpush2.msra.mxu0 0.0
        %1379 = vmatprep.subr.mxu0 0.0
        %1380 = vmatpush2.msra.mxu0 0.0
        %1381 = vmatprep.subr.mxu0 0.0
        %1382 = vmatpush2.msra.mxu0 0.0
        %1383 = vmatprep.subr.mxu0 0.0
        %1384 = vmatpush2.msra.mxu0 %v1290
        %1385 = vmatprep.mubr.f32.mxu0 %v1313
        %1386 = vmatmul.mubr.f32.gmra.mxu0 %v1293
        %v1387 = vpop.f32.mrf.mxu0
        %v1388 = vadd.f32 0.0, %v1387
        %v1389 = vpop.f32.mrf.mxu0
        %1390 = vmatprep.mubr.f32.mxu0 %v1315
        %1391 = vmatmul.mubr.f32.gmra.mxu0 %v1298
        %v1392 = vpop.f32.mrf.mxu0
        %v1393 = vadd.f32 0.0, %v1392
        %v1394 = vpop.f32.mrf.mxu0
        %1395 = vmatprep.mubr.f32.mxu0 %v1317
        %1396 = vmatmul.mubr.f32.gmra.mxu0 %v1302
        %v1397 = vpop.f32.mrf.mxu0
        %v1398 = vadd.f32 0.0, %v1397
        %v1399 = vpop.f32.mrf.mxu0
        %1400 = vmatprep.mubr.f32.mxu0 %v1319
        %1401 = vmatmul.mubr.f32.gmra.mxu0 %v1306
        %v1402 = vpop.f32.mrf.mxu0
        %v1403 = vadd.f32 0.0, %v1402
        %v1404 = vpop.f32.mrf.mxu0
        %1405 = vdwg.mxu0
        %v1406 = vadd.f32 %v1269, %v1388
        %v1407 = vadd.f32 %v1270, %v1393
        %v1408 = vadd.f32 %v1271, %v1398
        %v1409 = vadd.f32 %v1272, %v1403
        %v1411 = vlaneseq
        %v1412 = vshrl.u32 %v1411, 7
        %v1413 = vsub.s32 0, %v1412
        %v1414 = vrot.slane %v171, %v1413
        %v1416 = vadd.f32 %v1406, %v1414
        %v1417 = vadd.f32 %v1407, %v1414
        %v1418 = vadd.f32 %v1408, %v1414
        %v1419 = vadd.f32 %v1409, %v1414
        %v1420 = vmax.f32 %v1416, 0.0
        %v1421 = vmax.f32 %v1417, 0.0
        %v1422 = vmax.f32 %v1418, 0.0
        %v1423 = vmax.f32 %v1419, 0.0
        %s1424 = smul.u32 %s173, 32
        %s1425 = scalar_lea.vmem %s170, %s1424
        %1426 = vst [vmem:[%s1425] sm:$0xff] %v1420
        %1427 = vst [vmem:[%s1425 + $0x8] sm:$0xff] %v1421
        %1428 = vst [vmem:[%s1425 + $0x10] sm:$0xff] %v1422
        %1429 = vst [vmem:[%s1425 + $0x18] sm:$0xff] %v1423
      $region37: #{dh_up_res_forward.4} parent=31 // loop_footer
        %s177 = sadd.s32 1, %s173
      $region38: #{dh_up_res_forward.4} parent=31 // loop_footer_branch
        %172 = sbr.rel target = $region34
      $region39: #{dh_up_res_forward.4} parent=31 // loop_exit
        _
      %p1430 = scmp.lt.s32.totalorder %s14, 1
      %s1431 = scalar_select %p1430, %s14, 1
      %s1432 = smul.addr %s1431, 128
      %s1433 = smul.addr %s1432, 8
      %s1434 = scalar_lea.vmem %s3, %s1433
      // Predicated region
      $region40: #{dh_up_res_forward.4} parent=31 // pred_check
        %p1435 = pneg %p100
      $region41: #{dh_up_res_forward.4} parent=31 // pred_check_branch
        %1437 = sbr.rel (%p1435) target = $region43
      $region42: #{dh_up_res_forward.4} parent=31 // pred_region
        _
      $region43: #{dh_up_res_forward.4} parent=31 // pred_fallthru
        _
    $region32: #{dh_up_res_forward.4} parent=5 // pred_fallthru
      _
    %p1438 = scmp.le.s32.totalorder 2, %s9
    // Predicated region
    $region44: #{dh_up_res_forward.4} parent=5 // pred_check
      %p1439 = pneg %p1438
    $region45: #{dh_up_res_forward.4} parent=5 // pred_check_branch
      %1441 = sbr.rel (%p1439) target = $region47
    $region46: #{dh_up_res_forward.4} parent=5 // pred_region
      %s1442 = ssub.s32 %s9, 2
      // Predicated region
      $region48: #{dh_up_res_forward.4} parent=46 // pred_check
        %p1443 = pneg %p106
      $region49: #{dh_up_res_forward.4} parent=46 // pred_check_branch
        %1445 = sbr.rel (%p1443) target = $region51
      $region50: #{dh_up_res_forward.4} parent=46 // pred_region
        %p1446 = scmp.lt.s32.totalorder %s15, 1
        %s1447 = scalar_select %p1446, %s15, 1
        %s1448 = smul.addr %s1447, 128
        %s1449 = smul.addr %s1448, 8
        %s1450 = scalar_lea.vmem %s3, %s1449
      $region51: #{dh_up_res_forward.4} parent=46 // pred_fallthru
        _
    $region47: #{dh_up_res_forward.4} parent=5 // pred_fallthru
      _
  $region6: #{dh_up_res_forward.4} parent=0 // loop_footer
    %s13 = sadd.s32 1, %s9
  $region7: #{dh_up_res_forward.4} parent=0 // loop_footer_branch
    %8 = sbr.rel target = $region3
  $region8: #{dh_up_res_forward.4} parent=0 // loop_exit
    _

// kernel: dh_up_res_forward.5
$region0: #{dh_up_res_forward.5}
  #allocation0 [shape = 'u32[]', space=smem, size = 0x4, offset = 0x4, fixed_abs, tag = 'smem constant byte address 0x4 - core index']
  #allocation1 [shape = 'u32[144,128]{1,0:T(1,128)}', space=vmem, size = 0x12000, scoped, tag = 'internal scratch']
  %s0 = inlined_call_operand.vmem [shape: f32[2,34,34,136], index: 0, kind: input, shape index: {}]
  %s1 = inlined_call_operand.vmem [shape: f32[2,32,32,128], index: 1, kind: input, shape index: {}]
  %s2 = inlined_call_operand.vmem [shape: f32[9,136,128], index: 2, kind: input, shape index: {}]
  %s3 = inlined_call_operand.vmem [shape: f32[1,128], index: 3, kind: input, shape index: {}]
  %s4 = inlined_call_operand.vmem [shape: f32[2,32,32,128], index: 4, kind: output, shape index: {}]
  %s5 = sld [smem:[#allocation0]]
  $region56: #{dh_up_res_forward.5} parent=0
    _
  %s7 = ssub.s32 1, %s5
  %s8 = scalar_select 0, %s7, %s5
  loop: start=0, step=1, limit=4
  $region2: #{dh_up_res_forward.5} parent=0 // loop_pre_header
    _
  $region3: #{dh_up_res_forward.5} parent=0 // loop_header
    %s10 = sphi 0, %s14
    %p11 = scmp.ge.s32.totalorder %s10, 4
    %s20 = sphi 0, %s22
    %s23 = sphi 0, %s20
    %s24 = sphi 0, %s23
    %s40 = sphi 0, %s24
    %s46 = sphi 0, %s48
    %s49 = sphi 0, %s46
    %s50 = sphi 0, %s49
    %s66 = sphi 0, %s50
    %s70 = sphi 0, %s70
    %s72 = sphi 0, %s70
    %s73 = sphi 0, %s72
    %s87 = sphi 0, %s73
    %s91 = sphi 0, %s91
    %s93 = sphi 0, %s91
    %s94 = sphi 0, %s93
    %s108 = sphi 0, %s94
    %s114 = sphi 0, %s116
    %s117 = sphi 0, %s114
    %s118 = sphi 0, %s117
    %s134 = sphi 0, %s118
  $region4: #{dh_up_res_forward.5} parent=0 // loop_header_branch
    %13 = sbr.rel (%p11) target = $region8
  $region5: #{dh_up_res_forward.5} parent=0 // loop_body
    %s15 = ssub.s32 %s10, 1
    %s16 = ssub.s32 %s10, 2
    %s17 = sadd.s32 %s10, 1
    %s18 = ssub.s32 %s10, %s17
    %p19 = scmp.eq.s32.totalorder %s18, 0
    %s21 = sadd.s32 %s20, 1
    %s22 = scalar_select %p19, %s20, %s21
    %p25 = pneg %p19
    %p26 = scmp.eq.s32.totalorder %s10, 1
    %p27 = por %p25, %p26
    %p28 = scmp.ne.s32.totalorder %s20, %s23
    %p29 = scmp.eq.s32.totalorder %s10, 0
    %p30 = por %p28, %p29
    %p31 = scmp.ne.s32.totalorder %s20, %s23
    %p32 = scmp.eq.s32.totalorder %s15, 1
    %p33 = por %p31, %p32
    %p34 = scmp.ne.s32.totalorder %s23, %s24
    %p35 = scmp.eq.s32.totalorder %s15, 0
    %p36 = por %p34, %p35
    %p37 = scmp.ne.s32.totalorder %s23, %s24
    %p38 = scmp.eq.s32.totalorder %s16, 1
    %p39 = por %p37, %p38
    %p41 = scmp.ne.s32.totalorder %s24, %s40
    %p42 = scmp.eq.s32.totalorder %s16, 0
    %p43 = por %p41, %p42
    %s44 = ssub.s32 %s10, %s17
    %p45 = scmp.eq.s32.totalorder %s44, 0
    %s47 = sadd.s32 %s46, 1
    %s48 = scalar_select %p45, %s46, %s47
    %p51 = pneg %p45
    %p52 = scmp.eq.s32.totalorder %s10, 1
    %p53 = por %p51, %p52
    %p54 = scmp.ne.s32.totalorder %s46, %s49
    %p55 = scmp.eq.s32.totalorder %s10, 0
    %p56 = por %p54, %p55
    %p57 = scmp.ne.s32.totalorder %s46, %s49
    %p58 = scmp.eq.s32.totalorder %s15, 1
    %p59 = por %p57, %p58
    %p60 = scmp.ne.s32.totalorder %s49, %s50
    %p61 = scmp.eq.s32.totalorder %s15, 0
    %p62 = por %p60, %p61
    %p63 = scmp.ne.s32.totalorder %s49, %s50
    %p64 = scmp.eq.s32.totalorder %s16, 1
    %p65 = por %p63, %p64
    %p67 = scmp.ne.s32.totalorder %s50, %s66
    %p68 = scmp.eq.s32.totalorder %s16, 0
    %p69 = por %p67, %p68
    %s71 = sadd.s32 %s70, 1
    %p74 = scmp.eq.s32.totalorder %s10, 1
    %p75 = scmp.ne.s32.totalorder %s70, %s72
    %p76 = scmp.eq.s32.totalorder %s10, 0
    %p77 = por %p75, %p76
    %p78 = scmp.ne.s32.totalorder %s70, %s72
    %p79 = scmp.eq.s32.totalorder %s15, 1
    %p80 = por %p78, %p79
    %p81 = scmp.ne.s32.totalorder %s72, %s73
    %p82 = scmp.eq.s32.totalorder %s15, 0
    %p83 = por %p81, %p82
    %p84 = scmp.ne.s32.totalorder %s72, %s73
    %p85 = scmp.eq.s32.totalorder %s16, 1
    %p86 = por %p84, %p85
    %p88 = scmp.ne.s32.totalorder %s73, %s87
    %p89 = scmp.eq.s32.totalorder %s16, 0
    %p90 = por %p88, %p89
    %s92 = sadd.s32 %s91, 1
    %p95 = scmp.eq.s32.totalorder %s10, 1
    %p96 = scmp.ne.s32.totalorder %s91, %s93
    %p97 = scmp.eq.s32.totalorder %s10, 0
    %p98 = por %p96, %p97
    %p99 = scmp.ne.s32.totalorder %s91, %s93
    %p100 = scmp.eq.s32.totalorder %s15, 1
    %p101 = por %p99, %p100
    %p102 = scmp.ne.s32.totalorder %s93, %s94
    %p103 = scmp.eq.s32.totalorder %s15, 0
    %p104 = por %p102, %p103
    %p105 = scmp.ne.s32.totalorder %s93, %s94
    %p106 = scmp.eq.s32.totalorder %s16, 1
    %p107 = por %p105, %p106
    %p109 = scmp.ne.s32.totalorder %s94, %s108
    %p110 = scmp.eq.s32.totalorder %s16, 0
    %p111 = por %p109, %p110
    %s112 = ssub.s32 %s10, %s17
    %p113 = scmp.eq.s32.totalorder %s112, 0
    %s115 = sadd.s32 %s114, 1
    %s116 = scalar_select %p113, %s114, %s115
    %p119 = pneg %p113
    %p120 = scmp.eq.s32.totalorder %s10, 1
    %p121 = por %p119, %p120
    %p122 = scmp.ne.s32.totalorder %s114, %s117
    %p123 = scmp.eq.s32.totalorder %s10, 0
    %p124 = por %p122, %p123
    %p125 = scmp.ne.s32.totalorder %s114, %s117
    %p126 = scmp.eq.s32.totalorder %s15, 1
    %p127 = por %p125, %p126
    %p128 = scmp.ne.s32.totalorder %s117, %s118
    %p129 = scmp.eq.s32.totalorder %s15, 0
    %p130 = por %p128, %p129
    %p131 = scmp.ne.s32.totalorder %s117, %s118
    %p132 = scmp.eq.s32.totalorder %s16, 1
    %p133 = por %p131, %p132
    %p135 = scmp.ne.s32.totalorder %s118, %s134
    %p136 = scmp.eq.s32.totalorder %s16, 0
    %p137 = por %p135, %p136
    %p138 = scmp.le.s32.totalorder 1, %s10
    %p139 = scmp.lt.s32.totalorder %s10, 3
    %p140 = pnand %p138, %p139
    %p141 = pneg %p140
    // Predicated region
    $region9: #{dh_up_res_forward.5} parent=5 // pred_check
      _
    $region10: #{dh_up_res_forward.5} parent=5 // pred_check_branch
      %143 = sbr.rel (%p140) target = $region12
    $region11: #{dh_up_res_forward.5} parent=5 // pred_region
      %s144 = ssub.s32 %s10, 1
      // Predicated region
      $region13: #{dh_up_res_forward.5} parent=11 // pred_check
        %p145 = pneg %p83
      $region14: #{dh_up_res_forward.5} parent=11 // pred_check_branch
        %147 = sbr.rel (%p145) target = $region16
      $region15: #{dh_up_res_forward.5} parent=11 // pred_region
        _
      $region16: #{dh_up_res_forward.5} parent=11 // pred_fallthru
        _
      // Predicated region
      $region17: #{dh_up_res_forward.5} parent=11 // pred_check
        %p148 = pneg %p104
      $region18: #{dh_up_res_forward.5} parent=11 // pred_check_branch
        %150 = sbr.rel (%p148) target = $region20
      $region19: #{dh_up_res_forward.5} parent=11 // pred_region
        _
      $region20: #{dh_up_res_forward.5} parent=11 // pred_fallthru
        _
    $region12: #{dh_up_res_forward.5} parent=5 // pred_fallthru
      _
    %p151 = scmp.lt.s32.totalorder %s10, 2
    // Predicated region
    $region21: #{dh_up_res_forward.5} parent=5 // pred_check
      %p152 = pneg %p151
    $region22: #{dh_up_res_forward.5} parent=5 // pred_check_branch
      %154 = sbr.rel (%p152) target = $region24
    $region23: #{dh_up_res_forward.5} parent=5 // pred_region
      // Predicated region
      $region25: #{dh_up_res_forward.5} parent=23 // pred_check
        %p155 = pneg %p30
      $region26: #{dh_up_res_forward.5} parent=23 // pred_check_branch
        %157 = sbr.rel (%p155) target = $region28
      $region27: #{dh_up_res_forward.5} parent=23 // pred_region
        %p158 = scmp.lt.s32.totalorder %s10, 1
        %s159 = scalar_select %p158, %s10, 1
        %s160 = smul.addr %s159, 340
        %s161 = smul.addr %s160, 8
        %s162 = scalar_lea.vmem %s0, %s161
      $region28: #{dh_up_res_forward.5} parent=23 // pred_fallthru
        _
      // Predicated region
      $region29: #{dh_up_res_forward.5} parent=23 // pred_check
        %p163 = pneg %p56
      $region30: #{dh_up_res_forward.5} parent=23 // pred_check_branch
        %165 = sbr.rel (%p163) target = $region32
      $region31: #{dh_up_res_forward.5} parent=23 // pred_region
        %p166 = scmp.lt.s32.totalorder %s10, 1
        %s167 = scalar_select %p166, %s10, 1
        %s168 = smul.addr %s167, 128
        %s169 = smul.addr %s168, 8
        %s170 = scalar_lea.vmem %s1, %s169
      $region32: #{dh_up_res_forward.5} parent=23 // pred_fallthru
        _
    $region24: #{dh_up_res_forward.5} parent=5 // pred_fallthru
      _
    %p171 = scmp.le.s32.totalorder 1, %s10
    %p172 = scmp.lt.s32.totalorder %s10, 3
    %p173 = pnand %p171, %p172
    %p174 = pneg %p173
    // Predicated region
    $region33: #{dh_up_res_forward.5} parent=5 // pred_check
      _
    $region34: #{dh_up_res_forward.5} parent=5 // pred_check_branch
      %176 = sbr.rel (%p173) target = $region36
    $region35: #{dh_up_res_forward.5} parent=5 // pred_region
      %s177 = ssub.s32 %s10, 1
      %p178 = scmp.lt.s32.totalorder %s15, 1
      %s179 = scalar_select %p178, %s15, 1
      %s180 = smul.addr %s179, 340
      %s181 = smul.addr %s180, 8
      %s182 = scalar_lea.vmem %s0, %s181
      %p183 = pneg %p36
      %p184 = pneg %p33
      %p185 = scmp.lt.s32.totalorder %s15, 1
      %s186 = scalar_select %p185, %s15, 1
      %s187 = smul.addr %s186, 128
      %s188 = smul.addr %s187, 8
      %s189 = scalar_lea.vmem %s1, %s188
      %p190 = pneg %p62
      %p191 = pneg %p59
      %p192 = pneg %p83
      %p193 = pneg %p80
      %p194 = pneg %p104
      %p195 = pneg %p101
      %p196 = pneg %p130
      %p197 = pneg %p127
      %p198 = scmp.lt.s32.totalorder %s15, 1
      %s199 = scalar_select %p198, %s15, 1
      %s200 = smul.addr %s199, 128
      %s201 = smul.addr %s200, 8
      %s202 = scalar_lea.vmem %s4, %s201
      %p203 = scmp.lt.s32.totalorder %s15, 1
      %s204 = scalar_select %p203, %s15, 1
      %s205 = smul.addr %s204, 340
      %s206 = smul.addr %s205, 8
      %s207 = scalar_lea.vmem %s0, %s206
      %p208 = scmp.lt.s32.totalorder %s15, 1
      %s209 = scalar_select %p208, %s15, 1
      %s210 = smul.addr %s209, 128
      %s211 = smul.addr %s210, 8
      %s212 = scalar_lea.vmem %s1, %s211
      %p213 = scmp.lt.s32.totalorder %s15, 1
      %s214 = scalar_select %p213, %s15, 1
      %s215 = smul.addr %s214, 128
      %s216 = smul.addr %s215, 8
      %s217 = scalar_lea.vmem %s4, %s216
      %v218 = vld [vmem:[%s3] sm:$0x1]
      loop: start=0, step=1, limit=32
      $region37: #{dh_up_res_forward.5} parent=35 // loop_pre_header
        _
      $region38: #{dh_up_res_forward.5} parent=35 // loop_header
        %s220 = sphi 0, %s224
        %p221 = scmp.ge.s32.totalorder %s220, 32
      $region39: #{dh_up_res_forward.5} parent=35 // loop_header_branch
        %223 = sbr.rel (%p221) target = $region43
      $region40: #{dh_up_res_forward.5} parent=35 // loop_body
        %s225 = smul.u32 %s220, 10
        %s226 = smul.addr %s225, 8
        %s227 = scalar_lea.vmem %s207, %s226
        %v228 = vld [vmem:[%s227] sm:$0xff]
        %v229 = vld [vmem:[%s227 + $0x8] sm:$0xff]
        %v230 = vld [vmem:[%s227 + $0x10] sm:$0xff]
        %v231 = vld [vmem:[%s227 + $0x18] sm:$0xff]
        %v232 = vld [vmem:[%s227 + $0x20] sm:$0xff]
        %v233 = vld [vmem:[%s227 + $0x28] sm:$0xff]
        %v234 = vld [vmem:[%s227 + $0x30] sm:$0xff]
        %v235 = vld [vmem:[%s227 + $0x38] sm:$0xff]
        %v236 = vld [vmem:[%s227 + $0x40] sm:$0x3]
        %v237 = vld [vmem:[%s227 + $0x48] sm:$0x3]
        %v238 = vld [vmem:[%s2] sm:$0xff]
        %v239 = vld [vmem:[%s2 + $0x8] sm:$0xff]
        %v240 = vld [vmem:[%s2 + $0x10] sm:$0xff]
        %v241 = vld [vmem:[%s2 + $0x18] sm:$0xff]
        %v242 = vld [vmem:[%s2 + $0x20] sm:$0xff]
        %v243 = vld [vmem:[%s2 + $0x28] sm:$0xff]
        %v244 = vld [vmem:[%s2 + $0x30] sm:$0xff]
        %v245 = vld [vmem:[%s2 + $0x38] sm:$0xff]
        %v246 = vld [vmem:[%s2 + $0x40] sm:$0xff]
        %v247 = vld [vmem:[%s2 + $0x48] sm:$0xff]
        %v248 = vld [vmem:[%s2 + $0x50] sm:$0xff]
        %v249 = vld [vmem:[%s2 + $0x58] sm:$0xff]
        %v250 = vld [vmem:[%s2 + $0x60] sm:$0xff]
        %v251 = vld [vmem:[%s2 + $0x68] sm:$0xff]
        %v252 = vld [vmem:[%s2 + $0x70] sm:$0xff]
        %v253 = vld [vmem:[%s2 + $0x78] sm:$0xff]
        %v254 = vld [vmem:[%s2 + $0x80] sm:$0xff]
        %s255 = scalar_lea.vmem %s2, 136
        %v256 = vld [vmem:[%s255] sm:$0xff]
        %v257 = vld [vmem:[%s255 + $0x8] sm:$0xff]
        %v258 = vld [vmem:[%s255 + $0x10] sm:$0xff]
        %v259 = vld [vmem:[%s255 + $0x18] sm:$0xff]
        %v260 = vld [vmem:[%s255 + $0x20] sm:$0xff]
        %v261 = vld [vmem:[%s255 + $0x28] sm:$0xff]
        %v262 = vld [vmem:[%s255 + $0x30] sm:$0xff]
        %v263 = vld [vmem:[%s255 + $0x38] sm:$0xff]
        %v264 = vld [vmem:[%s255 + $0x40] sm:$0xff]
        %v265 = vld [vmem:[%s255 + $0x48] sm:$0xff]
        %v266 = vld [vmem:[%s255 + $0x50] sm:$0xff]
        %v267 = vld [vmem:[%s255 + $0x58] sm:$0xff]
        %v268 = vld [vmem:[%s255 + $0x60] sm:$0xff]
        %v269 = vld [vmem:[%s255 + $0x68] sm:$0xff]
        %v270 = vld [vmem:[%s255 + $0x70] sm:$0xff]
        %v271 = vld [vmem:[%s255 + $0x78] sm:$0xff]
        %v272 = vld [vmem:[%s255 + $0x80] sm:$0xff]
        %vm283 = vcmask 1046528
        %v284 = vrot.slane %v228, 1
        %v285 = vrot.slane %v230, 1
        %v286 = vsel %vm283, %v284, %v285
        %v287 = vrot.slane %v229, 1
        %v288 = vrot.slane %v231, 1
        %v289 = vsel %vm283, %v287, %v288
        %v290 = vrot.slane %v232, 1
        %v291 = vsel %vm283, %v285, %v290
        %v292 = vrot.slane %v233, 1
        %v293 = vsel %vm283, %v288, %v292
        %v294 = vrot.slane %v234, 1
        %v295 = vsel %vm283, %v290, %v294
        %v296 = vrot.slane %v235, 1
        %v297 = vsel %vm283, %v292, %v296
        %v298 = vrot.slane %v236, 1
        %v299 = vsel %vm283, %v294, %v298
        %v300 = vrot.slane %v237, 1
        %v301 = vsel %vm283, %v296, %v300
        %vm306 = vcmask 64512
        %v307 = vsel %vm306, %v289, 0
        %v309 = vsel %vm306, %v293, 0
        %v311 = vsel %vm306, %v297, 0
        %v313 = vsel %vm306, %v301, 0
        %315 = vmatprep.subr.mxu0 0.0
        %316 = vmatpush1.msra.mxu0 %v271
        %317 = vmatprep.subr.mxu0 0.0
        %318 = vmatpush1.msra.mxu0 %v270
        %319 = vmatprep.subr.mxu0 0.0
        %320 = vmatpush1.msra.mxu0 %v269
        %321 = vmatprep.subr.mxu0 0.0
        %322 = vmatpush1.msra.mxu0 %v268
        %323 = vmatprep.subr.mxu0 0.0
        %324 = vmatpush1.msra.mxu0 %v267
        %325 = vmatprep.subr.mxu0 0.0
        %326 = vmatpush1.msra.mxu0 %v266
        %327 = vmatprep.subr.mxu0 0.0
        %328 = vmatpush1.msra.mxu0 %v265
        %329 = vmatprep.subr.mxu0 0.0
        %330 = vmatpush1.msra.mxu0 %v264
        %331 = vmatprep.subr.mxu0 0.0
        %332 = vmatpush1.msra.mxu0 %v263
        %333 = vmatprep.subr.mxu0 0.0
        %334 = vmatpush1.msra.mxu0 %v262
        %335 = vmatprep.subr.mxu0 0.0
        %336 = vmatpush1.msra.mxu0 %v261
        %337 = vmatprep.subr.mxu0 0.0
        %338 = vmatpush1.msra.mxu0 %v260
        %339 = vmatprep.subr.mxu0 0.0
        %340 = vmatpush1.msra.mxu0 %v259
        %341 = vmatprep.subr.mxu0 0.0
        %342 = vmatpush1.msra.mxu0 %v258
        %343 = vmatprep.subr.mxu0 0.0
        %344 = vmatpush1.msra.mxu0 %v257
        %345 = vmatprep.subr.mxu0 0.0
        %346 = vmatpush1.msra.mxu0 %v256
        %347 = vmatprep.subr.mxu0 0.0
        %348 = vmatpush2.msra.mxu0 0.0
        %349 = vmatprep.subr.mxu0 0.0
        %350 = vmatpush2.msra.mxu0 0.0
        %351 = vmatprep.subr.mxu0 0.0
        %352 = vmatpush2.msra.mxu0 0.0
        %353 = vmatprep.subr.mxu0 0.0
        %354 = vmatpush2.msra.mxu0 0.0
        %355 = vmatprep.subr.mxu0 0.0
        %356 = vmatpush2.msra.mxu0 0.0
        %357 = vmatprep.subr.mxu0 0.0
        %358 = vmatpush2.msra.mxu0 0.0
        %359 = vmatprep.subr.mxu0 0.0
        %360 = vmatpush2.msra.mxu0 0.0
        %361 = vmatprep.subr.mxu0 0.0
        %362 = vmatpush2.msra.mxu0 0.0
        %363 = vmatprep.subr.mxu0 0.0
        %364 = vmatpush2.msra.mxu0 0.0
        %365 = vmatprep.subr.mxu0 0.0
        %366 = vmatpush2.msra.mxu0 0.0
        %367 = vmatprep.subr.mxu0 0.0
        %368 = vmatpush2.msra.mxu0 0.0
        %369 = vmatprep.subr.mxu0 0.0
        %370 = vmatpush2.msra.mxu0 0.0
        %371 = vmatprep.subr.mxu0 0.0
        %372 = vmatpush2.msra.mxu0 0.0
        %373 = vmatprep.subr.mxu0 0.0
        %374 = vmatpush2.msra.mxu0 0.0
        %375 = vmatprep.subr.mxu0 0.0
        %376 = vmatpush2.msra.mxu0 0.0
        %377 = vmatprep.subr.mxu0 0.0
        %378 = vmatpush2.msra.mxu0 %v272
        %379 = vmatprep.mubr.f32.mxu0 %v307
        %380 = vmatmul.mubr.f32.gmra.mxu0 %v286
        %v381 = vpop.f32.mrf.mxu0
        %v382 = vadd.f32 0.0, %v381
        %v383 = vpop.f32.mrf.mxu0
        %384 = vmatprep.mubr.f32.mxu0 %v309
        %385 = vmatmul.mubr.f32.gmra.mxu0 %v291
        %v386 = vpop.f32.mrf.mxu0
        %v387 = vadd.f32 0.0, %v386
        %v388 = vpop.f32.mrf.mxu0
        %389 = vmatprep.mubr.f32.mxu0 %v311
        %390 = vmatmul.mubr.f32.gmra.mxu0 %v295
        %v391 = vpop.f32.mrf.mxu0
        %v392 = vadd.f32 0.0, %v391
        %v393 = vpop.f32.mrf.mxu0
        %394 = vmatprep.mubr.f32.mxu0 %v313
        %395 = vmatmul.mubr.f32.gmra.mxu0 %v299
        %v396 = vpop.f32.mrf.mxu0
        %v397 = vadd.f32 0.0, %v396
        %v398 = vpop.f32.mrf.mxu0
        %399 = vdwg.mxu0
        %v400 = vsel %vm306, %v229, 0
        %v402 = vsel %vm306, %v231, 0
        %v404 = vsel %vm306, %v233, 0
        %v406 = vsel %vm306, %v235, 0
        %408 = vmatprep.subr.mxu0 0.0
        %409 = vmatpush1.msra.mxu0 %v253
        %410 = vmatprep.subr.mxu0 0.0
        %411 = vmatpush1.msra.mxu0 %v252
        %412 = vmatprep.subr.mxu0 0.0
        %413 = vmatpush1.msra.mxu0 %v251
        %414 = vmatprep.subr.mxu0 0.0
        %415 = vmatpush1.msra.mxu0 %v250
        %416 = vmatprep.subr.mxu0 0.0
        %417 = vmatpush1.msra.mxu0 %v249
        %418 = vmatprep.subr.mxu0 0.0
        %419 = vmatpush1.msra.mxu0 %v248
        %420 = vmatprep.subr.mxu0 0.0
        %421 = vmatpush1.msra.mxu0 %v247
        %422 = vmatprep.subr.mxu0 0.0
        %423 = vmatpush1.msra.mxu0 %v246
        %424 = vmatprep.subr.mxu0 0.0
        %425 = vmatpush1.msra.mxu0 %v245
        %426 = vmatprep.subr.mxu0 0.0
        %427 = vmatpush1.msra.mxu0 %v244
        %428 = vmatprep.subr.mxu0 0.0
        %429 = vmatpush1.msra.mxu0 %v243
        %430 = vmatprep.subr.mxu0 0.0
        %431 = vmatpush1.msra.mxu0 %v242
        %432 = vmatprep.subr.mxu0 0.0
        %433 = vmatpush1.msra.mxu0 %v241
        %434 = vmatprep.subr.mxu0 0.0
        %435 = vmatpush1.msra.mxu0 %v240
        %436 = vmatprep.subr.mxu0 0.0
        %437 = vmatpush1.msra.mxu0 %v239
        %438 = vmatprep.subr.mxu0 0.0
        %439 = vmatpush1.msra.mxu0 %v238
        %440 = vmatprep.subr.mxu0 0.0
        %441 = vmatpush2.msra.mxu0 0.0
        %442 = vmatprep.subr.mxu0 0.0
        %443 = vmatpush2.msra.mxu0 0.0
        %444 = vmatprep.subr.mxu0 0.0
        %445 = vmatpush2.msra.mxu0 0.0
        %446 = vmatprep.subr.mxu0 0.0
        %447 = vmatpush2.msra.mxu0 0.0
        %448 = vmatprep.subr.mxu0 0.0
        %449 = vmatpush2.msra.mxu0 0.0
        %450 = vmatprep.subr.mxu0 0.0
        %451 = vmatpush2.msra.mxu0 0.0
        %452 = vmatprep.subr.mxu0 0.0
        %453 = vmatpush2.msra.mxu0 0.0
        %454 = vmatprep.subr.mxu0 0.0
        %455 = vmatpush2.msra.mxu0 0.0
        %456 = vmatprep.subr.mxu0 0.0
        %457 = vmatpush2.msra.mxu0 0.0
        %458 = vmatprep.subr.mxu0 0.0
        %459 = vmatpush2.msra.mxu0 0.0
        %460 = vmatprep.subr.mxu0 0.0
        %461 = vmatpush2.msra.mxu0 0.0
        %462 = vmatprep.subr.mxu0 0.0
        %463 = vmatpush2.msra.mxu0 0.0
        %464 = vmatprep.subr.mxu0 0.0
        %465 = vmatpush2.msra.mxu0 0.0
        %466 = vmatprep.subr.mxu0 0.0
        %467 = vmatpush2.msra.mxu0 0.0
        %468 = vmatprep.subr.mxu0 0.0
        %469 = vmatpush2.msra.mxu0 0.0
        %470 = vmatprep.subr.mxu0 0.0
        %471 = vmatpush2.msra.mxu0 %v254
        %472 = vmatprep.mubr.f32.mxu0 %v400
        %473 = vmatmul.mubr.f32.gmra.mxu0 %v228
        %v474 = vpop.f32.mrf.mxu0
        %v475 = vadd.f32 %v382, %v474
        %v476 = vpop.f32.mrf.mxu0
        %477 = vmatprep.mubr.f32.mxu0 %v402
        %478 = vmatmul.mubr.f32.gmra.mxu0 %v230
        %v479 = vpop.f32.mrf.mxu0
        %v480 = vadd.f32 %v387, %v479
        %v481 = vpop.f32.mrf.mxu0
        %482 = vmatprep.mubr.f32.mxu0 %v404
        %483 = vmatmul.mubr.f32.gmra.mxu0 %v232
        %v484 = vpop.f32.mrf.mxu0
        %v485 = vadd.f32 %v392, %v484
        %v486 = vpop.f32.mrf.mxu0
        %487 = vmatprep.mubr.f32.mxu0 %v406
        %488 = vmatmul.mubr.f32.gmra.mxu0 %v234
        %v489 = vpop.f32.mrf.mxu0
        %v490 = vadd.f32 %v397, %v489
        %v491 = vpop.f32.mrf.mxu0
        %492 = vdwg.mxu0
        %s493 = scalar_lea.vmem %s2, 272
        %v494 = vld [vmem:[%s493] sm:$0xff]
        %v495 = vld [vmem:[%s493 + $0x8] sm:$0xff]
        %v496 = vld [vmem:[%s493 + $0x10] sm:$0xff]
        %v497 = vld [vmem:[%s493 + $0x18] sm:$0xff]
        %v498 = vld [vmem:[%s493 + $0x20] sm:$0xff]
        %v499 = vld [vmem:[%s493 + $0x28] sm:$0xff]
        %v500 = vld [vmem:[%s493 + $0x30] sm:$0xff]
        %v501 = vld [vmem:[%s493 + $0x38] sm:$0xff]
        %v502 = vld [vmem:[%s493 + $0x40] sm:$0xff]
        %v503 = vld [vmem:[%s493 + $0x48] sm:$0xff]
        %v504 = vld [vmem:[%s493 + $0x50] sm:$0xff]
        %v505 = vld [vmem:[%s493 + $0x58] sm:$0xff]
        %v506 = vld [vmem:[%s493 + $0x60] sm:$0xff]
        %v507 = vld [vmem:[%s493 + $0x68] sm:$0xff]
        %v508 = vld [vmem:[%s493 + $0x70] sm:$0xff]
        %v509 = vld [vmem:[%s493 + $0x78] sm:$0xff]
        %v510 = vld [vmem:[%s493 + $0x80] sm:$0xff]
        %vm511 = vcmask 1045504
        %v512 = vrot.slane %v228, 2
        %v513 = vrot.slane %v230, 2
        %v514 = vsel %vm511, %v512, %v513
        %v515 = vrot.slane %v229, 2
        %v516 = vrot.slane %v231, 2
        %v517 = vsel %vm511, %v515, %v516
        %v518 = vrot.slane %v232, 2
        %v519 = vsel %vm511, %v513, %v518
        %v520 = vrot.slane %v233, 2
        %v521 = vsel %vm511, %v516, %v520
        %v522 = vrot.slane %v234, 2
        %v523 = vsel %vm511, %v518, %v522
        %v524 = vrot.slane %v235, 2
        %v525 = vsel %vm511, %v520, %v524
        %v526 = vrot.slane %v236, 2
        %v527 = vsel %vm511, %v522, %v526
        %v528 = vrot.slane %v237, 2
        %v529 = vsel %vm511, %v524, %v528
        %v534 = vsel %vm306, %v517, 0
        %v536 = vsel %vm306, %v521, 0
        %v538 = vsel %vm306, %v525, 0
        %v540 = vsel %vm306, %v529, 0
        %542 = vmatprep.subr.mxu0 0.0
        %543 = vmatpush1.msra.mxu0 %v509
        %544 = vmatprep.subr.mxu0 0.0
        %545 = vmatpush1.msra.mxu0 %v508
        %546 = vmatprep.subr.mxu0 0.0
        %547 = vmatpush1.msra.mxu0 %v507
        %548 = vmatprep.subr.mxu0 0.0
        %549 = vmatpush1.msra.mxu0 %v506
        %550 = vmatprep.subr.mxu0 0.0
        %551 = vmatpush1.msra.mxu0 %v505
        %552 = vmatprep.subr.mxu0 0.0
        %553 = vmatpush1.msra.mxu0 %v504
        %554 = vmatprep.subr.mxu0 0.0
        %555 = vmatpush1.msra.mxu0 %v503
        %556 = vmatprep.subr.mxu0 0.0
        %557 = vmatpush1.msra.mxu0 %v502
        %558 = vmatprep.subr.mxu0 0.0
        %559 = vmatpush1.msra.mxu0 %v501
        %560 = vmatprep.subr.mxu0 0.0
        %561 = vmatpush1.msra.mxu0 %v500
        %562 = vmatprep.subr.mxu0 0.0
        %563 = vmatpush1.msra.mxu0 %v499
        %564 = vmatprep.subr.mxu0 0.0
        %565 = vmatpush1.msra.mxu0 %v498
        %566 = vmatprep.subr.mxu0 0.0
        %567 = vmatpush1.msra.mxu0 %v497
        %568 = vmatprep.subr.mxu0 0.0
        %569 = vmatpush1.msra.mxu0 %v496
        %570 = vmatprep.subr.mxu0 0.0
        %571 = vmatpush1.msra.mxu0 %v495
        %572 = vmatprep.subr.mxu0 0.0
        %573 = vmatpush1.msra.mxu0 %v494
        %574 = vmatprep.subr.mxu0 0.0
        %575 = vmatpush2.msra.mxu0 0.0
        %576 = vmatprep.subr.mxu0 0.0
        %577 = vmatpush2.msra.mxu0 0.0
        %578 = vmatprep.subr.mxu0 0.0
        %579 = vmatpush2.msra.mxu0 0.0
        %580 = vmatprep.subr.mxu0 0.0
        %581 = vmatpush2.msra.mxu0 0.0
        %582 = vmatprep.subr.mxu0 0.0
        %583 = vmatpush2.msra.mxu0 0.0
        %584 = vmatprep.subr.mxu0 0.0
        %585 = vmatpush2.msra.mxu0 0.0
        %586 = vmatprep.subr.mxu0 0.0
        %587 = vmatpush2.msra.mxu0 0.0
        %588 = vmatprep.subr.mxu0 0.0
        %589 = vmatpush2.msra.mxu0 0.0
        %590 = vmatprep.subr.mxu0 0.0
        %591 = vmatpush2.msra.mxu0 0.0
        %592 = vmatprep.subr.mxu0 0.0
        %593 = vmatpush2.msra.mxu0 0.0
        %594 = vmatprep.subr.mxu0 0.0
        %595 = vmatpush2.msra.mxu0 0.0
        %596 = vmatprep.subr.mxu0 0.0
        %597 = vmatpush2.msra.mxu0 0.0
        %598 = vmatprep.subr.mxu0 0.0
        %599 = vmatpush2.msra.mxu0 0.0
        %600 = vmatprep.subr.mxu0 0.0
        %601 = vmatpush2.msra.mxu0 0.0
        %602 = vmatprep.subr.mxu0 0.0
        %603 = vmatpush2.msra.mxu0 0.0
        %604 = vmatprep.subr.mxu0 0.0
        %605 = vmatpush2.msra.mxu0 %v510
        %606 = vmatprep.mubr.f32.mxu0 %v534
        %607 = vmatmul.mubr.f32.gmra.mxu0 %v514
        %v608 = vpop.f32.mrf.mxu0
        %v609 = vadd.f32 0.0, %v608
        %v610 = vpop.f32.mrf.mxu0
        %611 = vmatprep.mubr.f32.mxu0 %v536
        %612 = vmatmul.mubr.f32.gmra.mxu0 %v519
        %v613 = vpop.f32.mrf.mxu0
        %v614 = vadd.f32 0.0, %v613
        %v615 = vpop.f32.mrf.mxu0
        %616 = vmatprep.mubr.f32.mxu0 %v538
        %617 = vmatmul.mubr.f32.gmra.mxu0 %v523
        %v618 = vpop.f32.mrf.mxu0
        %v619 = vadd.f32 0.0, %v618
        %v620 = vpop.f32.mrf.mxu0
        %621 = vmatprep.mubr.f32.mxu0 %v540
        %622 = vmatmul.mubr.f32.gmra.mxu0 %v527
        %v623 = vpop.f32.mrf.mxu0
        %v624 = vadd.f32 0.0, %v623
        %v625 = vpop.f32.mrf.mxu0
        %626 = vdwg.mxu0
        %v627 = vadd.f32 %v475, %v609
        %v628 = vadd.f32 %v480, %v614
        %v629 = vadd.f32 %v485, %v619
        %v630 = vadd.f32 %v490, %v624
        %s631 = sadd.s32 %s220, 1
        %s632 = smul.u32 %s631, 10
        %s633 = smul.addr %s632, 8
        %s634 = scalar_lea.vmem %s207, %s633
        %v635 = vld [vmem:[%s634] sm:$0xff]
        %v636 = vld [vmem:[%s634 + $0x8] sm:$0xff]
        %v637 = vld [vmem:[%s634 + $0x10] sm:$0xff]
        %v638 = vld [vmem:[%s634 + $0x18] sm:$0xff]
        %v639 = vld [vmem:[%s634 + $0x20] sm:$0xff]
        %v640 = vld [vmem:[%s634 + $0x28] sm:$0xff]
        %v641 = vld [vmem:[%s634 + $0x30] sm:$0xff]
        %v642 = vld [vmem:[%s634 + $0x38] sm:$0xff]
        %v643 = vld [vmem:[%s634 + $0x40] sm:$0x3]
        %v644 = vld [vmem:[%s634 + $0x48] sm:$0x3]
        %s645 = scalar_lea.vmem %s2, 408
        %v646 = vld [vmem:[%s645] sm:$0xff]
        %v647 = vld [vmem:[%s645 + $0x8] sm:$0xff]
        %v648 = vld [vmem:[%s645 + $0x10] sm:$0xff]
        %v649 = vld [vmem:[%s645 + $0x18] sm:$0xff]
        %v650 = vld [vmem:[%s645 + $0x20] sm:$0xff]
        %v651 = vld [vmem:[%s645 + $0x28] sm:$0xff]
        %v652 = vld [vmem:[%s645 + $0x30] sm:$0xff]
        %v653 = vld [vmem:[%s645 + $0x38] sm:$0xff]
        %v654 = vld [vmem:[%s645 + $0x40] sm:$0xff]
        %v655 = vld [vmem:[%s645 + $0x48] sm:$0xff]
        %v656 = vld [vmem:[%s645 + $0x50] sm:$0xff]
        %v657 = vld [vmem:[%s645 + $0x58] sm:$0xff]
        %v658 = vld [vmem:[%s645 + $0x60] sm:$0xff]
        %v659 = vld [vmem:[%s645 + $0x68] sm:$0xff]
        %v660 = vld [vmem:[%s645 + $0x70] sm:$0xff]
        %v661 = vld [vmem:[%s645 + $0x78] sm:$0xff]
        %v662 = vld [vmem:[%s645 + $0x80] sm:$0xff]
        %v664 = vsel %vm306, %v636, 0
        %v667 = vsel %vm306, %v638, 0
        %v670 = vsel %vm306, %v640, 0
        %v673 = vsel %vm306, %v642, 0
        %675 = vmatprep.subr.mxu0 0.0
        %676 = vmatpush1.msra.mxu0 %v661
        %677 = vmatprep.subr.mxu0 0.0
        %678 = vmatpush1.msra.mxu0 %v660
        %679 = vmatprep.subr.mxu0 0.0
        %680 = vmatpush1.msra.mxu0 %v659
        %681 = vmatprep.subr.mxu0 0.0
        %682 = vmatpush1.msra.mxu0 %v658
        %683 = vmatprep.subr.mxu0 0.0
        %684 = vmatpush1.msra.mxu0 %v657
        %685 = vmatprep.subr.mxu0 0.0
        %686 = vmatpush1.msra.mxu0 %v656
        %687 = vmatprep.subr.mxu0 0.0
        %688 = vmatpush1.msra.mxu0 %v655
        %689 = vmatprep.subr.mxu0 0.0
        %690 = vmatpush1.msra.mxu0 %v654
        %691 = vmatprep.subr.mxu0 0.0
        %692 = vmatpush1.msra.mxu0 %v653
        %693 = vmatprep.subr.mxu0 0.0
        %694 = vmatpush1.msra.mxu0 %v652
        %695 = vmatprep.subr.mxu0 0.0
        %696 = vmatpush1.msra.mxu0 %v651
        %697 = vmatprep.subr.mxu0 0.0
        %698 = vmatpush1.msra.mxu0 %v650
        %699 = vmatprep.subr.mxu0 0.0
        %700 = vmatpush1.msra.mxu0 %v649
        %701 = vmatprep.subr.mxu0 0.0
        %702 = vmatpush1.msra.mxu0 %v648
        %703 = vmatprep.subr.mxu0 0.0
        %704 = vmatpush1.msra.mxu0 %v647
        %705 = vmatprep.subr.mxu0 0.0
        %706 = vmatpush1.msra.mxu0 %v646
        %707 = vmatprep.subr.mxu0 0.0
        %708 = vmatpush2.msra.mxu0 0.0
        %709 = vmatprep.subr.mxu0 0.0
        %710 = vmatpush2.msra.mxu0 0.0
        %711 = vmatprep.subr.mxu0 0.0
        %712 = vmatpush2.msra.mxu0 0.0
        %713 = vmatprep.subr.mxu0 0.0
        %714 = vmatpush2.msra.mxu0 0.0
        %715 = vmatprep.subr.mxu0 0.0
        %716 = vmatpush2.msra.mxu0 0.0
        %717 = vmatprep.subr.mxu0 0.0
        %718 = vmatpush2.msra.mxu0 0.0
        %719 = vmatprep.subr.mxu0 0.0
        %720 = vmatpush2.msra.mxu0 0.0
        %721 = vmatprep.subr.mxu0 0.0
        %722 = vmatpush2.msra.mxu0 0.0
        %723 = vmatprep.subr.mxu0 0.0
        %724 = vmatpush2.msra.mxu0 0.0
        %725 = vmatprep.subr.mxu0 0.0
        %726 = vmatpush2.msra.mxu0 0.0
        %727 = vmatprep.subr.mxu0 0.0
        %728 = vmatpush2.msra.mxu0 0.0
        %729 = vmatprep.subr.mxu0 0.0
        %730 = vmatpush2.msra.mxu0 0.0
        %731 = vmatprep.subr.mxu0 0.0
        %732 = vmatpush2.msra.mxu0 0.0
        %733 = vmatprep.subr.mxu0 0.0
        %734 = vmatpush2.msra.mxu0 0.0
        %735 = vmatprep.subr.mxu0 0.0
        %736 = vmatpush2.msra.mxu0 0.0
        %737 = vmatprep.subr.mxu0 0.0
        %738 = vmatpush2.msra.mxu0 %v662
        %739 = vmatprep.mubr.f32.mxu0 %v664
        %740 = vmatmul.mubr.f32.gmra.mxu0 %v635
        %v741 = vpop.f32.mrf.mxu0
        %v742 = vadd.f32 0.0, %v741
        %v743 = vpop.f32.mrf.mxu0
        %744 = vmatprep.mubr.f32.mxu0 %v667
        %745 = vmatmul.mubr.f32.gmra.mxu0 %v637
        %v746 = vpop.f32.mrf.mxu0
        %v747 = vadd.f32 0.0, %v746
        %v748 = vpop.f32.mrf.mxu0
        %749 = vmatprep.mubr.f32.mxu0 %v670
        %750 = vmatmul.mubr.f32.gmra.mxu0 %v639
        %v751 = vpop.f32.mrf.mxu0
        %v752 = vadd.f32 0.0, %v751
        %v753 = vpop.f32.mrf.mxu0
        %754 = vmatprep.mubr.f32.mxu0 %v673
        %755 = vmatmul.mubr.f32.gmra.mxu0 %v641
        %v756 = vpop.f32.mrf.mxu0
        %v757 = vadd.f32 0.0, %v756
        %v758 = vpop.f32.mrf.mxu0
        %759 = vdwg.mxu0
        %v760 = vadd.f32 %v627, %v742
        %v761 = vadd.f32 %v628, %v747
        %v762 = vadd.f32 %v629, %v752
        %v763 = vadd.f32 %v630, %v757
        %s764 = scalar_lea.vmem %s2, 544
        %v765 = vld [vmem:[%s764] sm:$0xff]
        %v766 = vld [vmem:[%s764 + $0x8] sm:$0xff]
        %v767 = vld [vmem:[%s764 + $0x10] sm:$0xff]
        %v768 = vld [vmem:[%s764 + $0x18] sm:$0xff]
        %v769 = vld [vmem:[%s764 + $0x20] sm:$0xff]
        %v770 = vld [vmem:[%s764 + $0x28] sm:$0xff]
        %v771 = vld [vmem:[%s764 + $0x30] sm:$0xff]
        %v772 = vld [vmem:[%s764 + $0x38] sm:$0xff]
        %v773 = vld [vmem:[%s764 + $0x40] sm:$0xff]
        %v774 = vld [vmem:[%s764 + $0x48] sm:$0xff]
        %v775 = vld [vmem:[%s764 + $0x50] sm:$0xff]
        %v776 = vld [vmem:[%s764 + $0x58] sm:$0xff]
        %v777 = vld [vmem:[%s764 + $0x60] sm:$0xff]
        %v778 = vld [vmem:[%s764 + $0x68] sm:$0xff]
        %v779 = vld [vmem:[%s764 + $0x70] sm:$0xff]
        %v780 = vld [vmem:[%s764 + $0x78] sm:$0xff]
        %v781 = vld [vmem:[%s764 + $0x80] sm:$0xff]
        %v788 = vrot.slane %v635, 1
        %v789 = vrot.slane %v637, 1
        %v790 = vsel %vm283, %v788, %v789
        %v791 = vrot.slane %v636, 1
        %v792 = vrot.slane %v638, 1
        %v793 = vsel %vm283, %v791, %v792
        %v794 = vrot.slane %v639, 1
        %v795 = vsel %vm283, %v789, %v794
        %v796 = vrot.slane %v640, 1
        %v797 = vsel %vm283, %v792, %v796
        %v798 = vrot.slane %v641, 1
        %v799 = vsel %vm283, %v794, %v798
        %v800 = vrot.slane %v642, 1
        %v801 = vsel %vm283, %v796, %v800
        %v802 = vrot.slane %v643, 1
        %v803 = vsel %vm283, %v798, %v802
        %v804 = vrot.slane %v644, 1
        %v805 = vsel %vm283, %v800, %v804
        %v810 = vsel %vm306, %v793, 0
        %v812 = vsel %vm306, %v797, 0
        %v814 = vsel %vm306, %v801, 0
        %v816 = vsel %vm306, %v805, 0
        %818 = vmatprep.subr.mxu0 0.0
        %819 = vmatpush1.msra.mxu0 %v780
        %820 = vmatprep.subr.mxu0 0.0
        %821 = vmatpush1.msra.mxu0 %v779
        %822 = vmatprep.subr.mxu0 0.0
        %823 = vmatpush1.msra.mxu0 %v778
        %824 = vmatprep.subr.mxu0 0.0
        %825 = vmatpush1.msra.mxu0 %v777
        %826 = vmatprep.subr.mxu0 0.0
        %827 = vmatpush1.msra.mxu0 %v776
        %828 = vmatprep.subr.mxu0 0.0
        %829 = vmatpush1.msra.mxu0 %v775
        %830 = vmatprep.subr.mxu0 0.0
        %831 = vmatpush1.msra.mxu0 %v774
        %832 = vmatprep.subr.mxu0 0.0
        %833 = vmatpush1.msra.mxu0 %v773
        %834 = vmatprep.subr.mxu0 0.0
        %835 = vmatpush1.msra.mxu0 %v772
        %836 = vmatprep.subr.mxu0 0.0
        %837 = vmatpush1.msra.mxu0 %v771
        %838 = vmatprep.subr.mxu0 0.0
        %839 = vmatpush1.msra.mxu0 %v770
        %840 = vmatprep.subr.mxu0 0.0
        %841 = vmatpush1.msra.mxu0 %v769
        %842 = vmatprep.subr.mxu0 0.0
        %843 = vmatpush1.msra.mxu0 %v768
        %844 = vmatprep.subr.mxu0 0.0
        %845 = vmatpush1.msra.mxu0 %v767
        %846 = vmatprep.subr.mxu0 0.0
        %847 = vmatpush1.msra.mxu0 %v766
        %848 = vmatprep.subr.mxu0 0.0
        %849 = vmatpush1.msra.mxu0 %v765
        %850 = vmatprep.subr.mxu0 0.0
        %851 = vmatpush2.msra.mxu0 0.0
        %852 = vmatprep.subr.mxu0 0.0
        %853 = vmatpush2.msra.mxu0 0.0
        %854 = vmatprep.subr.mxu0 0.0
        %855 = vmatpush2.msra.mxu0 0.0
        %856 = vmatprep.subr.mxu0 0.0
        %857 = vmatpush2.msra.mxu0 0.0
        %858 = vmatprep.subr.mxu0 0.0
        %859 = vmatpush2.msra.mxu0 0.0
        %860 = vmatprep.subr.mxu0 0.0
        %861 = vmatpush2.msra.mxu0 0.0
        %862 = vmatprep.subr.mxu0 0.0
        %863 = vmatpush2.msra.mxu0 0.0
        %864 = vmatprep.subr.mxu0 0.0
        %865 = vmatpush2.msra.mxu0 0.0
        %866 = vmatprep.subr.mxu0 0.0
        %867 = vmatpush2.msra.mxu0 0.0
        %868 = vmatprep.subr.mxu0 0.0
        %869 = vmatpush2.msra.mxu0 0.0
        %870 = vmatprep.subr.mxu0 0.0
        %871 = vmatpush2.msra.mxu0 0.0
        %872 = vmatprep.subr.mxu0 0.0
        %873 = vmatpush2.msra.mxu0 0.0
        %874 = vmatprep.subr.mxu0 0.0
        %875 = vmatpush2.msra.mxu0 0.0
        %876 = vmatprep.subr.mxu0 0.0
        %877 = vmatpush2.msra.mxu0 0.0
        %878 = vmatprep.subr.mxu0 0.0
        %879 = vmatpush2.msra.mxu0 0.0
        %880 = vmatprep.subr.mxu0 0.0
        %881 = vmatpush2.msra.mxu0 %v781
        %882 = vmatprep.mubr.f32.mxu0 %v810
        %883 = vmatmul.mubr.f32.gmra.mxu0 %v790
        %v884 = vpop.f32.mrf.mxu0
        %v885 = vadd.f32 0.0, %v884
        %v886 = vpop.f32.mrf.mxu0
        %887 = vmatprep.mubr.f32.mxu0 %v812
        %888 = vmatmul.mubr.f32.gmra.mxu0 %v795
        %v889 = vpop.f32.mrf.mxu0
        %v890 = vadd.f32 0.0, %v889
        %v891 = vpop.f32.mrf.mxu0
        %892 = vmatprep.mubr.f32.mxu0 %v814
        %893 = vmatmul.mubr.f32.gmra.mxu0 %v799
        %v894 = vpop.f32.mrf.mxu0
        %v895 = vadd.f32 0.0, %v894
        %v896 = vpop.f32.mrf.mxu0
        %897 = vmatprep.mubr.f32.mxu0 %v816
        %898 = vmatmul.mubr.f32.gmra.mxu0 %v803
        %v899 = vpop.f32.mrf.mxu0
        %v900 = vadd.f32 0.0, %v899
        %v901 = vpop.f32.mrf.mxu0
        %902 = vdwg.mxu0
        %v903 = vadd.f32 %v760, %v885
        %v904 = vadd.f32 %v761, %v890
        %v905 = vadd.f32 %v762, %v895
        %v906 = vadd.f32 %v763, %v900
        %s907 = scalar_lea.vmem %s2, 680
        %v908 = vld [vmem:[%s907] sm:$0xff]
        %v909 = vld [vmem:[%s907 + $0x8] sm:$0xff]
        %v910 = vld [vmem:[%s907 + $0x10] sm:$0xff]
        %v911 = vld [vmem:[%s907 + $0x18] sm:$0xff]
        %v912 = vld [vmem:[%s907 + $0x20] sm:$0xff]
        %v913 = vld [vmem:[%s907 + $0x28] sm:$0xff]
        %v914 = vld [vmem:[%s907 + $0x30] sm:$0xff]
        %v915 = vld [vmem:[%s907 + $0x38] sm:$0xff]
        %v916 = vld [vmem:[%s907 + $0x40] sm:$0xff]
        %v917 = vld [vmem:[%s907 + $0x48] sm:$0xff]
        %v918 = vld [vmem:[%s907 + $0x50] sm:$0xff]
        %v919 = vld [vmem:[%s907 + $0x58] sm:$0xff]
        %v920 = vld [vmem:[%s907 + $0x60] sm:$0xff]
        %v921 = vld [vmem:[%s907 + $0x68] sm:$0xff]
        %v922 = vld [vmem:[%s907 + $0x70] sm:$0xff]
        %v923 = vld [vmem:[%s907 + $0x78] sm:$0xff]
        %v924 = vld [vmem:[%s907 + $0x80] sm:$0xff]
        %v925 = vrot.slane %v635, 2
        %v926 = vrot.slane %v637, 2
        %v927 = vsel %vm511, %v925, %v926
        %v928 = vrot.slane %v636, 2
        %v929 = vrot.slane %v638, 2
        %v930 = vsel %vm511, %v928, %v929
        %v931 = vrot.slane %v639, 2
        %v932 = vsel %vm511, %v926, %v931
        %v933 = vrot.slane %v640, 2
        %v934 = vsel %vm511, %v929, %v933
        %v935 = vrot.slane %v641, 2
        %v936 = vsel %vm511, %v931, %v935
        %v937 = vrot.slane %v642, 2
        %v938 = vsel %vm511, %v933, %v937
        %v939 = vrot.slane %v643, 2
        %v940 = vsel %vm511, %v935, %v939
        %v941 = vrot.slane %v644, 2
        %v942 = vsel %vm511, %v937, %v941
        %v947 = vsel %vm306, %v930, 0
        %v949 = vsel %vm306, %v934, 0
        %v951 = vsel %vm306, %v938, 0
        %v953 = vsel %vm306, %v942, 0
        %955 = vmatprep.subr.mxu0 0.0
        %956 = vmatpush1.msra.mxu0 %v923
        %957 = vmatprep.subr.mxu0 0.0
        %958 = vmatpush1.msra.mxu0 %v922
        %959 = vmatprep.subr.mxu0 0.0
        %960 = vmatpush1.msra.mxu0 %v921
        %961 = vmatprep.subr.mxu0 0.0
        %962 = vmatpush1.msra.mxu0 %v920
        %963 = vmatprep.subr.mxu0 0.0
        %964 = vmatpush1.msra.mxu0 %v919
        %965 = vmatprep.subr.mxu0 0.0
        %966 = vmatpush1.msra.mxu0 %v918
        %967 = vmatprep.subr.mxu0 0.0
        %968 = vmatpush1.msra.mxu0 %v917
        %969 = vmatprep.subr.mxu0 0.0
        %970 = vmatpush1.msra.mxu0 %v916
        %971 = vmatprep.subr.mxu0 0.0
        %972 = vmatpush1.msra.mxu0 %v915
        %973 = vmatprep.subr.mxu0 0.0
        %974 = vmatpush1.msra.mxu0 %v914
        %975 = vmatprep.subr.mxu0 0.0
        %976 = vmatpush1.msra.mxu0 %v913
        %977 = vmatprep.subr.mxu0 0.0
        %978 = vmatpush1.msra.mxu0 %v912
        %979 = vmatprep.subr.mxu0 0.0
        %980 = vmatpush1.msra.mxu0 %v911
        %981 = vmatprep.subr.mxu0 0.0
        %982 = vmatpush1.msra.mxu0 %v910
        %983 = vmatprep.subr.mxu0 0.0
        %984 = vmatpush1.msra.mxu0 %v909
        %985 = vmatprep.subr.mxu0 0.0
        %986 = vmatpush1.msra.mxu0 %v908
        %987 = vmatprep.subr.mxu0 0.0
        %988 = vmatpush2.msra.mxu0 0.0
        %989 = vmatprep.subr.mxu0 0.0
        %990 = vmatpush2.msra.mxu0 0.0
        %991 = vmatprep.subr.mxu0 0.0
        %992 = vmatpush2.msra.mxu0 0.0
        %993 = vmatprep.subr.mxu0 0.0
        %994 = vmatpush2.msra.mxu0 0.0
        %995 = vmatprep.subr.mxu0 0.0
        %996 = vmatpush2.msra.mxu0 0.0
        %997 = vmatprep.subr.mxu0 0.0
        %998 = vmatpush2.msra.mxu0 0.0
        %999 = vmatprep.subr.mxu0 0.0
        %1000 = vmatpush2.msra.mxu0 0.0
        %1001 = vmatprep.subr.mxu0 0.0
        %1002 = vmatpush2.msra.mxu0 0.0
        %1003 = vmatprep.subr.mxu0 0.0
        %1004 = vmatpush2.msra.mxu0 0.0
        %1005 = vmatprep.subr.mxu0 0.0
        %1006 = vmatpush2.msra.mxu0 0.0
        %1007 = vmatprep.subr.mxu0 0.0
        %1008 = vmatpush2.msra.mxu0 0.0
        %1009 = vmatprep.subr.mxu0 0.0
        %1010 = vmatpush2.msra.mxu0 0.0
        %1011 = vmatprep.subr.mxu0 0.0
        %1012 = vmatpush2.msra.mxu0 0.0
        %1013 = vmatprep.subr.mxu0 0.0
        %1014 = vmatpush2.msra.mxu0 0.0
        %1015 = vmatprep.subr.mxu0 0.0
        %1016 = vmatpush2.msra.mxu0 0.0
        %1017 = vmatprep.subr.mxu0 0.0
        %1018 = vmatpush2.msra.mxu0 %v924
        %1019 = vmatprep.mubr.f32.mxu0 %v947
        %1020 = vmatmul.mubr.f32.gmra.mxu0 %v927
        %v1021 = vpop.f32.mrf.mxu0
        %v1022 = vadd.f32 0.0, %v1021
        %v1023 = vpop.f32.mrf.mxu0
        %1024 = vmatprep.mubr.f32.mxu0 %v949
        %1025 = vmatmul.mubr.f32.gmra.mxu0 %v932
        %v1026 = vpop.f32.mrf.mxu0
        %v1027 = vadd.f32 0.0, %v1026
        %v1028 = vpop.f32.mrf.mxu0
        %1029 = vmatprep.mubr.f32.mxu0 %v951
        %1030 = vmatmul.mubr.f32.gmra.mxu0 %v936
        %v1031 = vpop.f32.mrf.mxu0
        %v1032 = vadd.f32 0.0, %v1031
        %v1033 = vpop.f32.mrf.mxu0
        %1034 = vmatprep.mubr.f32.mxu0 %v953
        %1035 = vmatmul.mubr.f32.gmra.mxu0 %v940
        %v1036 = vpop.f32.mrf.mxu0
        %v1037 = vadd.f32 0.0, %v1036
        %v1038 = vpop.f32.mrf.mxu0
        %1039 = vdwg.mxu0
        %v1040 = vadd.f32 %v903, %v1022
        %v1041 = vadd.f32 %v904, %v1027
        %v1042 = vadd.f32 %v905, %v1032
        %v1043 = vadd.f32 %v906, %v1037
        %s1044 = sadd.s32 %s220, 2
        %s1045 = smul.u32 %s1044, 10
        %s1046 = smul.addr %s1045, 8
        %s1047 = scalar_lea.vmem %s207, %s1046
        %v1048 = vld [vmem:[%s1047] sm:$0xff]
        %v1049 = vld [vmem:[%s1047 + $0x8] sm:$0xff]
        %v1050 = vld [vmem:[%s1047 + $0x10] sm:$0xff]
        %v1051 = vld [vmem:[%s1047 + $0x18] sm:$0xff]
        %v1052 = vld [vmem:[%s1047 + $0x20] sm:$0xff]
        %v1053 = vld [vmem:[%s1047 + $0x28] sm:$0xff]
        %v1054 = vld [vmem:[%s1047 + $0x30] sm:$0xff]
        %v1055 = vld [vmem:[%s1047 + $0x38] sm:$0xff]
        %v1056 = vld [vmem:[%s1047 + $0x40] sm:$0x3]
        %v1057 = vld [vmem:[%s1047 + $0x48] sm:$0x3]
        %s1058 = scalar_lea.vmem %s2, 816
        %v1059 = vld [vmem:[%s1058] sm:$0xff]
        %v1060 = vld [vmem:[%s1058 + $0x8] sm:$0xff]
        %v1061 = vld [vmem:[%s1058 + $0x10] sm:$0xff]
        %v1062 = vld [vmem:[%s1058 + $0x18] sm:$0xff]
        %v1063 = vld [vmem:[%s1058 + $0x20] sm:$0xff]
        %v1064 = vld [vmem:[%s1058 + $0x28] sm:$0xff]
        %v1065 = vld [vmem:[%s1058 + $0x30] sm:$0xff]
        %v1066 = vld [vmem:[%s1058 + $0x38] sm:$0xff]
        %v1067 = vld [vmem:[%s1058 + $0x40] sm:$0xff]
        %v1068 = vld [vmem:[%s1058 + $0x48] sm:$0xff]
        %v1069 = vld [vmem:[%s1058 + $0x50] sm:$0xff]
        %v1070 = vld [vmem:[%s1058 + $0x58] sm:$0xff]
        %v1071 = vld [vmem:[%s1058 + $0x60] sm:$0xff]
        %v1072 = vld [vmem:[%s1058 + $0x68] sm:$0xff]
        %v1073 = vld [vmem:[%s1058 + $0x70] sm:$0xff]
        %v1074 = vld [vmem:[%s1058 + $0x78] sm:$0xff]
        %v1075 = vld [vmem:[%s1058 + $0x80] sm:$0xff]
        %v1077 = vsel %vm306, %v1049, 0
        %v1080 = vsel %vm306, %v1051, 0
        %v1083 = vsel %vm306, %v1053, 0
        %v1086 = vsel %vm306, %v1055, 0
        %1088 = vmatprep.subr.mxu0 0.0
        %1089 = vmatpush1.msra.mxu0 %v1074
        %1090 = vmatprep.subr.mxu0 0.0
        %1091 = vmatpush1.msra.mxu0 %v1073
        %1092 = vmatprep.subr.mxu0 0.0
        %1093 = vmatpush1.msra.mxu0 %v1072
        %1094 = vmatprep.subr.mxu0 0.0
        %1095 = vmatpush1.msra.mxu0 %v1071
        %1096 = vmatprep.subr.mxu0 0.0
        %1097 = vmatpush1.msra.mxu0 %v1070
        %1098 = vmatprep.subr.mxu0 0.0
        %1099 = vmatpush1.msra.mxu0 %v1069
        %1100 = vmatprep.subr.mxu0 0.0
        %1101 = vmatpush1.msra.mxu0 %v1068
        %1102 = vmatprep.subr.mxu0 0.0
        %1103 = vmatpush1.msra.mxu0 %v1067
        %1104 = vmatprep.subr.mxu0 0.0
        %1105 = vmatpush1.msra.mxu0 %v1066
        %1106 = vmatprep.subr.mxu0 0.0
        %1107 = vmatpush1.msra.mxu0 %v1065
        %1108 = vmatprep.subr.mxu0 0.0
        %1109 = vmatpush1.msra.mxu0 %v1064
        %1110 = vmatprep.subr.mxu0 0.0
        %1111 = vmatpush1.msra.mxu0 %v1063
        %1112 = vmatprep.subr.mxu0 0.0
        %1113 = vmatpush1.msra.mxu0 %v1062
        %1114 = vmatprep.subr.mxu0 0.0
        %1115 = vmatpush1.msra.mxu0 %v1061
        %1116 = vmatprep.subr.mxu0 0.0
        %1117 = vmatpush1.msra.mxu0 %v1060
        %1118 = vmatprep.subr.mxu0 0.0
        %1119 = vmatpush1.msra.mxu0 %v1059
        %1120 = vmatprep.subr.mxu0 0.0
        %1121 = vmatpush2.msra.mxu0 0.0
        %1122 = vmatprep.subr.mxu0 0.0
        %1123 = vmatpush2.msra.mxu0 0.0
        %1124 = vmatprep.subr.mxu0 0.0
        %1125 = vmatpush2.msra.mxu0 0.0
        %1126 = vmatprep.subr.mxu0 0.0
        %1127 = vmatpush2.msra.mxu0 0.0
        %1128 = vmatprep.subr.mxu0 0.0
        %1129 = vmatpush2.msra.mxu0 0.0
        %1130 = vmatprep.subr.mxu0 0.0
        %1131 = vmatpush2.msra.mxu0 0.0
        %1132 = vmatprep.subr.mxu0 0.0
        %1133 = vmatpush2.msra.mxu0 0.0
        %1134 = vmatprep.subr.mxu0 0.0
        %1135 = vmatpush2.msra.mxu0 0.0
        %1136 = vmatprep.subr.mxu0 0.0
        %1137 = vmatpush2.msra.mxu0 0.0
        %1138 = vmatprep.subr.mxu0 0.0
        %1139 = vmatpush2.msra.mxu0 0.0
        %1140 = vmatprep.subr.mxu0 0.0
        %1141 = vmatpush2.msra.mxu0 0.0
        %1142 = vmatprep.subr.mxu0 0.0
        %1143 = vmatpush2.msra.mxu0 0.0
        %1144 = vmatprep.subr.mxu0 0.0
        %1145 = vmatpush2.msra.mxu0 0.0
        %1146 = vmatprep.subr.mxu0 0.0
        %1147 = vmatpush2.msra.mxu0 0.0
        %1148 = vmatprep.subr.mxu0 0.0
        %1149 = vmatpush2.msra.mxu0 0.0
        %1150 = vmatprep.subr.mxu0 0.0
        %1151 = vmatpush2.msra.mxu0 %v1075
        %1152 = vmatprep.mubr.f32.mxu0 %v1077
        %1153 = vmatmul.mubr.f32.gmra.mxu0 %v1048
        %v1154 = vpop.f32.mrf.mxu0
        %v1155 = vadd.f32 0.0, %v1154
        %v1156 = vpop.f32.mrf.mxu0
        %1157 = vmatprep.mubr.f32.mxu0 %v1080
        %1158 = vmatmul.mubr.f32.gmra.mxu0 %v1050
        %v1159 = vpop.f32.mrf.mxu0
        %v1160 = vadd.f32 0.0, %v1159
        %v1161 = vpop.f32.mrf.mxu0
        %1162 = vmatprep.mubr.f32.mxu0 %v1083
        %1163 = vmatmul.mubr.f32.gmra.mxu0 %v1052
        %v1164 = vpop.f32.mrf.mxu0
        %v1165 = vadd.f32 0.0, %v1164
        %v1166 = vpop.f32.mrf.mxu0
        %1167 = vmatprep.mubr.f32.mxu0 %v1086
        %1168 = vmatmul.mubr.f32.gmra.mxu0 %v1054
        %v1169 = vpop.f32.mrf.mxu0
        %v1170 = vadd.f32 0.0, %v1169
        %v1171 = vpop.f32.mrf.mxu0
        %1172 = vdwg.mxu0
        %v1173 = vadd.f32 %v1040, %v1155
        %v1174 = vadd.f32 %v1041, %v1160
        %v1175 = vadd.f32 %v1042, %v1165
        %v1176 = vadd.f32 %v1043, %v1170
        %s1177 = scalar_lea.vmem %s2, 952
        %v1178 = vld [vmem:[%s1177] sm:$0xff]
        %v1179 = vld [vmem:[%s1177 + $0x8] sm:$0xff]
        %v1180 = vld [vmem:[%s1177 + $0x10] sm:$0xff]
        %v1181 = vld [vmem:[%s1177 + $0x18] sm:$0xff]
        %v1182 = vld [vmem:[%s1177 + $0x20] sm:$0xff]
        %v1183 = vld [vmem:[%s1177 + $0x28] sm:$0xff]
        %v1184 = vld [vmem:[%s1177 + $0x30] sm:$0xff]
        %v1185 = vld [vmem:[%s1177 + $0x38] sm:$0xff]
        %v1186 = vld [vmem:[%s1177 + $0x40] sm:$0xff]
        %v1187 = vld [vmem:[%s1177 + $0x48] sm:$0xff]
        %v1188 = vld [vmem:[%s1177 + $0x50] sm:$0xff]
        %v1189 = vld [vmem:[%s1177 + $0x58] sm:$0xff]
        %v1190 = vld [vmem:[%s1177 + $0x60] sm:$0xff]
        %v1191 = vld [vmem:[%s1177 + $0x68] sm:$0xff]
        %v1192 = vld [vmem:[%s1177 + $0x70] sm:$0xff]
        %v1193 = vld [vmem:[%s1177 + $0x78] sm:$0xff]
        %v1194 = vld [vmem:[%s1177 + $0x80] sm:$0xff]
        %v1201 = vrot.slane %v1048, 1
        %v1202 = vrot.slane %v1050, 1
        %v1203 = vsel %vm283, %v1201, %v1202
        %v1204 = vrot.slane %v1049, 1
        %v1205 = vrot.slane %v1051, 1
        %v1206 = vsel %vm283, %v1204, %v1205
        %v1207 = vrot.slane %v1052, 1
        %v1208 = vsel %vm283, %v1202, %v1207
        %v1209 = vrot.slane %v1053, 1
        %v1210 = vsel %vm283, %v1205, %v1209
        %v1211 = vrot.slane %v1054, 1
        %v1212 = vsel %vm283, %v1207, %v1211
        %v1213 = vrot.slane %v1055, 1
        %v1214 = vsel %vm283, %v1209, %v1213
        %v1215 = vrot.slane %v1056, 1
        %v1216 = vsel %vm283, %v1211, %v1215
        %v1217 = vrot.slane %v1057, 1
        %v1218 = vsel %vm283, %v1213, %v1217
        %v1223 = vsel %vm306, %v1206, 0
        %v1225 = vsel %vm306, %v1210, 0
        %v1227 = vsel %vm306, %v1214, 0
        %v1229 = vsel %vm306, %v1218, 0
        %1231 = vmatprep.subr.mxu0 0.0
        %1232 = vmatpush1.msra.mxu0 %v1193
        %1233 = vmatprep.subr.mxu0 0.0
        %1234 = vmatpush1.msra.mxu0 %v1192
        %1235 = vmatprep.subr.mxu0 0.0
        %1236 = vmatpush1.msra.mxu0 %v1191
        %1237 = vmatprep.subr.mxu0 0.0
        %1238 = vmatpush1.msra.mxu0 %v1190
        %1239 = vmatprep.subr.mxu0 0.0
        %1240 = vmatpush1.msra.mxu0 %v1189
        %1241 = vmatprep.subr.mxu0 0.0
        %1242 = vmatpush1.msra.mxu0 %v1188
        %1243 = vmatprep.subr.mxu0 0.0
        %1244 = vmatpush1.msra.mxu0 %v1187
        %1245 = vmatprep.subr.mxu0 0.0
        %1246 = vmatpush1.msra.mxu0 %v1186
        %1247 = vmatprep.subr.mxu0 0.0
        %1248 = vmatpush1.msra.mxu0 %v1185
        %1249 = vmatprep.subr.mxu0 0.0
        %1250 = vmatpush1.msra.mxu0 %v1184
        %1251 = vmatprep.subr.mxu0 0.0
        %1252 = vmatpush1.msra.mxu0 %v1183
        %1253 = vmatprep.subr.mxu0 0.0
        %1254 = vmatpush1.msra.mxu0 %v1182
        %1255 = vmatprep.subr.mxu0 0.0
        %1256 = vmatpush1.msra.mxu0 %v1181
        %1257 = vmatprep.subr.mxu0 0.0
        %1258 = vmatpush1.msra.mxu0 %v1180
        %1259 = vmatprep.subr.mxu0 0.0
        %1260 = vmatpush1.msra.mxu0 %v1179
        %1261 = vmatprep.subr.mxu0 0.0
        %1262 = vmatpush1.msra.mxu0 %v1178
        %1263 = vmatprep.subr.mxu0 0.0
        %1264 = vmatpush2.msra.mxu0 0.0
        %1265 = vmatprep.subr.mxu0 0.0
        %1266 = vmatpush2.msra.mxu0 0.0
        %1267 = vmatprep.subr.mxu0 0.0
        %1268 = vmatpush2.msra.mxu0 0.0
        %1269 = vmatprep.subr.mxu0 0.0
        %1270 = vmatpush2.msra.mxu0 0.0
        %1271 = vmatprep.subr.mxu0 0.0
        %1272 = vmatpush2.msra.mxu0 0.0
        %1273 = vmatprep.subr.mxu0 0.0
        %1274 = vmatpush2.msra.mxu0 0.0
        %1275 = vmatprep.subr.mxu0 0.0
        %1276 = vmatpush2.msra.mxu0 0.0
        %1277 = vmatprep.subr.mxu0 0.0
        %1278 = vmatpush2.msra.mxu0 0.0
        %1279 = vmatprep.subr.mxu0 0.0
        %1280 = vmatpush2.msra.mxu0 0.0
        %1281 = vmatprep.subr.mxu0 0.0
        %1282 = vmatpush2.msra.mxu0 0.0
        %1283 = vmatprep.subr.mxu0 0.0
        %1284 = vmatpush2.msra.mxu0 0.0
        %1285 = vmatprep.subr.mxu0 0.0
        %1286 = vmatpush2.msra.mxu0 0.0
        %1287 = vmatprep.subr.mxu0 0.0
        %1288 = vmatpush2.msra.mxu0 0.0
        %1289 = vmatprep.subr.mxu0 0.0
        %1290 = vmatpush2.msra.mxu0 0.0
        %1291 = vmatprep.subr.mxu0 0.0
        %1292 = vmatpush2.msra.mxu0 0.0
        %1293 = vmatprep.subr.mxu0 0.0
        %1294 = vmatpush2.msra.mxu0 %v1194
        %1295 = vmatprep.mubr.f32.mxu0 %v1223
        %1296 = vmatmul.mubr.f32.gmra.mxu0 %v1203
        %v1297 = vpop.f32.mrf.mxu0
        %v1298 = vadd.f32 0.0, %v1297
        %v1299 = vpop.f32.mrf.mxu0
        %1300 = vmatprep.mubr.f32.mxu0 %v1225
        %1301 = vmatmul.mubr.f32.gmra.mxu0 %v1208
        %v1302 = vpop.f32.mrf.mxu0
        %v1303 = vadd.f32 0.0, %v1302
        %v1304 = vpop.f32.mrf.mxu0
        %1305 = vmatprep.mubr.f32.mxu0 %v1227
        %1306 = vmatmul.mubr.f32.gmra.mxu0 %v1212
        %v1307 = vpop.f32.mrf.mxu0
        %v1308 = vadd.f32 0.0, %v1307
        %v1309 = vpop.f32.mrf.mxu0
        %1310 = vmatprep.mubr.f32.mxu0 %v1229
        %1311 = vmatmul.mubr.f32.gmra.mxu0 %v1216
        %v1312 = vpop.f32.mrf.mxu0
        %v1313 = vadd.f32 0.0, %v1312
        %v1314 = vpop.f32.mrf.mxu0
        %1315 = vdwg.mxu0
        %v1316 = vadd.f32 %v1173, %v1298
        %v1317 = vadd.f32 %v1174, %v1303
        %v1318 = vadd.f32 %v1175, %v1308
        %v1319 = vadd.f32 %v1176, %v1313
        %s1320 = scalar_lea.vmem %s2, 1088
        %v1321 = vld [vmem:[%s1320] sm:$0xff]
        %v1322 = vld [vmem:[%s1320 + $0x8] sm:$0xff]
        %v1323 = vld [vmem:[%s1320 + $0x10] sm:$0xff]
        %v1324 = vld [vmem:[%s1320 + $0x18] sm:$0xff]
        %v1325 = vld [vmem:[%s1320 + $0x20] sm:$0xff]
        %v1326 = vld [vmem:[%s1320 + $0x28] sm:$0xff]
        %v1327 = vld [vmem:[%s1320 + $0x30] sm:$0xff]
        %v1328 = vld [vmem:[%s1320 + $0x38] sm:$0xff]
        %v1329 = vld [vmem:[%s1320 + $0x40] sm:$0xff]
        %v1330 = vld [vmem:[%s1320 + $0x48] sm:$0xff]
        %v1331 = vld [vmem:[%s1320 + $0x50] sm:$0xff]
        %v1332 = vld [vmem:[%s1320 + $0x58] sm:$0xff]
        %v1333 = vld [vmem:[%s1320 + $0x60] sm:$0xff]
        %v1334 = vld [vmem:[%s1320 + $0x68] sm:$0xff]
        %v1335 = vld [vmem:[%s1320 + $0x70] sm:$0xff]
        %v1336 = vld [vmem:[%s1320 + $0x78] sm:$0xff]
        %v1337 = vld [vmem:[%s1320 + $0x80] sm:$0xff]
        %v1338 = vrot.slane %v1048, 2
        %v1339 = vrot.slane %v1050, 2
        %v1340 = vsel %vm511, %v1338, %v1339
        %v1341 = vrot.slane %v1049, 2
        %v1342 = vrot.slane %v1051, 2
        %v1343 = vsel %vm511, %v1341, %v1342
        %v1344 = vrot.slane %v1052, 2
        %v1345 = vsel %vm511, %v1339, %v1344
        %v1346 = vrot.slane %v1053, 2
        %v1347 = vsel %vm511, %v1342, %v1346
        %v1348 = vrot.slane %v1054, 2
        %v1349 = vsel %vm511, %v1344, %v1348
        %v1350 = vrot.slane %v1055, 2
        %v1351 = vsel %vm511, %v1346, %v1350
        %v1352 = vrot.slane %v1056, 2
        %v1353 = vsel %vm511, %v1348, %v1352
        %v1354 = vrot.slane %v1057, 2
        %v1355 = vsel %vm511, %v1350, %v1354
        %v1360 = vsel %vm306, %v1343, 0
        %v1362 = vsel %vm306, %v1347, 0
        %v1364 = vsel %vm306, %v1351, 0
        %v1366 = vsel %vm306, %v1355, 0
        %1368 = vmatprep.subr.mxu0 0.0
        %1369 = vmatpush1.msra.mxu0 %v1336
        %1370 = vmatprep.subr.mxu0 0.0
        %1371 = vmatpush1.msra.mxu0 %v1335
        %1372 = vmatprep.subr.mxu0 0.0
        %1373 = vmatpush1.msra.mxu0 %v1334
        %1374 = vmatprep.subr.mxu0 0.0
        %1375 = vmatpush1.msra.mxu0 %v1333
        %1376 = vmatprep.subr.mxu0 0.0
        %1377 = vmatpush1.msra.mxu0 %v1332
        %1378 = vmatprep.subr.mxu0 0.0
        %1379 = vmatpush1.msra.mxu0 %v1331
        %1380 = vmatprep.subr.mxu0 0.0
        %1381 = vmatpush1.msra.mxu0 %v1330
        %1382 = vmatprep.subr.mxu0 0.0
        %1383 = vmatpush1.msra.mxu0 %v1329
        %1384 = vmatprep.subr.mxu0 0.0
        %1385 = vmatpush1.msra.mxu0 %v1328
        %1386 = vmatprep.subr.mxu0 0.0
        %1387 = vmatpush1.msra.mxu0 %v1327
        %1388 = vmatprep.subr.mxu0 0.0
        %1389 = vmatpush1.msra.mxu0 %v1326
        %1390 = vmatprep.subr.mxu0 0.0
        %1391 = vmatpush1.msra.mxu0 %v1325
        %1392 = vmatprep.subr.mxu0 0.0
        %1393 = vmatpush1.msra.mxu0 %v1324
        %1394 = vmatprep.subr.mxu0 0.0
        %1395 = vmatpush1.msra.mxu0 %v1323
        %1396 = vmatprep.subr.mxu0 0.0
        %1397 = vmatpush1.msra.mxu0 %v1322
        %1398 = vmatprep.subr.mxu0 0.0
        %1399 = vmatpush1.msra.mxu0 %v1321
        %1400 = vmatprep.subr.mxu0 0.0
        %1401 = vmatpush2.msra.mxu0 0.0
        %1402 = vmatprep.subr.mxu0 0.0
        %1403 = vmatpush2.msra.mxu0 0.0
        %1404 = vmatprep.subr.mxu0 0.0
        %1405 = vmatpush2.msra.mxu0 0.0
        %1406 = vmatprep.subr.mxu0 0.0
        %1407 = vmatpush2.msra.mxu0 0.0
        %1408 = vmatprep.subr.mxu0 0.0
        %1409 = vmatpush2.msra.mxu0 0.0
        %1410 = vmatprep.subr.mxu0 0.0
        %1411 = vmatpush2.msra.mxu0 0.0
        %1412 = vmatprep.subr.mxu0 0.0
        %1413 = vmatpush2.msra.mxu0 0.0
        %1414 = vmatprep.subr.mxu0 0.0
        %1415 = vmatpush2.msra.mxu0 0.0
        %1416 = vmatprep.subr.mxu0 0.0
        %1417 = vmatpush2.msra.mxu0 0.0
        %1418 = vmatprep.subr.mxu0 0.0
        %1419 = vmatpush2.msra.mxu0 0.0
        %1420 = vmatprep.subr.mxu0 0.0
        %1421 = vmatpush2.msra.mxu0 0.0
        %1422 = vmatprep.subr.mxu0 0.0
        %1423 = vmatpush2.msra.mxu0 0.0
        %1424 = vmatprep.subr.mxu0 0.0
        %1425 = vmatpush2.msra.mxu0 0.0
        %1426 = vmatprep.subr.mxu0 0.0
        %1427 = vmatpush2.msra.mxu0 0.0
        %1428 = vmatprep.subr.mxu0 0.0
        %1429 = vmatpush2.msra.mxu0 0.0
        %1430 = vmatprep.subr.mxu0 0.0
        %1431 = vmatpush2.msra.mxu0 %v1337
        %1432 = vmatprep.mubr.f32.mxu0 %v1360
        %1433 = vmatmul.mubr.f32.gmra.mxu0 %v1340
        %v1434 = vpop.f32.mrf.mxu0
        %v1435 = vadd.f32 0.0, %v1434
        %v1436 = vpop.f32.mrf.mxu0
        %1437 = vmatprep.mubr.f32.mxu0 %v1362
        %1438 = vmatmul.mubr.f32.gmra.mxu0 %v1345
        %v1439 = vpop.f32.mrf.mxu0
        %v1440 = vadd.f32 0.0, %v1439
        %v1441 = vpop.f32.mrf.mxu0
        %1442 = vmatprep.mubr.f32.mxu0 %v1364
        %1443 = vmatmul.mubr.f32.gmra.mxu0 %v1349
        %v1444 = vpop.f32.mrf.mxu0
        %v1445 = vadd.f32 0.0, %v1444
        %v1446 = vpop.f32.mrf.mxu0
        %1447 = vmatprep.mubr.f32.mxu0 %v1366
        %1448 = vmatmul.mubr.f32.gmra.mxu0 %v1353
        %v1449 = vpop.f32.mrf.mxu0
        %v1450 = vadd.f32 0.0, %v1449
        %v1451 = vpop.f32.mrf.mxu0
        %1452 = vdwg.mxu0
        %v1453 = vadd.f32 %v1316, %v1435
        %v1454 = vadd.f32 %v1317, %v1440
        %v1455 = vadd.f32 %v1318, %v1445
        %v1456 = vadd.f32 %v1319, %v1450
        %v1458 = vlaneseq
        %v1459 = vshrl.u32 %v1458, 7
        %v1460 = vsub.s32 0, %v1459
        %v1461 = vrot.slane %v218, %v1460
        %v1463 = vadd.f32 %v1453, %v1461
        %v1464 = vadd.f32 %v1454, %v1461
        %v1465 = vadd.f32 %v1455, %v1461
        %v1466 = vadd.f32 %v1456, %v1461
        %v1467 = vmax.f32 %v1463, 0.0
        %v1468 = vmax.f32 %v1464, 0.0
        %v1469 = vmax.f32 %v1465, 0.0
        %v1470 = vmax.f32 %v1466, 0.0
        %s1471 = smul.u32 %s220, 32
        %s1472 = scalar_lea.vmem %s212, %s1471
        %v1473 = vld [vmem:[%s1472] sm:$0xff]
        %v1474 = vld [vmem:[%s1472 + $0x8] sm:$0xff]
        %v1475 = vld [vmem:[%s1472 + $0x10] sm:$0xff]
        %v1476 = vld [vmem:[%s1472 + $0x18] sm:$0xff]
        %v1477 = vadd.f32 %v1467, %v1473
        %v1478 = vadd.f32 %v1468, %v1474
        %v1479 = vadd.f32 %v1469, %v1475
        %v1480 = vadd.f32 %v1470, %v1476
        %s1481 = scalar_lea.vmem %s217, %s1471
        %1482 = vst [vmem:[%s1481] sm:$0xff] %v1477
        %1483 = vst [vmem:[%s1481 + $0x8] sm:$0xff] %v1478
        %1484 = vst [vmem:[%s1481 + $0x10] sm:$0xff] %v1479
        %1485 = vst [vmem:[%s1481 + $0x18] sm:$0xff] %v1480
      $region41: #{dh_up_res_forward.5} parent=35 // loop_footer
        %s224 = sadd.s32 1, %s220
      $region42: #{dh_up_res_forward.5} parent=35 // loop_footer_branch
        %219 = sbr.rel target = $region38
      $region43: #{dh_up_res_forward.5} parent=35 // loop_exit
        _
      %p1486 = scmp.lt.s32.totalorder %s15, 1
      %s1487 = scalar_select %p1486, %s15, 1
      %s1488 = smul.addr %s1487, 128
      %s1489 = smul.addr %s1488, 8
      %s1490 = scalar_lea.vmem %s4, %s1489
      // Predicated region
      $region44: #{dh_up_res_forward.5} parent=35 // pred_check
        %p1491 = pneg %p127
      $region45: #{dh_up_res_forward.5} parent=35 // pred_check_branch
        %1493 = sbr.rel (%p1491) target = $region47
      $region46: #{dh_up_res_forward.5} parent=35 // pred_region
        _
      $region47: #{dh_up_res_forward.5} parent=35 // pred_fallthru
        _
    $region36: #{dh_up_res_forward.5} parent=5 // pred_fallthru
      _
    %p1494 = scmp.le.s32.totalorder 2, %s10
    // Predicated region
    $region48: #{dh_up_res_forward.5} parent=5 // pred_check
      %p1495 = pneg %p1494
    $region49: #{dh_up_res_forward.5} parent=5 // pred_check_branch
      %1497 = sbr.rel (%p1495) target = $region51
    $region50: #{dh_up_res_forward.5} parent=5 // pred_region
      %s1498 = ssub.s32 %s10, 2
      // Predicated region
      $region52: #{dh_up_res_forward.5} parent=50 // pred_check
        %p1499 = pneg %p133
      $region53: #{dh_up_res_forward.5} parent=50 // pred_check_branch
        %1501 = sbr.rel (%p1499) target = $region55
      $region54: #{dh_up_res_forward.5} parent=50 // pred_region
        %p1502 = scmp.lt.s32.totalorder %s16, 1
        %s1503 = scalar_select %p1502, %s16, 1
        %s1504 = smul.addr %s1503, 128
        %s1505 = smul.addr %s1504, 8
        %s1506 = scalar_lea.vmem %s4, %s1505
      $region55: #{dh_up_res_forward.5} parent=50 // pred_fallthru
        _
    $region51: #{dh_up_res_forward.5} parent=5 // pred_fallthru
      _
  $region6: #{dh_up_res_forward.5} parent=0 // loop_footer
    %s14 = sadd.s32 1, %s10
  $region7: #{dh_up_res_forward.5} parent=0 // loop_footer_branch
    %9 = sbr.rel target = $region3
  $region8: #{dh_up_res_forward.5} parent=0 // loop_exit
    _

</llo_original>
